<compile_context>
chip_gen: v7x
topology: tpu7x:2x2x1
jax: 0.10.0
libtpu: 0.0.40
codegen_flags: <defaults>
</compile_context>

<pallas_src>
import functools

import jax
import jax.numpy as jnp
from jax.experimental import pallas as pl
from jax.experimental.pallas import tpu as pltpu

LN_EPS = 1e-5          # PyTorch nn.LayerNorm default
POS_PAD = 8            # layer-1 contraction dim padded 3 -> 8
NEG_BIG = -1000000000.0


def _layernorm(x, g, b):
    mu = jnp.mean(x, axis=-1, keepdims=True)
    var = jnp.mean((x - mu) ** 2, axis=-1, keepdims=True)
    return (x - mu) * jax.lax.rsqrt(var + LN_EPS) * g + b


# ---------------------------------------------------------------------------
# Fused kernel: backbone -> n_blocks transformer blocks -> masked pool -> head
# ---------------------------------------------------------------------------
def _pointnet_kernel(pos_ref, mask_ref,
                     w1, b1, w2, b2, w3, b3,
                     wqkv, bqkv, wo, bo,
                     g1, be1, g2, be2, wf1, bf1, wf2, bf2,
                     wh, bh,
                     out_ref, *, n_heads):
    f32, bf16 = jnp.float32, jnp.bfloat16
    Bt, L, _ = pos_ref.shape
    n_blocks, d0, _ = wqkv.shape
    H = n_heads
    dh = d0 // H
    R = Bt * L

    mask = mask_ref[...].reshape(R, 1)                         # (R, 1) f32, 1 = valid row

    # ---- backbone per-point MLP on flattened rows (bf16 in / f32 accumulate) ----
    x = pos_ref[...].reshape(R, pos_ref.shape[-1]).astype(bf16)      # (R, 8) zero-padded xyz
    h = jnp.maximum(jnp.dot(x, w1[...], preferred_element_type=f32) + b1[...], 0.0)
    h = jnp.maximum(jnp.dot(h.astype(bf16), w2[...],
                            preferred_element_type=f32) + b2[...], 0.0)
    x = jnp.dot(h.astype(bf16), w3[...], preferred_element_type=f32) + b3[...]
    x = x * mask                                               # to_dense_batch zero padding

    # ---- post-LN transformer blocks (statically unrolled over layers) ----
    for blk in range(n_blocks):
        xb = x.astype(bf16)                                    # (R, d0)

        # Fused QKV projection: one (R, d0) x (d0, 3*d0) matmul.  The 1/sqrt(dh) scale is
        # pre-folded into the Q columns / bias at pack time.
        qkv = (jnp.dot(xb, wqkv[blk], preferred_element_type=f32)
               + bqkv[blk]).astype(bf16)                       # (R, 3*d0)

        # NOTE: the reference passes no key_padding_mask, so padded rows participate in
        # attention exactly like in the PyTorch module.
        o_heads = []
        for hd in range(H):
            qh = qkv[:, hd * dh:(hd + 1) * dh].reshape(Bt, L, dh)
            kh = qkv[:, d0 + hd * dh:d0 + (hd + 1) * dh].reshape(Bt, L, dh)
            vh = qkv[:, 2 * d0 + hd * dh:2 * d0 + (hd + 1) * dh].reshape(Bt, L, dh)

            s = jnp.einsum('bqe,bke->bqk', qh, kh, preferred_element_type=f32)  # (Bt,L,L)
            s = s - jnp.max(s, axis=-1, keepdims=True)
            p = jnp.exp(s)
            p = p * pl.reciprocal(jnp.sum(p, axis=-1, keepdims=True), approx=True)

            oh = jnp.einsum('bqk,bke->bqe', p.astype(bf16), vh,
                            preferred_element_type=f32)        # (Bt, L, dh)
            o_heads.append(oh.reshape(R, dh))

        # Heads concatenated on the feature axis (PyTorch MHA layout), then one K=d0
        # output projection.
        o = jnp.concatenate(o_heads, axis=-1).astype(bf16)     # (R, d0)
        att = jnp.dot(o, wo[blk], preferred_element_type=f32) + bo[blk]

        x1 = _layernorm(x + att, g1[blk], be1[blk])
        ff = jnp.maximum(jnp.dot(x1.astype(bf16), wf1[blk],
                                 preferred_element_type=f32) + bf1[blk], 0.0)
        ff = jnp.dot(ff.astype(bf16), wf2[blk], preferred_element_type=f32) + bf2[blk]
        x = _layernorm(x1 + ff, g2[blk], be2[blk])

    # ---- masked max-pool over points + classification head (lane-dense output) ----
    xm = jnp.where(mask > 0.5, x, NEG_BIG).reshape(Bt, L, d0)
    pooled = jnp.max(xm, axis=1)                               # (Bt, d0)
    out_ref[0] = jnp.dot(pooled.astype(bf16), wh[...],
                         preferred_element_type=f32) + bh[...]


# ---------------------------------------------------------------------------
# pallas_call wrapper
# ---------------------------------------------------------------------------
def _rep_spec(shape):
    """Full-array BlockSpec replicated across the batch grid."""
    nd = len(shape)
    return pl.BlockSpec(shape, lambda b, _nd=nd: (0,) * _nd)


_WEIGHT_ORDER = ("w1", "b1", "w2", "b2", "w3", "b3",
                 "wqkv", "bqkv", "wo", "bo",
                 "g1", "be1", "g2", "be2", "wf1", "bf1", "wf2", "bf2",
                 "wh", "bh")


def pointnet_classifier_forward(pos, mask, packed, batch_tile=None,
                                vmem_budget_bytes=40 * 2**20):
    B, L, _ = pos.shape
    H = packed["n_heads"]
    d0 = packed["wo"].shape[-1]
    d_ff = packed["wf1"].shape[-1]
    Cpad = packed["wh"].shape[1]
    C = packed["num_classes"]

    weights = [packed[n] for n in _WEIGHT_ORDER]
    weight_bytes = sum(int(w.size) * w.dtype.itemsize for w in weights)

    def act_bytes(bt):
        # Rough per-step live-activation estimate (f32): fused qkv + x/residual/LN temps
        # + per-head scores/probs + FFN hidden.
        r = bt * L
        return 4 * (3 * r * d0 + 6 * r * d0 + 2 * bt * L * L + r * d_ff)

    if batch_tile is None:
        # Fewest grid steps whose working set fits the VMEM budget (single-TensorCore
        # v5e/v6e optimum: grid steps are a serial loop with ~0.35us overhead each).
        # On v7x (2 TensorCores, 64 MiB VMEM) pass batch_tile=ceil(B/2) explicitly so the
        # "parallel" batch axis splits across both cores.
        batch_tile = B
        while batch_tile > 1 and act_bytes(batch_tile) + 2 * weight_bytes > vmem_budget_bytes:
            batch_tile = -(-batch_tile // 2)
    Bt = batch_tile
    assert Bt == 1 or L % 16 == 0, "batch_tile > 1 requires L to be a multiple of 16 (bf16 tiles)"
    n_tiles = -(-B // Bt)
    Bp = n_tiles * Bt

    posp = jnp.pad(pos, ((0, Bp - B), (0, 0), (0, POS_PAD - pos.shape[-1])))
    maskp = jnp.pad(mask.astype(jnp.float32)[..., None], ((0, Bp - B), (0, 0), (0, 0)))

    in_specs = ([pl.BlockSpec((Bt, L, POS_PAD), lambda b: (b, 0, 0)),
                 pl.BlockSpec((Bt, L, 1), lambda b: (b, 0, 0))]
                + [_rep_spec(w.shape) for w in weights])

    io_bytes = 4 * (Bt * L * (POS_PAD + 1) + Bt * Cpad)
    est = act_bytes(Bt) + 2 * weight_bytes + 2 * io_bytes
    vmem_limit = int(min(64 * 2**20, max(32 * 2**20, int(1.3 * est))))

    kernel = functools.partial(_pointnet_kernel, n_heads=H)

    out = pl.pallas_call(
        kernel,
        out_shape=jax.ShapeDtypeStruct((n_tiles, Bt, Cpad), jnp.float32),
        grid=(n_tiles,),
        in_specs=in_specs,
        out_specs=pl.BlockSpec((1, Bt, Cpad), lambda b: (b, 0, 0)),
        compiler_params=pltpu.CompilerParams(
            dimension_semantics=("parallel",),
            vmem_limit_bytes=vmem_limit),
    )(posp, maskp, *weights)
    return out.reshape(Bp, Cpad)[:B, :C]


# ---------------------------------------------------------------------------
# Parameter init (PyTorch-style) and kernel-layout packing
# ---------------------------------------------------------------------------
def init_params(key, d0, d_ff, n_blocks, num_classes):
    n_lin = 3 + 6 * n_blocks + 1
    keys = iter(jax.random.split(key, 2 * n_lin))

    def lin(kin, kout):
        bound = 1.0 / (kin ** 0.5)
        w = jax.random.uniform(next(keys), (kin, kout), jnp.float32, -bound, bound)
        b = jax.random.uniform(next(keys), (1, kout), jnp.float32, -bound, bound)
        return w, b

    backbone = {}
    backbone["w1"], backbone["b1"] = lin(3, 64)
    backbone["w2"], backbone["b2"] = lin(64, 128)
    backbone["w3"], backbone["b3"] = lin(128, d0)

    blocks = []
    for _ in range(n_blocks):
        p = {}
        p["wq"], p["bq"] = lin(d0, d0)
        p["wk"], p["bk"] = lin(d0, d0)
        p["wv"], p["bv"] = lin(d0, d0)
        p["wo"], p["bo"] = lin(d0, d0)
        p["wf1"], p["bf1"] = lin(d0, d_ff)
        p["wf2"], p["bf2"] = lin(d_ff, d0)
        p["g1"] = jnp.ones((1, d0), jnp.float32)
        p["be1"] = jnp.zeros((1, d0), jnp.float32)
        p["g2"] = jnp.ones((1, d0), jnp.float32)
        p["be2"] = jnp.zeros((1, d0), jnp.float32)
        blocks.append(p)

    head = {}
    head["w"], head["b"] = lin(d0, num_classes)
    return {"backbone": backbone, "blocks": blocks, "head": head}


def pack_params(params, n_heads):
    """Repack (in, out)-layout f32 params into kernel-ready arrays:
       bf16 matmul weights, layer-1 K padded 3->8, Wq|Wk|Wv fused to one (d0, 3*d0)
       weight with the 1/sqrt(dh) scale folded into the Q part, per-block tensors stacked
       on a leading n_blocks axis, head padded to a 128-lane-multiple output."""
    bf16 = jnp.bfloat16
    bb = params["backbone"]
    d0 = bb["w3"].shape[1]
    dh = d0 // n_heads
    scale = 1.0 / (dh ** 0.5)

    packed = {
        "w1": jnp.pad(bb["w1"], ((0, POS_PAD - bb["w1"].shape[0]), (0, 0))).astype(bf16),
        "b1": bb["b1"],
        "w2": bb["w2"].astype(bf16), "b2": bb["b2"],
        "w3": bb["w3"].astype(bf16), "b3": bb["b3"],
    }

    def stack(fn):
        return jnp.stack([fn(blk) for blk in params["blocks"]], axis=0)

    packed["wqkv"] = stack(lambda p: jnp.concatenate(
        [p["wq"] * scale, p["wk"], p["wv"]], axis=1)).astype(bf16)   # (nb, d0, 3*d0)
    packed["bqkv"] = stack(lambda p: jnp.concatenate(
        [p["bq"] * scale, p["bk"], p["bv"]], axis=1))                # (nb, 1, 3*d0)
    packed["wo"] = stack(lambda p: p["wo"]).astype(bf16)             # (nb, d0, d0)
    packed["bo"] = stack(lambda p: p["bo"])
    packed["g1"] = stack(lambda p: p["g1"])
    packed["be1"] = stack(lambda p: p["be1"])
    packed["g2"] = stack(lambda p: p["g2"])
    packed["be2"] = stack(lambda p: p["be2"])
    packed["wf1"] = stack(lambda p: p["wf1"]).astype(bf16)
    packed["bf1"] = stack(lambda p: p["bf1"])
    packed["wf2"] = stack(lambda p: p["wf2"]).astype(bf16)
    packed["bf2"] = stack(lambda p: p["bf2"])

    hw, hb = params["head"]["w"], params["head"]["b"]
    C = hw.shape[1]
    Cpad = ((C + 127) // 128) * 128
    packed["wh"] = jnp.pad(hw, ((0, 0), (0, Cpad - C))).astype(bf16)
    packed["bh"] = jnp.pad(hb, ((0, 0), (0, Cpad - C)))
    packed["num_classes"] = C
    packed["n_heads"] = n_heads
    return packed


if __name__ == "__main__":
    B, L = 2, 16                      # batch, max points per cloud (multiple of 16)
    d0, heads, d_ff = 32, 4, 64       # small config consistent with the module
    n_blocks, num_classes = 2, 10

    key = jax.random.PRNGKey(0)
    k_pos, k_param = jax.random.split(key)

    pos = jax.random.normal(k_pos, (B, L, 3), jnp.float32)       # dense point coords
    lengths = jnp.array([L, L - 5], dtype=jnp.int32)             # ragged cloud sizes
    mask = jnp.arange(L)[None, :] < lengths[:, None]             # (B, L) bool, like to_dense_batch

    params = init_params(k_param, d0, d_ff, n_blocks, num_classes)
    packed = pack_params(params, heads)

    logits = pointnet_classifier_forward(pos, mask, packed)
    logits = jax.block_until_ready(logits)
    assert logits.shape == (B, num_classes)
    assert bool(jnp.all(jnp.isfinite(logits)))
    print("KERNEL_OK")
</pallas_src>

<mosaic_0001>
module attributes {stable_mosaic.version = 11 : i64} {
  func.func @_pointnet_kernel(%arg0: i32, %arg1: memref<2x16x8xf32, #tpu.memory_space<vmem>>, %arg2: memref<2x16x1xf32, #tpu.memory_space<vmem>>, %arg3: memref<8x64xbf16, #tpu.memory_space<vmem>>, %arg4: memref<1x64xf32, #tpu.memory_space<vmem>>, %arg5: memref<64x128xbf16, #tpu.memory_space<vmem>>, %arg6: memref<1x128xf32, #tpu.memory_space<vmem>>, %arg7: memref<128x32xbf16, #tpu.memory_space<vmem>>, %arg8: memref<1x32xf32, #tpu.memory_space<vmem>>, %arg9: memref<2x32x96xbf16, #tpu.memory_space<vmem>>, %arg10: memref<2x1x96xf32, #tpu.memory_space<vmem>>, %arg11: memref<2x32x32xbf16, #tpu.memory_space<vmem>>, %arg12: memref<2x1x32xf32, #tpu.memory_space<vmem>>, %arg13: memref<2x1x32xf32, #tpu.memory_space<vmem>>, %arg14: memref<2x1x32xf32, #tpu.memory_space<vmem>>, %arg15: memref<2x1x32xf32, #tpu.memory_space<vmem>>, %arg16: memref<2x1x32xf32, #tpu.memory_space<vmem>>, %arg17: memref<2x32x64xbf16, #tpu.memory_space<vmem>>, %arg18: memref<2x1x64xf32, #tpu.memory_space<vmem>>, %arg19: memref<2x64x32xbf16, #tpu.memory_space<vmem>>, %arg20: memref<2x1x32xf32, #tpu.memory_space<vmem>>, %arg21: memref<32x128xbf16, #tpu.memory_space<vmem>>, %arg22: memref<1x128xf32, #tpu.memory_space<vmem>>, %arg23: memref<1x2x128xf32, #tpu.memory_space<vmem>>) attributes {dimension_semantics = [#tpu.dimension_semantics<parallel>], iteration_bounds = array<i64: 1>, scalar_prefetch = 0 : i64, scratch_operands = 0 : i64, tpu.core_type = #tpu.core_type<tc>, window_params = [{transform_indices = @transform_0, window_bounds = array<i64: 2, 16, 8>}, {transform_indices = @transform_1, window_bounds = array<i64: 2, 16, 1>}, {pipeline_mode = #tpu.pipeline_mode<synchronous>, transform_indices = @transform_2, window_bounds = array<i64: 8, 64>}, {pipeline_mode = #tpu.pipeline_mode<synchronous>, transform_indices = @transform_3, window_bounds = array<i64: 1, 64>}, {pipeline_mode = #tpu.pipeline_mode<synchronous>, transform_indices = @transform_4, window_bounds = array<i64: 64, 128>}, {pipeline_mode = #tpu.pipeline_mode<synchronous>, transform_indices = @transform_5, window_bounds = array<i64: 1, 128>}, {pipeline_mode = #tpu.pipeline_mode<synchronous>, transform_indices = @transform_6, window_bounds = array<i64: 128, 32>}, {pipeline_mode = #tpu.pipeline_mode<synchronous>, transform_indices = @transform_7, window_bounds = array<i64: 1, 32>}, {pipeline_mode = #tpu.pipeline_mode<synchronous>, transform_indices = @transform_8, window_bounds = array<i64: 2, 32, 96>}, {pipeline_mode = #tpu.pipeline_mode<synchronous>, transform_indices = @transform_9, window_bounds = array<i64: 2, 1, 96>}, {pipeline_mode = #tpu.pipeline_mode<synchronous>, transform_indices = @transform_10, window_bounds = array<i64: 2, 32, 32>}, {pipeline_mode = #tpu.pipeline_mode<synchronous>, transform_indices = @transform_11, window_bounds = array<i64: 2, 1, 32>}, {pipeline_mode = #tpu.pipeline_mode<synchronous>, transform_indices = @transform_12, window_bounds = array<i64: 2, 1, 32>}, {pipeline_mode = #tpu.pipeline_mode<synchronous>, transform_indices = @transform_13, window_bounds = array<i64: 2, 1, 32>}, {pipeline_mode = #tpu.pipeline_mode<synchronous>, transform_indices = @transform_14, window_bounds = array<i64: 2, 1, 32>}, {pipeline_mode = #tpu.pipeline_mode<synchronous>, transform_indices = @transform_15, window_bounds = array<i64: 2, 1, 32>}, {pipeline_mode = #tpu.pipeline_mode<synchronous>, transform_indices = @transform_16, window_bounds = array<i64: 2, 32, 64>}, {pipeline_mode = #tpu.pipeline_mode<synchronous>, transform_indices = @transform_17, window_bounds = array<i64: 2, 1, 64>}, {pipeline_mode = #tpu.pipeline_mode<synchronous>, transform_indices = @transform_18, window_bounds = array<i64: 2, 64, 32>}, {pipeline_mode = #tpu.pipeline_mode<synchronous>, transform_indices = @transform_19, window_bounds = array<i64: 2, 1, 32>}, {pipeline_mode = #tpu.pipeline_mode<synchronous>, transform_indices = @transform_20, window_bounds = array<i64: 32, 128>}, {pipeline_mode = #tpu.pipeline_mode<synchronous>, transform_indices = @transform_21, window_bounds = array<i64: 1, 128>}, {transform_indices = @transform_22, window_bounds = array<i64: 1, 2, 128>}]} {
    %c0 = arith.constant 0 : index
    %c0_0 = arith.constant 0 : index
    %c0_1 = arith.constant 0 : index
    %0 = vector.load %arg2[%c0, %c0_0, %c0_1] : memref<2x16x1xf32, #tpu.memory_space<vmem>>, vector<2x16x1xf32>
    %1 = vector.shape_cast %0 : vector<2x16x1xf32> to vector<32x1xf32>
    %c0_2 = arith.constant 0 : index
    %c0_3 = arith.constant 0 : index
    %c0_4 = arith.constant 0 : index
    %2 = vector.load %arg1[%c0_2, %c0_3, %c0_4] : memref<2x16x8xf32, #tpu.memory_space<vmem>>, vector<2x16x8xf32>
    %3 = vector.shape_cast %2 : vector<2x16x8xf32> to vector<32x8xf32>
    %4 = arith.truncf %3 : vector<32x8xf32> to vector<32x8xbf16>
    %c0_5 = arith.constant 0 : index
    %c0_6 = arith.constant 0 : index
    %5 = vector.load %arg3[%c0_5, %c0_6] : memref<8x64xbf16, #tpu.memory_space<vmem>>, vector<8x64xbf16>
    %cst = arith.constant dense<0.000000e+00> : vector<32x64xf32>
    %6 = tpu.matmul %4, %5, %cst {dimension_numbers = #tpu.dot_dimension_numbers<[1], [0], [0], [1], [0, 0, 1, 1], [], []>} : vector<32x8xbf16>, vector<8x64xbf16>, vector<32x64xf32> -> vector<32x64xf32>
    %c0_7 = arith.constant 0 : index
    %c0_8 = arith.constant 0 : index
    %7 = vector.load %arg4[%c0_7, %c0_8] : memref<1x64xf32, #tpu.memory_space<vmem>>, vector<1x64xf32>
    %8 = vector.broadcast %7 : vector<1x64xf32> to vector<32x64xf32>
    %9 = arith.addf %6, %8 : vector<32x64xf32>
    %cst_9 = arith.constant 0.000000e+00 : f32
    %10 = vector.broadcast %cst_9 : f32 to vector<32x64xf32>
    %11 = arith.maximumf %9, %10 : vector<32x64xf32>
    %12 = arith.truncf %11 : vector<32x64xf32> to vector<32x64xbf16>
    %c0_10 = arith.constant 0 : index
    %c0_11 = arith.constant 0 : index
    %13 = vector.load %arg5[%c0_10, %c0_11] : memref<64x128xbf16, #tpu.memory_space<vmem>>, vector<64x128xbf16>
    %cst_12 = arith.constant dense<0.000000e+00> : vector<32x128xf32>
    %14 = tpu.matmul %12, %13, %cst_12 {dimension_numbers = #tpu.dot_dimension_numbers<[1], [0], [0], [1], [0, 0, 1, 1], [], []>} : vector<32x64xbf16>, vector<64x128xbf16>, vector<32x128xf32> -> vector<32x128xf32>
    %c0_13 = arith.constant 0 : index
    %c0_14 = arith.constant 0 : index
    %15 = vector.load %arg6[%c0_13, %c0_14] : memref<1x128xf32, #tpu.memory_space<vmem>>, vector<1x128xf32>
    %16 = vector.broadcast %15 : vector<1x128xf32> to vector<32x128xf32>
    %17 = arith.addf %14, %16 : vector<32x128xf32>
    %cst_15 = arith.constant 0.000000e+00 : f32
    %18 = vector.broadcast %cst_15 : f32 to vector<32x128xf32>
    %19 = arith.maximumf %17, %18 : vector<32x128xf32>
    %20 = arith.truncf %19 : vector<32x128xf32> to vector<32x128xbf16>
    %c0_16 = arith.constant 0 : index
    %c0_17 = arith.constant 0 : index
    %21 = vector.load %arg7[%c0_16, %c0_17] : memref<128x32xbf16, #tpu.memory_space<vmem>>, vector<128x32xbf16>
    %cst_18 = arith.constant dense<0.000000e+00> : vector<32x32xf32>
    %22 = tpu.matmul %20, %21, %cst_18 {dimension_numbers = #tpu.dot_dimension_numbers<[1], [0], [0], [1], [0, 0, 1, 1], [], []>} : vector<32x128xbf16>, vector<128x32xbf16>, vector<32x32xf32> -> vector<32x32xf32>
    %c0_19 = arith.constant 0 : index
    %c0_20 = arith.constant 0 : index
    %23 = vector.load %arg8[%c0_19, %c0_20] : memref<1x32xf32, #tpu.memory_space<vmem>>, vector<1x32xf32>
    %24 = vector.broadcast %23 : vector<1x32xf32> to vector<32x32xf32>
    %25 = arith.addf %22, %24 : vector<32x32xf32>
    %26 = vector.broadcast %1 : vector<32x1xf32> to vector<32x32xf32>
    %27 = arith.mulf %25, %26 : vector<32x32xf32>
    %28 = arith.truncf %27 : vector<32x32xf32> to vector<32x32xbf16>
    %c0_21 = arith.constant 0 : index
    %c0_22 = arith.constant 0 : index
    %c0_23 = arith.constant 0 : index
    %29 = vector.load %arg9[%c0_21, %c0_22, %c0_23] : memref<2x32x96xbf16, #tpu.memory_space<vmem>>, vector<1x32x96xbf16>
    %30 = vector.shape_cast %29 : vector<1x32x96xbf16> to vector<32x96xbf16>
    %cst_24 = arith.constant dense<0.000000e+00> : vector<32x96xf32>
    %31 = tpu.matmul %28, %30, %cst_24 {dimension_numbers = #tpu.dot_dimension_numbers<[1], [0], [0], [1], [0, 0, 1, 1], [], []>} : vector<32x32xbf16>, vector<32x96xbf16>, vector<32x96xf32> -> vector<32x96xf32>
    %c0_25 = arith.constant 0 : index
    %c0_26 = arith.constant 0 : index
    %c0_27 = arith.constant 0 : index
    %32 = vector.load %arg10[%c0_25, %c0_26, %c0_27] : memref<2x1x96xf32, #tpu.memory_space<vmem>>, vector<1x1x96xf32>
    %33 = vector.shape_cast %32 : vector<1x1x96xf32> to vector<1x96xf32>
    %34 = vector.broadcast %33 : vector<1x96xf32> to vector<32x96xf32>
    %35 = arith.addf %31, %34 : vector<32x96xf32>
    %36 = arith.truncf %35 : vector<32x96xf32> to vector<32x96xbf16>
    %37 = vector.extract_strided_slice %36 {offsets = [0, 0], sizes = [32, 8], strides = [1, 1]} : vector<32x96xbf16> to vector<32x8xbf16>
    %38 = vector.shape_cast %37 : vector<32x8xbf16> to vector<2x16x8xbf16>
    %39 = vector.extract_strided_slice %36 {offsets = [0, 32], sizes = [32, 8], strides = [1, 1]} : vector<32x96xbf16> to vector<32x8xbf16>
    %40 = vector.shape_cast %39 : vector<32x8xbf16> to vector<2x16x8xbf16>
    %41 = vector.extract_strided_slice %36 {offsets = [0, 64], sizes = [32, 8], strides = [1, 1]} : vector<32x96xbf16> to vector<32x8xbf16>
    %42 = vector.shape_cast %41 : vector<32x8xbf16> to vector<2x16x8xbf16>
    "tpu.trace_start"() <{level = 10 : i32, message = "bqe,bke->bqk"}> : () -> ()
    %cst_28 = arith.constant dense<0.000000e+00> : vector<2x16x16xf32>
    %43 = tpu.matmul %38, %40, %cst_28 {dimension_numbers = #tpu.dot_dimension_numbers<[2], [2], [1], [1], [0, 0, 0, 1, 1, 1], [0], [0]>} : vector<2x16x8xbf16>, vector<2x16x8xbf16>, vector<2x16x16xf32> -> vector<2x16x16xf32>
    "tpu.trace_stop"() : () -> ()
    %cst_29 = arith.constant dense<0xFF800000> : vector<2x16xf32>
    %44 = vector.multi_reduction <maximumf>, %43, %cst_29 [2] : vector<2x16x16xf32> to vector<2x16xf32>
    %45 = vector.shape_cast %44 : vector<2x16xf32> to vector<2x16x1xf32>
    %46 = vector.broadcast %45 : vector<2x16x1xf32> to vector<2x16x16xf32>
    %47 = arith.subf %43, %46 : vector<2x16x16xf32>
    %48 = math.exp %47 : vector<2x16x16xf32>
    %cst_30 = arith.constant dense<0.000000e+00> : vector<2x16xf32>
    %49 = vector.multi_reduction <add>, %48, %cst_30 [2] : vector<2x16x16xf32> to vector<2x16xf32>
    %50 = vector.shape_cast %49 : vector<2x16xf32> to vector<2x16x1xf32>
    %51 = tpu.reciprocal %50 {approx = true} : vector<2x16x1xf32> -> vector<2x16x1xf32>
    %52 = vector.broadcast %51 : vector<2x16x1xf32> to vector<2x16x16xf32>
    %53 = arith.mulf %48, %52 : vector<2x16x16xf32>
    %54 = arith.truncf %53 : vector<2x16x16xf32> to vector<2x16x16xbf16>
    "tpu.trace_start"() <{level = 10 : i32, message = "bqk,bke->bqe"}> : () -> ()
    %cst_31 = arith.constant dense<0.000000e+00> : vector<2x16x8xf32>
    %55 = tpu.matmul %54, %42, %cst_31 {dimension_numbers = #tpu.dot_dimension_numbers<[2], [1], [1], [2], [0, 0, 0, 1, 1, 2], [0], [0]>} : vector<2x16x16xbf16>, vector<2x16x8xbf16>, vector<2x16x8xf32> -> vector<2x16x8xf32>
    "tpu.trace_stop"() : () -> ()
    %56 = vector.shape_cast %55 : vector<2x16x8xf32> to vector<32x8xf32>
    %57 = vector.extract_strided_slice %36 {offsets = [0, 8], sizes = [32, 8], strides = [1, 1]} : vector<32x96xbf16> to vector<32x8xbf16>
    %58 = vector.shape_cast %57 : vector<32x8xbf16> to vector<2x16x8xbf16>
    %59 = vector.extract_strided_slice %36 {offsets = [0, 40], sizes = [32, 8], strides = [1, 1]} : vector<32x96xbf16> to vector<32x8xbf16>
    %60 = vector.shape_cast %59 : vector<32x8xbf16> to vector<2x16x8xbf16>
    %61 = vector.extract_strided_slice %36 {offsets = [0, 72], sizes = [32, 8], strides = [1, 1]} : vector<32x96xbf16> to vector<32x8xbf16>
    %62 = vector.shape_cast %61 : vector<32x8xbf16> to vector<2x16x8xbf16>
    "tpu.trace_start"() <{level = 10 : i32, message = "bqe,bke->bqk"}> : () -> ()
    %cst_32 = arith.constant dense<0.000000e+00> : vector<2x16x16xf32>
    %63 = tpu.matmul %58, %60, %cst_32 {dimension_numbers = #tpu.dot_dimension_numbers<[2], [2], [1], [1], [0, 0, 0, 1, 1, 1], [0], [0]>} : vector<2x16x8xbf16>, vector<2x16x8xbf16>, vector<2x16x16xf32> -> vector<2x16x16xf32>
    "tpu.trace_stop"() : () -> ()
    %cst_33 = arith.constant dense<0xFF800000> : vector<2x16xf32>
    %64 = vector.multi_reduction <maximumf>, %63, %cst_33 [2] : vector<2x16x16xf32> to vector<2x16xf32>
    %65 = vector.shape_cast %64 : vector<2x16xf32> to vector<2x16x1xf32>
    %66 = vector.broadcast %65 : vector<2x16x1xf32> to vector<2x16x16xf32>
    %67 = arith.subf %63, %66 : vector<2x16x16xf32>
    %68 = math.exp %67 : vector<2x16x16xf32>
    %cst_34 = arith.constant dense<0.000000e+00> : vector<2x16xf32>
    %69 = vector.multi_reduction <add>, %68, %cst_34 [2] : vector<2x16x16xf32> to vector<2x16xf32>
    %70 = vector.shape_cast %69 : vector<2x16xf32> to vector<2x16x1xf32>
    %71 = tpu.reciprocal %70 {approx = true} : vector<2x16x1xf32> -> vector<2x16x1xf32>
    %72 = vector.broadcast %71 : vector<2x16x1xf32> to vector<2x16x16xf32>
    %73 = arith.mulf %68, %72 : vector<2x16x16xf32>
    %74 = arith.truncf %73 : vector<2x16x16xf32> to vector<2x16x16xbf16>
    "tpu.trace_start"() <{level = 10 : i32, message = "bqk,bke->bqe"}> : () -> ()
    %cst_35 = arith.constant dense<0.000000e+00> : vector<2x16x8xf32>
    %75 = tpu.matmul %74, %62, %cst_35 {dimension_numbers = #tpu.dot_dimension_numbers<[2], [1], [1], [2], [0, 0, 0, 1, 1, 2], [0], [0]>} : vector<2x16x16xbf16>, vector<2x16x8xbf16>, vector<2x16x8xf32> -> vector<2x16x8xf32>
    "tpu.trace_stop"() : () -> ()
    %76 = vector.shape_cast %75 : vector<2x16x8xf32> to vector<32x8xf32>
    %77 = vector.extract_strided_slice %36 {offsets = [0, 16], sizes = [32, 8], strides = [1, 1]} : vector<32x96xbf16> to vector<32x8xbf16>
    %78 = vector.shape_cast %77 : vector<32x8xbf16> to vector<2x16x8xbf16>
    %79 = vector.extract_strided_slice %36 {offsets = [0, 48], sizes = [32, 8], strides = [1, 1]} : vector<32x96xbf16> to vector<32x8xbf16>
    %80 = vector.shape_cast %79 : vector<32x8xbf16> to vector<2x16x8xbf16>
    %81 = vector.extract_strided_slice %36 {offsets = [0, 80], sizes = [32, 8], strides = [1, 1]} : vector<32x96xbf16> to vector<32x8xbf16>
    %82 = vector.shape_cast %81 : vector<32x8xbf16> to vector<2x16x8xbf16>
    "tpu.trace_start"() <{level = 10 : i32, message = "bqe,bke->bqk"}> : () -> ()
    %cst_36 = arith.constant dense<0.000000e+00> : vector<2x16x16xf32>
    %83 = tpu.matmul %78, %80, %cst_36 {dimension_numbers = #tpu.dot_dimension_numbers<[2], [2], [1], [1], [0, 0, 0, 1, 1, 1], [0], [0]>} : vector<2x16x8xbf16>, vector<2x16x8xbf16>, vector<2x16x16xf32> -> vector<2x16x16xf32>
    "tpu.trace_stop"() : () -> ()
    %cst_37 = arith.constant dense<0xFF800000> : vector<2x16xf32>
    %84 = vector.multi_reduction <maximumf>, %83, %cst_37 [2] : vector<2x16x16xf32> to vector<2x16xf32>
    %85 = vector.shape_cast %84 : vector<2x16xf32> to vector<2x16x1xf32>
    %86 = vector.broadcast %85 : vector<2x16x1xf32> to vector<2x16x16xf32>
    %87 = arith.subf %83, %86 : vector<2x16x16xf32>
    %88 = math.exp %87 : vector<2x16x16xf32>
    %cst_38 = arith.constant dense<0.000000e+00> : vector<2x16xf32>
    %89 = vector.multi_reduction <add>, %88, %cst_38 [2] : vector<2x16x16xf32> to vector<2x16xf32>
    %90 = vector.shape_cast %89 : vector<2x16xf32> to vector<2x16x1xf32>
    %91 = tpu.reciprocal %90 {approx = true} : vector<2x16x1xf32> -> vector<2x16x1xf32>
    %92 = vector.broadcast %91 : vector<2x16x1xf32> to vector<2x16x16xf32>
    %93 = arith.mulf %88, %92 : vector<2x16x16xf32>
    %94 = arith.truncf %93 : vector<2x16x16xf32> to vector<2x16x16xbf16>
    "tpu.trace_start"() <{level = 10 : i32, message = "bqk,bke->bqe"}> : () -> ()
    %cst_39 = arith.constant dense<0.000000e+00> : vector<2x16x8xf32>
    %95 = tpu.matmul %94, %82, %cst_39 {dimension_numbers = #tpu.dot_dimension_numbers<[2], [1], [1], [2], [0, 0, 0, 1, 1, 2], [0], [0]>} : vector<2x16x16xbf16>, vector<2x16x8xbf16>, vector<2x16x8xf32> -> vector<2x16x8xf32>
    "tpu.trace_stop"() : () -> ()
    %96 = vector.shape_cast %95 : vector<2x16x8xf32> to vector<32x8xf32>
    %97 = vector.extract_strided_slice %36 {offsets = [0, 24], sizes = [32, 8], strides = [1, 1]} : vector<32x96xbf16> to vector<32x8xbf16>
    %98 = vector.shape_cast %97 : vector<32x8xbf16> to vector<2x16x8xbf16>
    %99 = vector.extract_strided_slice %36 {offsets = [0, 56], sizes = [32, 8], strides = [1, 1]} : vector<32x96xbf16> to vector<32x8xbf16>
    %100 = vector.shape_cast %99 : vector<32x8xbf16> to vector<2x16x8xbf16>
    %101 = vector.extract_strided_slice %36 {offsets = [0, 88], sizes = [32, 8], strides = [1, 1]} : vector<32x96xbf16> to vector<32x8xbf16>
    %102 = vector.shape_cast %101 : vector<32x8xbf16> to vector<2x16x8xbf16>
    "tpu.trace_start"() <{level = 10 : i32, message = "bqe,bke->bqk"}> : () -> ()
    %cst_40 = arith.constant dense<0.000000e+00> : vector<2x16x16xf32>
    %103 = tpu.matmul %98, %100, %cst_40 {dimension_numbers = #tpu.dot_dimension_numbers<[2], [2], [1], [1], [0, 0, 0, 1, 1, 1], [0], [0]>} : vector<2x16x8xbf16>, vector<2x16x8xbf16>, vector<2x16x16xf32> -> vector<2x16x16xf32>
    "tpu.trace_stop"() : () -> ()
    %cst_41 = arith.constant dense<0xFF800000> : vector<2x16xf32>
    %104 = vector.multi_reduction <maximumf>, %103, %cst_41 [2] : vector<2x16x16xf32> to vector<2x16xf32>
    %105 = vector.shape_cast %104 : vector<2x16xf32> to vector<2x16x1xf32>
    %106 = vector.broadcast %105 : vector<2x16x1xf32> to vector<2x16x16xf32>
    %107 = arith.subf %103, %106 : vector<2x16x16xf32>
    %108 = math.exp %107 : vector<2x16x16xf32>
    %cst_42 = arith.constant dense<0.000000e+00> : vector<2x16xf32>
    %109 = vector.multi_reduction <add>, %108, %cst_42 [2] : vector<2x16x16xf32> to vector<2x16xf32>
    %110 = vector.shape_cast %109 : vector<2x16xf32> to vector<2x16x1xf32>
    %111 = tpu.reciprocal %110 {approx = true} : vector<2x16x1xf32> -> vector<2x16x1xf32>
    %112 = vector.broadcast %111 : vector<2x16x1xf32> to vector<2x16x16xf32>
    %113 = arith.mulf %108, %112 : vector<2x16x16xf32>
    %114 = arith.truncf %113 : vector<2x16x16xf32> to vector<2x16x16xbf16>
    "tpu.trace_start"() <{level = 10 : i32, message = "bqk,bke->bqe"}> : () -> ()
    %cst_43 = arith.constant dense<0.000000e+00> : vector<2x16x8xf32>
    %115 = tpu.matmul %114, %102, %cst_43 {dimension_numbers = #tpu.dot_dimension_numbers<[2], [1], [1], [2], [0, 0, 0, 1, 1, 2], [0], [0]>} : vector<2x16x16xbf16>, vector<2x16x8xbf16>, vector<2x16x8xf32> -> vector<2x16x8xf32>
    "tpu.trace_stop"() : () -> ()
    %116 = vector.shape_cast %115 : vector<2x16x8xf32> to vector<32x8xf32>
    %117 = tpu.concatenate %56, %76, %96, %116 in 1 : vector<32x8xf32>, vector<32x8xf32>, vector<32x8xf32>, vector<32x8xf32> -> vector<32x32xf32>
    %118 = arith.truncf %117 : vector<32x32xf32> to vector<32x32xbf16>
    %c0_44 = arith.constant 0 : index
    %c0_45 = arith.constant 0 : index
    %c0_46 = arith.constant 0 : index
    %119 = vector.load %arg11[%c0_44, %c0_45, %c0_46] : memref<2x32x32xbf16, #tpu.memory_space<vmem>>, vector<1x32x32xbf16>
    %120 = vector.shape_cast %119 : vector<1x32x32xbf16> to vector<32x32xbf16>
    %cst_47 = arith.constant dense<0.000000e+00> : vector<32x32xf32>
    %121 = tpu.matmul %118, %120, %cst_47 {dimension_numbers = #tpu.dot_dimension_numbers<[1], [0], [0], [1], [0, 0, 1, 1], [], []>} : vector<32x32xbf16>, vector<32x32xbf16>, vector<32x32xf32> -> vector<32x32xf32>
    %c0_48 = arith.constant 0 : index
    %c0_49 = arith.constant 0 : index
    %c0_50 = arith.constant 0 : index
    %122 = vector.load %arg12[%c0_48, %c0_49, %c0_50] : memref<2x1x32xf32, #tpu.memory_space<vmem>>, vector<1x1x32xf32>
    %123 = vector.shape_cast %122 : vector<1x1x32xf32> to vector<1x32xf32>
    %124 = vector.broadcast %123 : vector<1x32xf32> to vector<32x32xf32>
    %125 = arith.addf %121, %124 : vector<32x32xf32>
    %126 = arith.addf %27, %125 : vector<32x32xf32>
    %c0_51 = arith.constant 0 : index
    %c0_52 = arith.constant 0 : index
    %c0_53 = arith.constant 0 : index
    %127 = vector.load %arg13[%c0_51, %c0_52, %c0_53] : memref<2x1x32xf32, #tpu.memory_space<vmem>>, vector<1x1x32xf32>
    %128 = vector.shape_cast %127 : vector<1x1x32xf32> to vector<1x32xf32>
    %c0_54 = arith.constant 0 : index
    %c0_55 = arith.constant 0 : index
    %c0_56 = arith.constant 0 : index
    %129 = vector.load %arg14[%c0_54, %c0_55, %c0_56] : memref<2x1x32xf32, #tpu.memory_space<vmem>>, vector<1x1x32xf32>
    %130 = vector.shape_cast %129 : vector<1x1x32xf32> to vector<1x32xf32>
    %cst_57 = arith.constant dense<0.000000e+00> : vector<32xf32>
    %131 = vector.multi_reduction <add>, %126, %cst_57 [1] : vector<32x32xf32> to vector<32xf32>
    %132 = vector.shape_cast %131 : vector<32xf32> to vector<32x1xf32>
    %cst_58 = arith.constant 3.200000e+01 : f32
    %133 = vector.broadcast %cst_58 : f32 to vector<32x1xf32>
    %134 = arith.divf %132, %133 : vector<32x1xf32>
    %135 = vector.broadcast %134 : vector<32x1xf32> to vector<32x32xf32>
    %136 = arith.subf %126, %135 : vector<32x32xf32>
    %137 = arith.mulf %136, %136 : vector<32x32xf32>
    %cst_59 = arith.constant dense<0.000000e+00> : vector<32xf32>
    %138 = vector.multi_reduction <add>, %137, %cst_59 [1] : vector<32x32xf32> to vector<32xf32>
    %139 = vector.shape_cast %138 : vector<32xf32> to vector<32x1xf32>
    %cst_60 = arith.constant 3.200000e+01 : f32
    %140 = vector.broadcast %cst_60 : f32 to vector<32x1xf32>
    %141 = arith.divf %139, %140 : vector<32x1xf32>
    %142 = vector.broadcast %134 : vector<32x1xf32> to vector<32x32xf32>
    %143 = arith.subf %126, %142 : vector<32x32xf32>
    %cst_61 = arith.constant 9.99999974E-6 : f32
    %144 = vector.broadcast %cst_61 : f32 to vector<32x1xf32>
    %145 = arith.addf %141, %144 : vector<32x1xf32>
    %146 = math.rsqrt %145 : vector<32x1xf32>
    %147 = vector.broadcast %146 : vector<32x1xf32> to vector<32x32xf32>
    %148 = arith.mulf %143, %147 : vector<32x32xf32>
    %149 = vector.broadcast %128 : vector<1x32xf32> to vector<32x32xf32>
    %150 = arith.mulf %148, %149 : vector<32x32xf32>
    %151 = vector.broadcast %130 : vector<1x32xf32> to vector<32x32xf32>
    %152 = arith.addf %150, %151 : vector<32x32xf32>
    %153 = arith.truncf %152 : vector<32x32xf32> to vector<32x32xbf16>
    %c0_62 = arith.constant 0 : index
    %c0_63 = arith.constant 0 : index
    %c0_64 = arith.constant 0 : index
    %154 = vector.load %arg17[%c0_62, %c0_63, %c0_64] : memref<2x32x64xbf16, #tpu.memory_space<vmem>>, vector<1x32x64xbf16>
    %155 = vector.shape_cast %154 : vector<1x32x64xbf16> to vector<32x64xbf16>
    %cst_65 = arith.constant dense<0.000000e+00> : vector<32x64xf32>
    %156 = tpu.matmul %153, %155, %cst_65 {dimension_numbers = #tpu.dot_dimension_numbers<[1], [0], [0], [1], [0, 0, 1, 1], [], []>} : vector<32x32xbf16>, vector<32x64xbf16>, vector<32x64xf32> -> vector<32x64xf32>
    %c0_66 = arith.constant 0 : index
    %c0_67 = arith.constant 0 : index
    %c0_68 = arith.constant 0 : index
    %157 = vector.load %arg18[%c0_66, %c0_67, %c0_68] : memref<2x1x64xf32, #tpu.memory_space<vmem>>, vector<1x1x64xf32>
    %158 = vector.shape_cast %157 : vector<1x1x64xf32> to vector<1x64xf32>
    %159 = vector.broadcast %158 : vector<1x64xf32> to vector<32x64xf32>
    %160 = arith.addf %156, %159 : vector<32x64xf32>
    %cst_69 = arith.constant 0.000000e+00 : f32
    %161 = vector.broadcast %cst_69 : f32 to vector<32x64xf32>
    %162 = arith.maximumf %160, %161 : vector<32x64xf32>
    %163 = arith.truncf %162 : vector<32x64xf32> to vector<32x64xbf16>
    %c0_70 = arith.constant 0 : index
    %c0_71 = arith.constant 0 : index
    %c0_72 = arith.constant 0 : index
    %164 = vector.load %arg19[%c0_70, %c0_71, %c0_72] : memref<2x64x32xbf16, #tpu.memory_space<vmem>>, vector<1x64x32xbf16>
    %165 = vector.shape_cast %164 : vector<1x64x32xbf16> to vector<64x32xbf16>
    %cst_73 = arith.constant dense<0.000000e+00> : vector<32x32xf32>
    %166 = tpu.matmul %163, %165, %cst_73 {dimension_numbers = #tpu.dot_dimension_numbers<[1], [0], [0], [1], [0, 0, 1, 1], [], []>} : vector<32x64xbf16>, vector<64x32xbf16>, vector<32x32xf32> -> vector<32x32xf32>
    %c0_74 = arith.constant 0 : index
    %c0_75 = arith.constant 0 : index
    %c0_76 = arith.constant 0 : index
    %167 = vector.load %arg20[%c0_74, %c0_75, %c0_76] : memref<2x1x32xf32, #tpu.memory_space<vmem>>, vector<1x1x32xf32>
    %168 = vector.shape_cast %167 : vector<1x1x32xf32> to vector<1x32xf32>
    %169 = vector.broadcast %168 : vector<1x32xf32> to vector<32x32xf32>
    %170 = arith.addf %166, %169 : vector<32x32xf32>
    %171 = arith.addf %152, %170 : vector<32x32xf32>
    %c0_77 = arith.constant 0 : index
    %c0_78 = arith.constant 0 : index
    %c0_79 = arith.constant 0 : index
    %172 = vector.load %arg15[%c0_77, %c0_78, %c0_79] : memref<2x1x32xf32, #tpu.memory_space<vmem>>, vector<1x1x32xf32>
    %173 = vector.shape_cast %172 : vector<1x1x32xf32> to vector<1x32xf32>
    %c0_80 = arith.constant 0 : index
    %c0_81 = arith.constant 0 : index
    %c0_82 = arith.constant 0 : index
    %174 = vector.load %arg16[%c0_80, %c0_81, %c0_82] : memref<2x1x32xf32, #tpu.memory_space<vmem>>, vector<1x1x32xf32>
    %175 = vector.shape_cast %174 : vector<1x1x32xf32> to vector<1x32xf32>
    %cst_83 = arith.constant dense<0.000000e+00> : vector<32xf32>
    %176 = vector.multi_reduction <add>, %171, %cst_83 [1] : vector<32x32xf32> to vector<32xf32>
    %177 = vector.shape_cast %176 : vector<32xf32> to vector<32x1xf32>
    %cst_84 = arith.constant 3.200000e+01 : f32
    %178 = vector.broadcast %cst_84 : f32 to vector<32x1xf32>
    %179 = arith.divf %177, %178 : vector<32x1xf32>
    %180 = vector.broadcast %179 : vector<32x1xf32> to vector<32x32xf32>
    %181 = arith.subf %171, %180 : vector<32x32xf32>
    %182 = arith.mulf %181, %181 : vector<32x32xf32>
    %cst_85 = arith.constant dense<0.000000e+00> : vector<32xf32>
    %183 = vector.multi_reduction <add>, %182, %cst_85 [1] : vector<32x32xf32> to vector<32xf32>
    %184 = vector.shape_cast %183 : vector<32xf32> to vector<32x1xf32>
    %cst_86 = arith.constant 3.200000e+01 : f32
    %185 = vector.broadcast %cst_86 : f32 to vector<32x1xf32>
    %186 = arith.divf %184, %185 : vector<32x1xf32>
    %187 = vector.broadcast %179 : vector<32x1xf32> to vector<32x32xf32>
    %188 = arith.subf %171, %187 : vector<32x32xf32>
    %cst_87 = arith.constant 9.99999974E-6 : f32
    %189 = vector.broadcast %cst_87 : f32 to vector<32x1xf32>
    %190 = arith.addf %186, %189 : vector<32x1xf32>
    %191 = math.rsqrt %190 : vector<32x1xf32>
    %192 = vector.broadcast %191 : vector<32x1xf32> to vector<32x32xf32>
    %193 = arith.mulf %188, %192 : vector<32x32xf32>
    %194 = vector.broadcast %173 : vector<1x32xf32> to vector<32x32xf32>
    %195 = arith.mulf %193, %194 : vector<32x32xf32>
    %196 = vector.broadcast %175 : vector<1x32xf32> to vector<32x32xf32>
    %197 = arith.addf %195, %196 : vector<32x32xf32>
    %198 = arith.truncf %197 : vector<32x32xf32> to vector<32x32xbf16>
    %c1 = arith.constant 1 : index
    %c0_88 = arith.constant 0 : index
    %c0_89 = arith.constant 0 : index
    %199 = vector.load %arg9[%c1, %c0_88, %c0_89] : memref<2x32x96xbf16, #tpu.memory_space<vmem>>, vector<1x32x96xbf16>
    %200 = vector.shape_cast %199 : vector<1x32x96xbf16> to vector<32x96xbf16>
    %cst_90 = arith.constant dense<0.000000e+00> : vector<32x96xf32>
    %201 = tpu.matmul %198, %200, %cst_90 {dimension_numbers = #tpu.dot_dimension_numbers<[1], [0], [0], [1], [0, 0, 1, 1], [], []>} : vector<32x32xbf16>, vector<32x96xbf16>, vector<32x96xf32> -> vector<32x96xf32>
    %c1_91 = arith.constant 1 : index
    %c0_92 = arith.constant 0 : index
    %c0_93 = arith.constant 0 : index
    %202 = vector.load %arg10[%c1_91, %c0_92, %c0_93] : memref<2x1x96xf32, #tpu.memory_space<vmem>>, vector<1x1x96xf32>
    %203 = vector.shape_cast %202 : vector<1x1x96xf32> to vector<1x96xf32>
    %204 = vector.broadcast %203 : vector<1x96xf32> to vector<32x96xf32>
    %205 = arith.addf %201, %204 : vector<32x96xf32>
    %206 = arith.truncf %205 : vector<32x96xf32> to vector<32x96xbf16>
    %207 = vector.extract_strided_slice %206 {offsets = [0, 0], sizes = [32, 8], strides = [1, 1]} : vector<32x96xbf16> to vector<32x8xbf16>
    %208 = vector.shape_cast %207 : vector<32x8xbf16> to vector<2x16x8xbf16>
    %209 = vector.extract_strided_slice %206 {offsets = [0, 32], sizes = [32, 8], strides = [1, 1]} : vector<32x96xbf16> to vector<32x8xbf16>
    %210 = vector.shape_cast %209 : vector<32x8xbf16> to vector<2x16x8xbf16>
    %211 = vector.extract_strided_slice %206 {offsets = [0, 64], sizes = [32, 8], strides = [1, 1]} : vector<32x96xbf16> to vector<32x8xbf16>
    %212 = vector.shape_cast %211 : vector<32x8xbf16> to vector<2x16x8xbf16>
    "tpu.trace_start"() <{level = 10 : i32, message = "bqe,bke->bqk"}> : () -> ()
    %cst_94 = arith.constant dense<0.000000e+00> : vector<2x16x16xf32>
    %213 = tpu.matmul %208, %210, %cst_94 {dimension_numbers = #tpu.dot_dimension_numbers<[2], [2], [1], [1], [0, 0, 0, 1, 1, 1], [0], [0]>} : vector<2x16x8xbf16>, vector<2x16x8xbf16>, vector<2x16x16xf32> -> vector<2x16x16xf32>
    "tpu.trace_stop"() : () -> ()
    %cst_95 = arith.constant dense<0xFF800000> : vector<2x16xf32>
    %214 = vector.multi_reduction <maximumf>, %213, %cst_95 [2] : vector<2x16x16xf32> to vector<2x16xf32>
    %215 = vector.shape_cast %214 : vector<2x16xf32> to vector<2x16x1xf32>
    %216 = vector.broadcast %215 : vector<2x16x1xf32> to vector<2x16x16xf32>
    %217 = arith.subf %213, %216 : vector<2x16x16xf32>
    %218 = math.exp %217 : vector<2x16x16xf32>
    %cst_96 = arith.constant dense<0.000000e+00> : vector<2x16xf32>
    %219 = vector.multi_reduction <add>, %218, %cst_96 [2] : vector<2x16x16xf32> to vector<2x16xf32>
    %220 = vector.shape_cast %219 : vector<2x16xf32> to vector<2x16x1xf32>
    %221 = tpu.reciprocal %220 {approx = true} : vector<2x16x1xf32> -> vector<2x16x1xf32>
    %222 = vector.broadcast %221 : vector<2x16x1xf32> to vector<2x16x16xf32>
    %223 = arith.mulf %218, %222 : vector<2x16x16xf32>
    %224 = arith.truncf %223 : vector<2x16x16xf32> to vector<2x16x16xbf16>
    "tpu.trace_start"() <{level = 10 : i32, message = "bqk,bke->bqe"}> : () -> ()
    %cst_97 = arith.constant dense<0.000000e+00> : vector<2x16x8xf32>
    %225 = tpu.matmul %224, %212, %cst_97 {dimension_numbers = #tpu.dot_dimension_numbers<[2], [1], [1], [2], [0, 0, 0, 1, 1, 2], [0], [0]>} : vector<2x16x16xbf16>, vector<2x16x8xbf16>, vector<2x16x8xf32> -> vector<2x16x8xf32>
    "tpu.trace_stop"() : () -> ()
    %226 = vector.shape_cast %225 : vector<2x16x8xf32> to vector<32x8xf32>
    %227 = vector.extract_strided_slice %206 {offsets = [0, 8], sizes = [32, 8], strides = [1, 1]} : vector<32x96xbf16> to vector<32x8xbf16>
    %228 = vector.shape_cast %227 : vector<32x8xbf16> to vector<2x16x8xbf16>
    %229 = vector.extract_strided_slice %206 {offsets = [0, 40], sizes = [32, 8], strides = [1, 1]} : vector<32x96xbf16> to vector<32x8xbf16>
    %230 = vector.shape_cast %229 : vector<32x8xbf16> to vector<2x16x8xbf16>
    %231 = vector.extract_strided_slice %206 {offsets = [0, 72], sizes = [32, 8], strides = [1, 1]} : vector<32x96xbf16> to vector<32x8xbf16>
    %232 = vector.shape_cast %231 : vector<32x8xbf16> to vector<2x16x8xbf16>
    "tpu.trace_start"() <{level = 10 : i32, message = "bqe,bke->bqk"}> : () -> ()
    %cst_98 = arith.constant dense<0.000000e+00> : vector<2x16x16xf32>
    %233 = tpu.matmul %228, %230, %cst_98 {dimension_numbers = #tpu.dot_dimension_numbers<[2], [2], [1], [1], [0, 0, 0, 1, 1, 1], [0], [0]>} : vector<2x16x8xbf16>, vector<2x16x8xbf16>, vector<2x16x16xf32> -> vector<2x16x16xf32>
    "tpu.trace_stop"() : () -> ()
    %cst_99 = arith.constant dense<0xFF800000> : vector<2x16xf32>
    %234 = vector.multi_reduction <maximumf>, %233, %cst_99 [2] : vector<2x16x16xf32> to vector<2x16xf32>
    %235 = vector.shape_cast %234 : vector<2x16xf32> to vector<2x16x1xf32>
    %236 = vector.broadcast %235 : vector<2x16x1xf32> to vector<2x16x16xf32>
    %237 = arith.subf %233, %236 : vector<2x16x16xf32>
    %238 = math.exp %237 : vector<2x16x16xf32>
    %cst_100 = arith.constant dense<0.000000e+00> : vector<2x16xf32>
    %239 = vector.multi_reduction <add>, %238, %cst_100 [2] : vector<2x16x16xf32> to vector<2x16xf32>
    %240 = vector.shape_cast %239 : vector<2x16xf32> to vector<2x16x1xf32>
    %241 = tpu.reciprocal %240 {approx = true} : vector<2x16x1xf32> -> vector<2x16x1xf32>
    %242 = vector.broadcast %241 : vector<2x16x1xf32> to vector<2x16x16xf32>
    %243 = arith.mulf %238, %242 : vector<2x16x16xf32>
    %244 = arith.truncf %243 : vector<2x16x16xf32> to vector<2x16x16xbf16>
    "tpu.trace_start"() <{level = 10 : i32, message = "bqk,bke->bqe"}> : () -> ()
    %cst_101 = arith.constant dense<0.000000e+00> : vector<2x16x8xf32>
    %245 = tpu.matmul %244, %232, %cst_101 {dimension_numbers = #tpu.dot_dimension_numbers<[2], [1], [1], [2], [0, 0, 0, 1, 1, 2], [0], [0]>} : vector<2x16x16xbf16>, vector<2x16x8xbf16>, vector<2x16x8xf32> -> vector<2x16x8xf32>
    "tpu.trace_stop"() : () -> ()
    %246 = vector.shape_cast %245 : vector<2x16x8xf32> to vector<32x8xf32>
    %247 = vector.extract_strided_slice %206 {offsets = [0, 16], sizes = [32, 8], strides = [1, 1]} : vector<32x96xbf16> to vector<32x8xbf16>
    %248 = vector.shape_cast %247 : vector<32x8xbf16> to vector<2x16x8xbf16>
    %249 = vector.extract_strided_slice %206 {offsets = [0, 48], sizes = [32, 8], strides = [1, 1]} : vector<32x96xbf16> to vector<32x8xbf16>
    %250 = vector.shape_cast %249 : vector<32x8xbf16> to vector<2x16x8xbf16>
    %251 = vector.extract_strided_slice %206 {offsets = [0, 80], sizes = [32, 8], strides = [1, 1]} : vector<32x96xbf16> to vector<32x8xbf16>
    %252 = vector.shape_cast %251 : vector<32x8xbf16> to vector<2x16x8xbf16>
    "tpu.trace_start"() <{level = 10 : i32, message = "bqe,bke->bqk"}> : () -> ()
    %cst_102 = arith.constant dense<0.000000e+00> : vector<2x16x16xf32>
    %253 = tpu.matmul %248, %250, %cst_102 {dimension_numbers = #tpu.dot_dimension_numbers<[2], [2], [1], [1], [0, 0, 0, 1, 1, 1], [0], [0]>} : vector<2x16x8xbf16>, vector<2x16x8xbf16>, vector<2x16x16xf32> -> vector<2x16x16xf32>
    "tpu.trace_stop"() : () -> ()
    %cst_103 = arith.constant dense<0xFF800000> : vector<2x16xf32>
    %254 = vector.multi_reduction <maximumf>, %253, %cst_103 [2] : vector<2x16x16xf32> to vector<2x16xf32>
    %255 = vector.shape_cast %254 : vector<2x16xf32> to vector<2x16x1xf32>
    %256 = vector.broadcast %255 : vector<2x16x1xf32> to vector<2x16x16xf32>
    %257 = arith.subf %253, %256 : vector<2x16x16xf32>
    %258 = math.exp %257 : vector<2x16x16xf32>
    %cst_104 = arith.constant dense<0.000000e+00> : vector<2x16xf32>
    %259 = vector.multi_reduction <add>, %258, %cst_104 [2] : vector<2x16x16xf32> to vector<2x16xf32>
    %260 = vector.shape_cast %259 : vector<2x16xf32> to vector<2x16x1xf32>
    %261 = tpu.reciprocal %260 {approx = true} : vector<2x16x1xf32> -> vector<2x16x1xf32>
    %262 = vector.broadcast %261 : vector<2x16x1xf32> to vector<2x16x16xf32>
    %263 = arith.mulf %258, %262 : vector<2x16x16xf32>
    %264 = arith.truncf %263 : vector<2x16x16xf32> to vector<2x16x16xbf16>
    "tpu.trace_start"() <{level = 10 : i32, message = "bqk,bke->bqe"}> : () -> ()
    %cst_105 = arith.constant dense<0.000000e+00> : vector<2x16x8xf32>
    %265 = tpu.matmul %264, %252, %cst_105 {dimension_numbers = #tpu.dot_dimension_numbers<[2], [1], [1], [2], [0, 0, 0, 1, 1, 2], [0], [0]>} : vector<2x16x16xbf16>, vector<2x16x8xbf16>, vector<2x16x8xf32> -> vector<2x16x8xf32>
    "tpu.trace_stop"() : () -> ()
    %266 = vector.shape_cast %265 : vector<2x16x8xf32> to vector<32x8xf32>
    %267 = vector.extract_strided_slice %206 {offsets = [0, 24], sizes = [32, 8], strides = [1, 1]} : vector<32x96xbf16> to vector<32x8xbf16>
    %268 = vector.shape_cast %267 : vector<32x8xbf16> to vector<2x16x8xbf16>
    %269 = vector.extract_strided_slice %206 {offsets = [0, 56], sizes = [32, 8], strides = [1, 1]} : vector<32x96xbf16> to vector<32x8xbf16>
    %270 = vector.shape_cast %269 : vector<32x8xbf16> to vector<2x16x8xbf16>
    %271 = vector.extract_strided_slice %206 {offsets = [0, 88], sizes = [32, 8], strides = [1, 1]} : vector<32x96xbf16> to vector<32x8xbf16>
    %272 = vector.shape_cast %271 : vector<32x8xbf16> to vector<2x16x8xbf16>
    "tpu.trace_start"() <{level = 10 : i32, message = "bqe,bke->bqk"}> : () -> ()
    %cst_106 = arith.constant dense<0.000000e+00> : vector<2x16x16xf32>
    %273 = tpu.matmul %268, %270, %cst_106 {dimension_numbers = #tpu.dot_dimension_numbers<[2], [2], [1], [1], [0, 0, 0, 1, 1, 1], [0], [0]>} : vector<2x16x8xbf16>, vector<2x16x8xbf16>, vector<2x16x16xf32> -> vector<2x16x16xf32>
    "tpu.trace_stop"() : () -> ()
    %cst_107 = arith.constant dense<0xFF800000> : vector<2x16xf32>
    %274 = vector.multi_reduction <maximumf>, %273, %cst_107 [2] : vector<2x16x16xf32> to vector<2x16xf32>
    %275 = vector.shape_cast %274 : vector<2x16xf32> to vector<2x16x1xf32>
    %276 = vector.broadcast %275 : vector<2x16x1xf32> to vector<2x16x16xf32>
    %277 = arith.subf %273, %276 : vector<2x16x16xf32>
    %278 = math.exp %277 : vector<2x16x16xf32>
    %cst_108 = arith.constant dense<0.000000e+00> : vector<2x16xf32>
    %279 = vector.multi_reduction <add>, %278, %cst_108 [2] : vector<2x16x16xf32> to vector<2x16xf32>
    %280 = vector.shape_cast %279 : vector<2x16xf32> to vector<2x16x1xf32>
    %281 = tpu.reciprocal %280 {approx = true} : vector<2x16x1xf32> -> vector<2x16x1xf32>
    %282 = vector.broadcast %281 : vector<2x16x1xf32> to vector<2x16x16xf32>
    %283 = arith.mulf %278, %282 : vector<2x16x16xf32>
    %284 = arith.truncf %283 : vector<2x16x16xf32> to vector<2x16x16xbf16>
    "tpu.trace_start"() <{level = 10 : i32, message = "bqk,bke->bqe"}> : () -> ()
    %cst_109 = arith.constant dense<0.000000e+00> : vector<2x16x8xf32>
    %285 = tpu.matmul %284, %272, %cst_109 {dimension_numbers = #tpu.dot_dimension_numbers<[2], [1], [1], [2], [0, 0, 0, 1, 1, 2], [0], [0]>} : vector<2x16x16xbf16>, vector<2x16x8xbf16>, vector<2x16x8xf32> -> vector<2x16x8xf32>
    "tpu.trace_stop"() : () -> ()
    %286 = vector.shape_cast %285 : vector<2x16x8xf32> to vector<32x8xf32>
    %287 = tpu.concatenate %226, %246, %266, %286 in 1 : vector<32x8xf32>, vector<32x8xf32>, vector<32x8xf32>, vector<32x8xf32> -> vector<32x32xf32>
    %288 = arith.truncf %287 : vector<32x32xf32> to vector<32x32xbf16>
    %c1_110 = arith.constant 1 : index
    %c0_111 = arith.constant 0 : index
    %c0_112 = arith.constant 0 : index
    %289 = vector.load %arg11[%c1_110, %c0_111, %c0_112] : memref<2x32x32xbf16, #tpu.memory_space<vmem>>, vector<1x32x32xbf16>
    %290 = vector.shape_cast %289 : vector<1x32x32xbf16> to vector<32x32xbf16>
    %cst_113 = arith.constant dense<0.000000e+00> : vector<32x32xf32>
    %291 = tpu.matmul %288, %290, %cst_113 {dimension_numbers = #tpu.dot_dimension_numbers<[1], [0], [0], [1], [0, 0, 1, 1], [], []>} : vector<32x32xbf16>, vector<32x32xbf16>, vector<32x32xf32> -> vector<32x32xf32>
    %c1_114 = arith.constant 1 : index
    %c0_115 = arith.constant 0 : index
    %c0_116 = arith.constant 0 : index
    %292 = vector.load %arg12[%c1_114, %c0_115, %c0_116] : memref<2x1x32xf32, #tpu.memory_space<vmem>>, vector<1x1x32xf32>
    %293 = vector.shape_cast %292 : vector<1x1x32xf32> to vector<1x32xf32>
    %294 = vector.broadcast %293 : vector<1x32xf32> to vector<32x32xf32>
    %295 = arith.addf %291, %294 : vector<32x32xf32>
    %296 = arith.addf %197, %295 : vector<32x32xf32>
    %c1_117 = arith.constant 1 : index
    %c0_118 = arith.constant 0 : index
    %c0_119 = arith.constant 0 : index
    %297 = vector.load %arg13[%c1_117, %c0_118, %c0_119] : memref<2x1x32xf32, #tpu.memory_space<vmem>>, vector<1x1x32xf32>
    %298 = vector.shape_cast %297 : vector<1x1x32xf32> to vector<1x32xf32>
    %c1_120 = arith.constant 1 : index
    %c0_121 = arith.constant 0 : index
    %c0_122 = arith.constant 0 : index
    %299 = vector.load %arg14[%c1_120, %c0_121, %c0_122] : memref<2x1x32xf32, #tpu.memory_space<vmem>>, vector<1x1x32xf32>
    %300 = vector.shape_cast %299 : vector<1x1x32xf32> to vector<1x32xf32>
    %cst_123 = arith.constant dense<0.000000e+00> : vector<32xf32>
    %301 = vector.multi_reduction <add>, %296, %cst_123 [1] : vector<32x32xf32> to vector<32xf32>
    %302 = vector.shape_cast %301 : vector<32xf32> to vector<32x1xf32>
    %cst_124 = arith.constant 3.200000e+01 : f32
    %303 = vector.broadcast %cst_124 : f32 to vector<32x1xf32>
    %304 = arith.divf %302, %303 : vector<32x1xf32>
    %305 = vector.broadcast %304 : vector<32x1xf32> to vector<32x32xf32>
    %306 = arith.subf %296, %305 : vector<32x32xf32>
    %307 = arith.mulf %306, %306 : vector<32x32xf32>
    %cst_125 = arith.constant dense<0.000000e+00> : vector<32xf32>
    %308 = vector.multi_reduction <add>, %307, %cst_125 [1] : vector<32x32xf32> to vector<32xf32>
    %309 = vector.shape_cast %308 : vector<32xf32> to vector<32x1xf32>
    %cst_126 = arith.constant 3.200000e+01 : f32
    %310 = vector.broadcast %cst_126 : f32 to vector<32x1xf32>
    %311 = arith.divf %309, %310 : vector<32x1xf32>
    %312 = vector.broadcast %304 : vector<32x1xf32> to vector<32x32xf32>
    %313 = arith.subf %296, %312 : vector<32x32xf32>
    %cst_127 = arith.constant 9.99999974E-6 : f32
    %314 = vector.broadcast %cst_127 : f32 to vector<32x1xf32>
    %315 = arith.addf %311, %314 : vector<32x1xf32>
    %316 = math.rsqrt %315 : vector<32x1xf32>
    %317 = vector.broadcast %316 : vector<32x1xf32> to vector<32x32xf32>
    %318 = arith.mulf %313, %317 : vector<32x32xf32>
    %319 = vector.broadcast %298 : vector<1x32xf32> to vector<32x32xf32>
    %320 = arith.mulf %318, %319 : vector<32x32xf32>
    %321 = vector.broadcast %300 : vector<1x32xf32> to vector<32x32xf32>
    %322 = arith.addf %320, %321 : vector<32x32xf32>
    %323 = arith.truncf %322 : vector<32x32xf32> to vector<32x32xbf16>
    %c1_128 = arith.constant 1 : index
    %c0_129 = arith.constant 0 : index
    %c0_130 = arith.constant 0 : index
    %324 = vector.load %arg17[%c1_128, %c0_129, %c0_130] : memref<2x32x64xbf16, #tpu.memory_space<vmem>>, vector<1x32x64xbf16>
    %325 = vector.shape_cast %324 : vector<1x32x64xbf16> to vector<32x64xbf16>
    %cst_131 = arith.constant dense<0.000000e+00> : vector<32x64xf32>
    %326 = tpu.matmul %323, %325, %cst_131 {dimension_numbers = #tpu.dot_dimension_numbers<[1], [0], [0], [1], [0, 0, 1, 1], [], []>} : vector<32x32xbf16>, vector<32x64xbf16>, vector<32x64xf32> -> vector<32x64xf32>
    %c1_132 = arith.constant 1 : index
    %c0_133 = arith.constant 0 : index
    %c0_134 = arith.constant 0 : index
    %327 = vector.load %arg18[%c1_132, %c0_133, %c0_134] : memref<2x1x64xf32, #tpu.memory_space<vmem>>, vector<1x1x64xf32>
    %328 = vector.shape_cast %327 : vector<1x1x64xf32> to vector<1x64xf32>
    %329 = vector.broadcast %328 : vector<1x64xf32> to vector<32x64xf32>
    %330 = arith.addf %326, %329 : vector<32x64xf32>
    %cst_135 = arith.constant 0.000000e+00 : f32
    %331 = vector.broadcast %cst_135 : f32 to vector<32x64xf32>
    %332 = arith.maximumf %330, %331 : vector<32x64xf32>
    %333 = arith.truncf %332 : vector<32x64xf32> to vector<32x64xbf16>
    %c1_136 = arith.constant 1 : index
    %c0_137 = arith.constant 0 : index
    %c0_138 = arith.constant 0 : index
    %334 = vector.load %arg19[%c1_136, %c0_137, %c0_138] : memref<2x64x32xbf16, #tpu.memory_space<vmem>>, vector<1x64x32xbf16>
    %335 = vector.shape_cast %334 : vector<1x64x32xbf16> to vector<64x32xbf16>
    %cst_139 = arith.constant dense<0.000000e+00> : vector<32x32xf32>
    %336 = tpu.matmul %333, %335, %cst_139 {dimension_numbers = #tpu.dot_dimension_numbers<[1], [0], [0], [1], [0, 0, 1, 1], [], []>} : vector<32x64xbf16>, vector<64x32xbf16>, vector<32x32xf32> -> vector<32x32xf32>
    %c1_140 = arith.constant 1 : index
    %c0_141 = arith.constant 0 : index
    %c0_142 = arith.constant 0 : index
    %337 = vector.load %arg20[%c1_140, %c0_141, %c0_142] : memref<2x1x32xf32, #tpu.memory_space<vmem>>, vector<1x1x32xf32>
    %338 = vector.shape_cast %337 : vector<1x1x32xf32> to vector<1x32xf32>
    %339 = vector.broadcast %338 : vector<1x32xf32> to vector<32x32xf32>
    %340 = arith.addf %336, %339 : vector<32x32xf32>
    %341 = arith.addf %322, %340 : vector<32x32xf32>
    %c1_143 = arith.constant 1 : index
    %c0_144 = arith.constant 0 : index
    %c0_145 = arith.constant 0 : index
    %342 = vector.load %arg15[%c1_143, %c0_144, %c0_145] : memref<2x1x32xf32, #tpu.memory_space<vmem>>, vector<1x1x32xf32>
    %343 = vector.shape_cast %342 : vector<1x1x32xf32> to vector<1x32xf32>
    %c1_146 = arith.constant 1 : index
    %c0_147 = arith.constant 0 : index
    %c0_148 = arith.constant 0 : index
    %344 = vector.load %arg16[%c1_146, %c0_147, %c0_148] : memref<2x1x32xf32, #tpu.memory_space<vmem>>, vector<1x1x32xf32>
    %345 = vector.shape_cast %344 : vector<1x1x32xf32> to vector<1x32xf32>
    %cst_149 = arith.constant dense<0.000000e+00> : vector<32xf32>
    %346 = vector.multi_reduction <add>, %341, %cst_149 [1] : vector<32x32xf32> to vector<32xf32>
    %347 = vector.shape_cast %346 : vector<32xf32> to vector<32x1xf32>
    %cst_150 = arith.constant 3.200000e+01 : f32
    %348 = vector.broadcast %cst_150 : f32 to vector<32x1xf32>
    %349 = arith.divf %347, %348 : vector<32x1xf32>
    %350 = vector.broadcast %349 : vector<32x1xf32> to vector<32x32xf32>
    %351 = arith.subf %341, %350 : vector<32x32xf32>
    %352 = arith.mulf %351, %351 : vector<32x32xf32>
    %cst_151 = arith.constant dense<0.000000e+00> : vector<32xf32>
    %353 = vector.multi_reduction <add>, %352, %cst_151 [1] : vector<32x32xf32> to vector<32xf32>
    %354 = vector.shape_cast %353 : vector<32xf32> to vector<32x1xf32>
    %cst_152 = arith.constant 3.200000e+01 : f32
    %355 = vector.broadcast %cst_152 : f32 to vector<32x1xf32>
    %356 = arith.divf %354, %355 : vector<32x1xf32>
    %357 = vector.broadcast %349 : vector<32x1xf32> to vector<32x32xf32>
    %358 = arith.subf %341, %357 : vector<32x32xf32>
    %cst_153 = arith.constant 9.99999974E-6 : f32
    %359 = vector.broadcast %cst_153 : f32 to vector<32x1xf32>
    %360 = arith.addf %356, %359 : vector<32x1xf32>
    %361 = math.rsqrt %360 : vector<32x1xf32>
    %362 = vector.broadcast %361 : vector<32x1xf32> to vector<32x32xf32>
    %363 = arith.mulf %358, %362 : vector<32x32xf32>
    %364 = vector.broadcast %343 : vector<1x32xf32> to vector<32x32xf32>
    %365 = arith.mulf %363, %364 : vector<32x32xf32>
    %366 = vector.broadcast %345 : vector<1x32xf32> to vector<32x32xf32>
    %367 = arith.addf %365, %366 : vector<32x32xf32>
    %cst_154 = arith.constant 5.000000e-01 : f32
    %368 = vector.broadcast %cst_154 : f32 to vector<32x1xf32>
    %369 = arith.cmpf ogt, %1, %368 : vector<32x1xf32>
    %cst_155 = arith.constant -1.000000e+09 : f32
    %370 = vector.shape_cast %369 : vector<32x1xi1> to vector<32x1xi1>
    %371 = vector.broadcast %370 : vector<32x1xi1> to vector<32x32xi1>
    %372 = vector.broadcast %cst_155 : f32 to vector<32x32xf32>
    %373 = arith.select %371, %367, %372 : vector<32x32xi1>, vector<32x32xf32>
    %374 = vector.shape_cast %373 : vector<32x32xf32> to vector<2x16x32xf32>
    %cst_156 = arith.constant dense<0xFF800000> : vector<2x32xf32>
    %375 = vector.multi_reduction <maximumf>, %374, %cst_156 [1] : vector<2x16x32xf32> to vector<2x32xf32>
    %376 = arith.truncf %375 : vector<2x32xf32> to vector<2x32xbf16>
    %c0_157 = arith.constant 0 : index
    %c0_158 = arith.constant 0 : index
    %377 = vector.load %arg21[%c0_157, %c0_158] : memref<32x128xbf16, #tpu.memory_space<vmem>>, vector<32x128xbf16>
    %cst_159 = arith.constant dense<0.000000e+00> : vector<2x128xf32>
    %378 = tpu.matmul %376, %377, %cst_159 {dimension_numbers = #tpu.dot_dimension_numbers<[1], [0], [0], [1], [0, 0, 1, 1], [], []>} : vector<2x32xbf16>, vector<32x128xbf16>, vector<2x128xf32> -> vector<2x128xf32>
    %c0_160 = arith.constant 0 : index
    %c0_161 = arith.constant 0 : index
    %379 = vector.load %arg22[%c0_160, %c0_161] : memref<1x128xf32, #tpu.memory_space<vmem>>, vector<1x128xf32>
    %380 = vector.broadcast %379 : vector<1x128xf32> to vector<2x128xf32>
    %381 = arith.addf %378, %380 : vector<2x128xf32>
    %c0_162 = arith.constant 0 : index
    %c0_163 = arith.constant 0 : index
    %c0_164 = arith.constant 0 : index
    %382 = vector.load %arg23[%c0_162, %c0_163, %c0_164] : memref<1x2x128xf32, #tpu.memory_space<vmem>>, vector<1x2x128xf32>
    %383 = vector.shape_cast %382 : vector<1x2x128xf32> to vector<2x128xf32>
    %384 = vector.shape_cast %381 : vector<2x128xf32> to vector<1x2x128xf32>
    tpu.vector_store %arg23[%c0_162, %c0_163, %c0_164], %384 {strides = array<i32>} : memref<1x2x128xf32, #tpu.memory_space<vmem>>, vector<1x2x128xf32>,
    return
  }
  func.func @transform_0(%arg0: i32) -> (i32, i32, i32) {
    %c0_i32 = arith.constant 0 : i32
    %c0_i32_0 = arith.constant 0 : i32
    %c0_i32_1 = arith.constant 0 : i32
    return %arg0, %c0_i32, %c0_i32_0 : i32, i32, i32
  }
  func.func @transform_1(%arg0: i32) -> (i32, i32, i32) {
    %c0_i32 = arith.constant 0 : i32
    %c0_i32_0 = arith.constant 0 : i32
    %c0_i32_1 = arith.constant 0 : i32
    return %arg0, %c0_i32, %c0_i32_0 : i32, i32, i32
  }
  func.func @transform_2(%arg0: i32) -> (i32, i32) {
    %c0_i32 = arith.constant 0 : i32
    %c0_i32_0 = arith.constant 0 : i32
    %c0_i32_1 = arith.constant 0 : i32
    return %c0_i32, %c0_i32_0 : i32, i32
  }
  func.func @transform_3(%arg0: i32) -> (i32, i32) {
    %c0_i32 = arith.constant 0 : i32
    %c0_i32_0 = arith.constant 0 : i32
    %c0_i32_1 = arith.constant 0 : i32
    return %c0_i32, %c0_i32_0 : i32, i32
  }
  func.func @transform_4(%arg0: i32) -> (i32, i32) {
    %c0_i32 = arith.constant 0 : i32
    %c0_i32_0 = arith.constant 0 : i32
    %c0_i32_1 = arith.constant 0 : i32
    return %c0_i32, %c0_i32_0 : i32, i32
  }
  func.func @transform_5(%arg0: i32) -> (i32, i32) {
    %c0_i32 = arith.constant 0 : i32
    %c0_i32_0 = arith.constant 0 : i32
    %c0_i32_1 = arith.constant 0 : i32
    return %c0_i32, %c0_i32_0 : i32, i32
  }
  func.func @transform_6(%arg0: i32) -> (i32, i32) {
    %c0_i32 = arith.constant 0 : i32
    %c0_i32_0 = arith.constant 0 : i32
    %c0_i32_1 = arith.constant 0 : i32
    return %c0_i32, %c0_i32_0 : i32, i32
  }
  func.func @transform_7(%arg0: i32) -> (i32, i32) {
    %c0_i32 = arith.constant 0 : i32
    %c0_i32_0 = arith.constant 0 : i32
    %c0_i32_1 = arith.constant 0 : i32
    return %c0_i32, %c0_i32_0 : i32, i32
  }
  func.func @transform_8(%arg0: i32) -> (i32, i32, i32) {
    %c0_i32 = arith.constant 0 : i32
    %c0_i32_0 = arith.constant 0 : i32
    %c0_i32_1 = arith.constant 0 : i32
    %c0_i32_2 = arith.constant 0 : i32
    return %c0_i32, %c0_i32_0, %c0_i32_1 : i32, i32, i32
  }
  func.func @transform_9(%arg0: i32) -> (i32, i32, i32) {
    %c0_i32 = arith.constant 0 : i32
    %c0_i32_0 = arith.constant 0 : i32
    %c0_i32_1 = arith.constant 0 : i32
    %c0_i32_2 = arith.constant 0 : i32
    return %c0_i32, %c0_i32_0, %c0_i32_1 : i32, i32, i32
  }
  func.func @transform_10(%arg0: i32) -> (i32, i32, i32) {
    %c0_i32 = arith.constant 0 : i32
    %c0_i32_0 = arith.constant 0 : i32
    %c0_i32_1 = arith.constant 0 : i32
    %c0_i32_2 = arith.constant 0 : i32
    return %c0_i32, %c0_i32_0, %c0_i32_1 : i32, i32, i32
  }
  func.func @transform_11(%arg0: i32) -> (i32, i32, i32) {
    %c0_i32 = arith.constant 0 : i32
    %c0_i32_0 = arith.constant 0 : i32
    %c0_i32_1 = arith.constant 0 : i32
    %c0_i32_2 = arith.constant 0 : i32
    return %c0_i32, %c0_i32_0, %c0_i32_1 : i32, i32, i32
  }
  func.func @transform_12(%arg0: i32) -> (i32, i32, i32) {
    %c0_i32 = arith.constant 0 : i32
    %c0_i32_0 = arith.constant 0 : i32
    %c0_i32_1 = arith.constant 0 : i32
    %c0_i32_2 = arith.constant 0 : i32
    return %c0_i32, %c0_i32_0, %c0_i32_1 : i32, i32, i32
  }
  func.func @transform_13(%arg0: i32) -> (i32, i32, i32) {
    %c0_i32 = arith.constant 0 : i32
    %c0_i32_0 = arith.constant 0 : i32
    %c0_i32_1 = arith.constant 0 : i32
    %c0_i32_2 = arith.constant 0 : i32
    return %c0_i32, %c0_i32_0, %c0_i32_1 : i32, i32, i32
  }
  func.func @transform_14(%arg0: i32) -> (i32, i32, i32) {
    %c0_i32 = arith.constant 0 : i32
    %c0_i32_0 = arith.constant 0 : i32
    %c0_i32_1 = arith.constant 0 : i32
    %c0_i32_2 = arith.constant 0 : i32
    return %c0_i32, %c0_i32_0, %c0_i32_1 : i32, i32, i32
  }
  func.func @transform_15(%arg0: i32) -> (i32, i32, i32) {
    %c0_i32 = arith.constant 0 : i32
    %c0_i32_0 = arith.constant 0 : i32
    %c0_i32_1 = arith.constant 0 : i32
    %c0_i32_2 = arith.constant 0 : i32
    return %c0_i32, %c0_i32_0, %c0_i32_1 : i32, i32, i32
  }
  func.func @transform_16(%arg0: i32) -> (i32, i32, i32) {
    %c0_i32 = arith.constant 0 : i32
    %c0_i32_0 = arith.constant 0 : i32
    %c0_i32_1 = arith.constant 0 : i32
    %c0_i32_2 = arith.constant 0 : i32
    return %c0_i32, %c0_i32_0, %c0_i32_1 : i32, i32, i32
  }
  func.func @transform_17(%arg0: i32) -> (i32, i32, i32) {
    %c0_i32 = arith.constant 0 : i32
    %c0_i32_0 = arith.constant 0 : i32
    %c0_i32_1 = arith.constant 0 : i32
    %c0_i32_2 = arith.constant 0 : i32
    return %c0_i32, %c0_i32_0, %c0_i32_1 : i32, i32, i32
  }
  func.func @transform_18(%arg0: i32) -> (i32, i32, i32) {
    %c0_i32 = arith.constant 0 : i32
    %c0_i32_0 = arith.constant 0 : i32
    %c0_i32_1 = arith.constant 0 : i32
    %c0_i32_2 = arith.constant 0 : i32
    return %c0_i32, %c0_i32_0, %c0_i32_1 : i32, i32, i32
  }
  func.func @transform_19(%arg0: i32) -> (i32, i32, i32) {
    %c0_i32 = arith.constant 0 : i32
    %c0_i32_0 = arith.constant 0 : i32
    %c0_i32_1 = arith.constant 0 : i32
    %c0_i32_2 = arith.constant 0 : i32
    return %c0_i32, %c0_i32_0, %c0_i32_1 : i32, i32, i32
  }
  func.func @transform_20(%arg0: i32) -> (i32, i32) {
    %c0_i32 = arith.constant 0 : i32
    %c0_i32_0 = arith.constant 0 : i32
    %c0_i32_1 = arith.constant 0 : i32
    return %c0_i32, %c0_i32_0 : i32, i32
  }
  func.func @transform_21(%arg0: i32) -> (i32, i32) {
    %c0_i32 = arith.constant 0 : i32
    %c0_i32_0 = arith.constant 0 : i32
    %c0_i32_1 = arith.constant 0 : i32
    return %c0_i32, %c0_i32_0 : i32, i32
  }
  func.func @transform_22(%arg0: i32) -> (i32, i32, i32) {
    %c0_i32 = arith.constant 0 : i32
    %c0_i32_0 = arith.constant 0 : i32
    %c0_i32_1 = arith.constant 0 : i32
    return %arg0, %c0_i32, %c0_i32_0 : i32, i32, i32
  }
}

</mosaic_0001>

<llo_original>
// kernel: tpu_custom_call.1
$region0: #{tpu_custom_call.1}
  #allocation0 [shape = 'u32[]', space=smem, size = 0x4, offset = 0x4, fixed_abs, tag = 'smem constant byte address 0x4 - core index']
  #allocation1 [shape = 'u32[144,128]{1,0:T(1,128)}', space=vmem, size = 0x12000, scoped, tag = 'internal scratch']
  %s0 = inlined_call_operand.vmem [shape: f32[2,16,8], index: 0, kind: input, shape index: {}]
  %s1 = inlined_call_operand.vmem [shape: f32[2,16,1], index: 1, kind: input, shape index: {}]
  %s2 = inlined_call_operand.vmem [shape: bf16[8,64], index: 2, kind: input, shape index: {}]
  %s3 = inlined_call_operand.vmem [shape: f32[1,64], index: 3, kind: input, shape index: {}]
  %s4 = inlined_call_operand.vmem [shape: bf16[64,128], index: 4, kind: input, shape index: {}]
  %s5 = inlined_call_operand.vmem [shape: f32[1,128], index: 5, kind: input, shape index: {}]
  %s6 = inlined_call_operand.vmem [shape: bf16[128,32], index: 6, kind: input, shape index: {}]
  %s7 = inlined_call_operand.vmem [shape: f32[1,32], index: 7, kind: input, shape index: {}]
  %s8 = inlined_call_operand.vmem [shape: bf16[2,32,96], index: 8, kind: input, shape index: {}]
  %s9 = inlined_call_operand.vmem [shape: f32[2,1,96], index: 9, kind: input, shape index: {}]
  %s10 = inlined_call_operand.vmem [shape: bf16[2,32,32], index: 10, kind: input, shape index: {}]
  %s11 = inlined_call_operand.vmem [shape: f32[2,1,32], index: 11, kind: input, shape index: {}]
  %s12 = inlined_call_operand.vmem [shape: f32[2,1,32], index: 12, kind: input, shape index: {}]
  %s13 = inlined_call_operand.vmem [shape: f32[2,1,32], index: 13, kind: input, shape index: {}]
  %s14 = inlined_call_operand.vmem [shape: f32[2,1,32], index: 14, kind: input, shape index: {}]
  %s15 = inlined_call_operand.vmem [shape: f32[2,1,32], index: 15, kind: input, shape index: {}]
  %s16 = inlined_call_operand.vmem [shape: bf16[2,32,64], index: 16, kind: input, shape index: {}]
  %s17 = inlined_call_operand.vmem [shape: f32[2,1,64], index: 17, kind: input, shape index: {}]
  %s18 = inlined_call_operand.vmem [shape: bf16[2,64,32], index: 18, kind: input, shape index: {}]
  %s19 = inlined_call_operand.vmem [shape: f32[2,1,32], index: 19, kind: input, shape index: {}]
  %s20 = inlined_call_operand.vmem [shape: bf16[32,128], index: 20, kind: input, shape index: {}]
  %s21 = inlined_call_operand.vmem [shape: f32[1,128], index: 21, kind: input, shape index: {}]
  %s22 = inlined_call_operand.hbm [shape: f32[1,2,128], index: 22, kind: output, shape index: {}]
  %s23 = sld [smem:[#allocation0]]
  $region98: #{tpu_custom_call.1} parent=0
    _
  %s25 = ssub.s32 1, %s23
  %s26 = scalar_select 0, %s25, %s23
  $region1: #{tpu_custom_call.1} parent=0
    #allocation2 [shape = 'u8[1024]{0}', space=vmem, size = 0x400, scoped, tag = 'output window, operand 0, single buffered']
    #allocation3 [shape = 's32[1]{0}', space=sflag, size = 0x4, scoped, tag = 'scoped memory for tpu_custom_call.1']
    %27 = vsyncpa [#allocation3], 0
    // Predicated region
    $region2: #{tpu_custom_call.1} parent=1 // pred_check
      _
    $region3: #{tpu_custom_call.1} parent=1 // pred_check_branch
      %29 = sbr.rel (0) target = $region5
    $region4: #{tpu_custom_call.1} parent=1 // pred_region
      _
    $region5: #{tpu_custom_call.1} parent=1 // pred_fallthru
      _
    // Predicated region
    $region6: #{tpu_custom_call.1} parent=1 // pred_check
      _
    $region7: #{tpu_custom_call.1} parent=1 // pred_check_branch
      %31 = sbr.rel (0) target = $region9
    $region8: #{tpu_custom_call.1} parent=1 // pred_region
      _
    $region9: #{tpu_custom_call.1} parent=1 // pred_fallthru
      _
    // Predicated region
    $region10: #{tpu_custom_call.1} parent=1 // pred_check
      _
    $region11: #{tpu_custom_call.1} parent=1 // pred_check_branch
      %33 = sbr.rel (0) target = $region13
    $region12: #{tpu_custom_call.1} parent=1 // pred_region
      _
    $region13: #{tpu_custom_call.1} parent=1 // pred_fallthru
      _
    // Predicated region
    $region14: #{tpu_custom_call.1} parent=1 // pred_check
      _
    $region15: #{tpu_custom_call.1} parent=1 // pred_check_branch
      %35 = sbr.rel (0) target = $region17
    $region16: #{tpu_custom_call.1} parent=1 // pred_region
      _
    $region17: #{tpu_custom_call.1} parent=1 // pred_fallthru
      _
    // Predicated region
    $region18: #{tpu_custom_call.1} parent=1 // pred_check
      _
    $region19: #{tpu_custom_call.1} parent=1 // pred_check_branch
      %37 = sbr.rel (0) target = $region21
    $region20: #{tpu_custom_call.1} parent=1 // pred_region
      _
    $region21: #{tpu_custom_call.1} parent=1 // pred_fallthru
      _
    // Predicated region
    $region22: #{tpu_custom_call.1} parent=1 // pred_check
      _
    $region23: #{tpu_custom_call.1} parent=1 // pred_check_branch
      %39 = sbr.rel (0) target = $region25
    $region24: #{tpu_custom_call.1} parent=1 // pred_region
      _
    $region25: #{tpu_custom_call.1} parent=1 // pred_fallthru
      _
    // Predicated region
    $region26: #{tpu_custom_call.1} parent=1 // pred_check
      _
    $region27: #{tpu_custom_call.1} parent=1 // pred_check_branch
      %41 = sbr.rel (0) target = $region29
    $region28: #{tpu_custom_call.1} parent=1 // pred_region
      _
    $region29: #{tpu_custom_call.1} parent=1 // pred_fallthru
      _
    // Predicated region
    $region30: #{tpu_custom_call.1} parent=1 // pred_check
      _
    $region31: #{tpu_custom_call.1} parent=1 // pred_check_branch
      %43 = sbr.rel (0) target = $region33
    $region32: #{tpu_custom_call.1} parent=1 // pred_region
      _
    $region33: #{tpu_custom_call.1} parent=1 // pred_fallthru
      _
    // Predicated region
    $region34: #{tpu_custom_call.1} parent=1 // pred_check
      _
    $region35: #{tpu_custom_call.1} parent=1 // pred_check_branch
      %45 = sbr.rel (0) target = $region37
    $region36: #{tpu_custom_call.1} parent=1 // pred_region
      _
    $region37: #{tpu_custom_call.1} parent=1 // pred_fallthru
      _
    // Predicated region
    $region38: #{tpu_custom_call.1} parent=1 // pred_check
      _
    $region39: #{tpu_custom_call.1} parent=1 // pred_check_branch
      %47 = sbr.rel (0) target = $region41
    $region40: #{tpu_custom_call.1} parent=1 // pred_region
      _
    $region41: #{tpu_custom_call.1} parent=1 // pred_fallthru
      _
    // Predicated region
    $region42: #{tpu_custom_call.1} parent=1 // pred_check
      _
    $region43: #{tpu_custom_call.1} parent=1 // pred_check_branch
      %49 = sbr.rel (0) target = $region45
    $region44: #{tpu_custom_call.1} parent=1 // pred_region
      _
    $region45: #{tpu_custom_call.1} parent=1 // pred_fallthru
      _
    // Predicated region
    $region46: #{tpu_custom_call.1} parent=1 // pred_check
      _
    $region47: #{tpu_custom_call.1} parent=1 // pred_check_branch
      %51 = sbr.rel (0) target = $region49
    $region48: #{tpu_custom_call.1} parent=1 // pred_region
      _
    $region49: #{tpu_custom_call.1} parent=1 // pred_fallthru
      _
    // Predicated region
    $region50: #{tpu_custom_call.1} parent=1 // pred_check
      _
    $region51: #{tpu_custom_call.1} parent=1 // pred_check_branch
      %53 = sbr.rel (0) target = $region53
    $region52: #{tpu_custom_call.1} parent=1 // pred_region
      _
    $region53: #{tpu_custom_call.1} parent=1 // pred_fallthru
      _
    // Predicated region
    $region54: #{tpu_custom_call.1} parent=1 // pred_check
      _
    $region55: #{tpu_custom_call.1} parent=1 // pred_check_branch
      %55 = sbr.rel (0) target = $region57
    $region56: #{tpu_custom_call.1} parent=1 // pred_region
      _
    $region57: #{tpu_custom_call.1} parent=1 // pred_fallthru
      _
    // Predicated region
    $region58: #{tpu_custom_call.1} parent=1 // pred_check
      _
    $region59: #{tpu_custom_call.1} parent=1 // pred_check_branch
      %57 = sbr.rel (0) target = $region61
    $region60: #{tpu_custom_call.1} parent=1 // pred_region
      _
    $region61: #{tpu_custom_call.1} parent=1 // pred_fallthru
      _
    // Predicated region
    $region62: #{tpu_custom_call.1} parent=1 // pred_check
      _
    $region63: #{tpu_custom_call.1} parent=1 // pred_check_branch
      %59 = sbr.rel (0) target = $region65
    $region64: #{tpu_custom_call.1} parent=1 // pred_region
      _
    $region65: #{tpu_custom_call.1} parent=1 // pred_fallthru
      _
    // Predicated region
    $region66: #{tpu_custom_call.1} parent=1 // pred_check
      _
    $region67: #{tpu_custom_call.1} parent=1 // pred_check_branch
      %61 = sbr.rel (0) target = $region69
    $region68: #{tpu_custom_call.1} parent=1 // pred_region
      _
    $region69: #{tpu_custom_call.1} parent=1 // pred_fallthru
      _
    // Predicated region
    $region70: #{tpu_custom_call.1} parent=1 // pred_check
      _
    $region71: #{tpu_custom_call.1} parent=1 // pred_check_branch
      %63 = sbr.rel (0) target = $region73
    $region72: #{tpu_custom_call.1} parent=1 // pred_region
      _
    $region73: #{tpu_custom_call.1} parent=1 // pred_fallthru
      _
    // Predicated region
    $region74: #{tpu_custom_call.1} parent=1 // pred_check
      _
    $region75: #{tpu_custom_call.1} parent=1 // pred_check_branch
      %65 = sbr.rel (0) target = $region77
    $region76: #{tpu_custom_call.1} parent=1 // pred_region
      _
    $region77: #{tpu_custom_call.1} parent=1 // pred_fallthru
      _
    // Predicated region
    $region78: #{tpu_custom_call.1} parent=1 // pred_check
      _
    $region79: #{tpu_custom_call.1} parent=1 // pred_check_branch
      %67 = sbr.rel (0) target = $region81
    $region80: #{tpu_custom_call.1} parent=1 // pred_region
      _
    $region81: #{tpu_custom_call.1} parent=1 // pred_fallthru
      _
    // Predicated region
    $region82: #{tpu_custom_call.1} parent=1 // pred_check
      _
    $region83: #{tpu_custom_call.1} parent=1 // pred_check_branch
      %69 = sbr.rel (0) target = $region85
    $region84: #{tpu_custom_call.1} parent=1 // pred_region
      _
    $region85: #{tpu_custom_call.1} parent=1 // pred_fallthru
      _
    // Predicated region
    $region86: #{tpu_custom_call.1} parent=1 // pred_check
      _
    $region87: #{tpu_custom_call.1} parent=1 // pred_check_branch
      %71 = sbr.rel (0) target = $region89
    $region88: #{tpu_custom_call.1} parent=1 // pred_region
      _
    $region89: #{tpu_custom_call.1} parent=1 // pred_fallthru
      _
    %v73 = vld [vmem:[%s1] sm:$0xff]
    %v74 = vld [vmem:[%s1 + $0x8] sm:$0xff]
    %v75 = vld [vmem:[%s1 + $0x10] sm:$0xff]
    %v76 = vld [vmem:[%s1 + $0x18] sm:$0xff]
    %v77 = vld [vmem:[%s0] sm:$0xff]
    %v78 = vld [vmem:[%s0 + $0x8] sm:$0xff]
    %v79 = vld [vmem:[%s0 + $0x10] sm:$0xff]
    %v80 = vld [vmem:[%s0 + $0x18] sm:$0xff]
    %v81 = vpack.c.bf16 %v78, %v77
    %v82 = vpack.c.bf16 %v80, %v79
    %v83 = vld [vmem:[%s2] sm:$0xf]
    %v84 = vld [vmem:[%s3] sm:$0x1]
    %v86 = vlaneseq
    %v87 = vshrl.u32 %v86, 7
    %v88 = vsub.s32 0, %v87
    %v89 = vrot.slane %v84, %v88
    %vm91 = vcmask 64512
    %v93 = vsel %vm91, %v81, 0
    %v96 = vsel %vm91, %v82, 0
    %vm98 = vcmask 1043456
    %v100 = vsel %vm98, %v83, 0
    %102 = vmatprep.subr.bf16.mxu0 0
    %103 = vmatpush1.bf16.msra.mxu0 %v100
    %104 = vmatprep.subr.bf16.mxu0 0
    %105 = vmatpush1.bf16.msra.mxu0 0
    %106 = vmatprep.subr.bf16.mxu0 0
    %107 = vmatpush1.bf16.msra.mxu0 0
    %108 = vmatprep.subr.bf16.mxu0 0
    %109 = vmatpush1.bf16.msra.mxu0 0
    %110 = vmatprep.subr.bf16.mxu0 0
    %111 = vmatpush1.bf16.msra.mxu0 0
    %112 = vmatprep.subr.bf16.mxu0 0
    %113 = vmatpush1.bf16.msra.mxu0 0
    %114 = vmatprep.subr.bf16.mxu0 0
    %115 = vmatpush1.bf16.msra.mxu0 0
    %116 = vmatprep.subr.bf16.mxu0 0
    %117 = vmatpush1.bf16.msra.mxu0 0
    %118 = vmatprep.subr.bf16.mxu0 0
    %119 = vmatpush1.bf16.msra.mxu0 0
    %120 = vmatprep.subr.bf16.mxu0 0
    %121 = vmatpush1.bf16.msra.mxu0 0
    %122 = vmatprep.subr.bf16.mxu0 0
    %123 = vmatpush1.bf16.msra.mxu0 0
    %124 = vmatprep.subr.bf16.mxu0 0
    %125 = vmatpush1.bf16.msra.mxu0 0
    %126 = vmatprep.subr.bf16.mxu0 0
    %127 = vmatpush1.bf16.msra.mxu0 0
    %128 = vmatprep.subr.bf16.mxu0 0
    %129 = vmatpush1.bf16.msra.mxu0 0
    %130 = vmatprep.subr.bf16.mxu0 0
    %131 = vmatpush1.bf16.msra.mxu0 0
    %132 = vmatprep.subr.bf16.mxu0 0
    %133 = vmatpush1.bf16.msra.mxu0 0
    %134 = vmatprep.mubr.bf16.mxu0 0
    %135 = vmatmul.mubr.bf16.gmra.mrb[0].mxu0 %v93
    %v136 = vpop.f32.mrb[0].mxu0
    %v137 = vadd.f32 %v89, %v136
    %v138 = vpop.f32.mrb[0].mxu0
    %v139 = vpop.f32.mrb[0].mxu0
    %v140 = vadd.f32 %v89, %v139
    %v141 = vpop.f32.mrb[0].mxu0
    %142 = vmatprep.mubr.bf16.mxu0 0
    %143 = vmatmul.mubr.bf16.gmra.mrb[0].mxu0 %v96
    %v144 = vpop.f32.mrb[0].mxu0
    %v145 = vadd.f32 %v89, %v144
    %v146 = vpop.f32.mrb[0].mxu0
    %v147 = vpop.f32.mrb[0].mxu0
    %v148 = vadd.f32 %v89, %v147
    %v149 = vpop.f32.mrb[0].mxu0
    %150 = vdwg.mxu0
    %v151 = vmax.f32 %v137, 0.0
    %v152 = vmax.f32 %v140, 0.0
    %v153 = vmax.f32 %v145, 0.0
    %v154 = vmax.f32 %v148, 0.0
    %v155 = vpack.c.bf16 %v152, %v151
    %v156 = vpack.c.bf16 %v154, %v153
    %v157 = vld [vmem:[%s4] sm:$0xf]
    %v158 = vld [vmem:[%s4 + $0x4] sm:$0xf]
    %v159 = vld [vmem:[%s4 + $0x8] sm:$0xf]
    %v160 = vld [vmem:[%s4 + $0xc] sm:$0xf]
    %v161 = vld [vmem:[%s4 + $0x10] sm:$0xf]
    %v162 = vld [vmem:[%s4 + $0x14] sm:$0xf]
    %v163 = vld [vmem:[%s4 + $0x18] sm:$0xf]
    %v164 = vld [vmem:[%s4 + $0x1c] sm:$0xf]
    %v165 = vld [vmem:[%s5] sm:$0x1]
    %v167 = vlaneseq
    %v168 = vshrl.u32 %v167, 7
    %v169 = vsub.s32 0, %v168
    %v170 = vrot.slane %v165, %v169
    %v180 = vunpack.c.l.b16 %v157
    %v181 = vunpack.c.l.b16 %v158
    %v182 = vunpack.c.l.b16 %v159
    %v183 = vunpack.c.l.b16 %v160
    %v184 = vunpack.c.l.b16 %v161
    %v185 = vunpack.c.l.b16 %v162
    %v186 = vunpack.c.l.b16 %v163
    %v187 = vunpack.c.l.b16 %v164
    %v188 = vpack.c.b16 %v181, %v180
    %v189 = vpack.c.b16 %v183, %v182
    %v190 = vpack.c.b16 %v185, %v184
    %v191 = vpack.c.b16 %v187, %v186
    %vm196 = vcmask 523264
    %v198 = vsel %vm196, %v155, 0
    %v201 = vsel %vm196, %v156, 0
    %203 = vmatprep.subr.bf16.mxu0 0
    %204 = vmatpush1.bf16.msra.mxu0 %v188
    %205 = vmatprep.subr.bf16.mxu0 0
    %206 = vmatpush1.bf16.msra.mxu0 %v189
    %207 = vmatprep.subr.bf16.mxu0 0
    %208 = vmatpush1.bf16.msra.mxu0 %v190
    %209 = vmatprep.subr.bf16.mxu0 0
    %210 = vmatpush1.bf16.msra.mxu0 %v191
    %211 = vmatprep.subr.bf16.mxu0 0
    %212 = vmatpush1.bf16.msra.mxu0 0
    %213 = vmatprep.subr.bf16.mxu0 0
    %214 = vmatpush1.bf16.msra.mxu0 0
    %215 = vmatprep.subr.bf16.mxu0 0
    %216 = vmatpush1.bf16.msra.mxu0 0
    %217 = vmatprep.subr.bf16.mxu0 0
    %218 = vmatpush1.bf16.msra.mxu0 0
    %219 = vmatprep.subr.bf16.mxu0 0
    %220 = vmatpush1.bf16.msra.mxu0 0
    %221 = vmatprep.subr.bf16.mxu0 0
    %222 = vmatpush1.bf16.msra.mxu0 0
    %223 = vmatprep.subr.bf16.mxu0 0
    %224 = vmatpush1.bf16.msra.mxu0 0
    %225 = vmatprep.subr.bf16.mxu0 0
    %226 = vmatpush1.bf16.msra.mxu0 0
    %227 = vmatprep.subr.bf16.mxu0 0
    %228 = vmatpush1.bf16.msra.mxu0 0
    %229 = vmatprep.subr.bf16.mxu0 0
    %230 = vmatpush1.bf16.msra.mxu0 0
    %231 = vmatprep.subr.bf16.mxu0 0
    %232 = vmatpush1.bf16.msra.mxu0 0
    %233 = vmatprep.subr.bf16.mxu0 0
    %234 = vmatpush1.bf16.msra.mxu0 0
    %235 = vmatprep.mubr.bf16.mxu0 0
    %236 = vmatmul.mubr.bf16.gmra.mrb[0].mxu0 %v198
    %v237 = vpop.f32.mrb[0].mxu0
    %v238 = vadd.f32 %v170, %v237
    %v239 = vpop.f32.mrb[0].mxu0
    %v240 = vpop.f32.mrb[0].mxu0
    %v241 = vadd.f32 %v170, %v240
    %v242 = vpop.f32.mrb[0].mxu0
    %243 = vmatprep.mubr.bf16.mxu0 0
    %244 = vmatmul.mubr.bf16.gmra.mrb[0].mxu0 %v201
    %v245 = vpop.f32.mrb[0].mxu0
    %v246 = vadd.f32 %v170, %v245
    %v247 = vpop.f32.mrb[0].mxu0
    %v248 = vpop.f32.mrb[0].mxu0
    %v249 = vadd.f32 %v170, %v248
    %v250 = vpop.f32.mrb[0].mxu0
    %251 = vdwg.mxu0
    %v252 = vmax.f32 %v238, 0.0
    %v253 = vmax.f32 %v241, 0.0
    %v254 = vmax.f32 %v246, 0.0
    %v255 = vmax.f32 %v249, 0.0
    %v256 = vpack.c.bf16 %v253, %v252
    %v257 = vpack.c.bf16 %v255, %v254
    %v258 = vld [vmem:[%s6] sm:$0xf]
    %v259 = vld [vmem:[%s6 + $0x4] sm:$0xf]
    %v260 = vld [vmem:[%s6 + $0x8] sm:$0xf]
    %v261 = vld [vmem:[%s6 + $0xc] sm:$0xf]
    %v262 = vld [vmem:[%s6 + $0x10] sm:$0xf]
    %v263 = vld [vmem:[%s6 + $0x14] sm:$0xf]
    %v264 = vld [vmem:[%s6 + $0x18] sm:$0xf]
    %v265 = vld [vmem:[%s6 + $0x1c] sm:$0xf]
    %v266 = vld [vmem:[%s6 + $0x20] sm:$0xf]
    %v267 = vld [vmem:[%s6 + $0x24] sm:$0xf]
    %v268 = vld [vmem:[%s6 + $0x28] sm:$0xf]
    %v269 = vld [vmem:[%s6 + $0x2c] sm:$0xf]
    %v270 = vld [vmem:[%s6 + $0x30] sm:$0xf]
    %v271 = vld [vmem:[%s6 + $0x34] sm:$0xf]
    %v272 = vld [vmem:[%s6 + $0x38] sm:$0xf]
    %v273 = vld [vmem:[%s6 + $0x3c] sm:$0xf]
    %v274 = vld [vmem:[%s7] sm:$0x1]
    %v276 = vlaneseq
    %v277 = vshrl.u32 %v276, 7
    %v278 = vsub.s32 0, %v277
    %v279 = vrot.slane %v274, %v278
    %v297 = vunpack.c.l.b16 %v258
    %v298 = vunpack.c.l.b16 %v259
    %v299 = vunpack.c.l.b16 %v260
    %v300 = vunpack.c.l.b16 %v261
    %v301 = vunpack.c.l.b16 %v262
    %v302 = vunpack.c.l.b16 %v263
    %v303 = vunpack.c.l.b16 %v264
    %v304 = vunpack.c.l.b16 %v265
    %v305 = vunpack.c.l.b16 %v266
    %v306 = vunpack.c.l.b16 %v267
    %v307 = vunpack.c.l.b16 %v268
    %v308 = vunpack.c.l.b16 %v269
    %v309 = vunpack.c.l.b16 %v270
    %v310 = vunpack.c.l.b16 %v271
    %v311 = vunpack.c.l.b16 %v272
    %v312 = vunpack.c.l.b16 %v273
    %v313 = vpack.c.b16 %v298, %v297
    %v314 = vpack.c.b16 %v300, %v299
    %v315 = vpack.c.b16 %v302, %v301
    %v316 = vpack.c.b16 %v304, %v303
    %v317 = vpack.c.b16 %v306, %v305
    %v318 = vpack.c.b16 %v308, %v307
    %v319 = vpack.c.b16 %v310, %v309
    %v320 = vpack.c.b16 %v312, %v311
    %329 = vmatprep.subr.bf16.mxu0 0
    %330 = vmatpush1.bf16.msra.mxu0 %v313
    %331 = vmatprep.subr.bf16.mxu0 0
    %332 = vmatpush1.bf16.msra.mxu0 %v314
    %333 = vmatprep.subr.bf16.mxu0 0
    %334 = vmatpush1.bf16.msra.mxu0 %v315
    %335 = vmatprep.subr.bf16.mxu0 0
    %336 = vmatpush1.bf16.msra.mxu0 %v316
    %337 = vmatprep.subr.bf16.mxu0 0
    %338 = vmatpush1.bf16.msra.mxu0 %v317
    %339 = vmatprep.subr.bf16.mxu0 0
    %340 = vmatpush1.bf16.msra.mxu0 %v318
    %341 = vmatprep.subr.bf16.mxu0 0
    %342 = vmatpush1.bf16.msra.mxu0 %v319
    %343 = vmatprep.subr.bf16.mxu0 0
    %344 = vmatpush1.bf16.msra.mxu0 %v320
    %345 = vmatprep.subr.bf16.mxu0 0
    %346 = vmatpush1.bf16.msra.mxu0 0
    %347 = vmatprep.subr.bf16.mxu0 0
    %348 = vmatpush1.bf16.msra.mxu0 0
    %349 = vmatprep.subr.bf16.mxu0 0
    %350 = vmatpush1.bf16.msra.mxu0 0
    %351 = vmatprep.subr.bf16.mxu0 0
    %352 = vmatpush1.bf16.msra.mxu0 0
    %353 = vmatprep.subr.bf16.mxu0 0
    %354 = vmatpush1.bf16.msra.mxu0 0
    %355 = vmatprep.subr.bf16.mxu0 0
    %356 = vmatpush1.bf16.msra.mxu0 0
    %357 = vmatprep.subr.bf16.mxu0 0
    %358 = vmatpush1.bf16.msra.mxu0 0
    %359 = vmatprep.subr.bf16.mxu0 0
    %360 = vmatpush1.bf16.msra.mxu0 0
    %361 = vmatprep.mubr.bf16.mxu0 0
    %362 = vmatmul.mubr.bf16.gmra.mrb[0].mxu0 %v256
    %v363 = vpop.f32.mrb[0].mxu0
    %v364 = vadd.f32 %v279, %v363
    %v365 = vpop.f32.mrb[0].mxu0
    %v366 = vpop.f32.mrb[0].mxu0
    %v367 = vadd.f32 %v279, %v366
    %v368 = vpop.f32.mrb[0].mxu0
    %369 = vmatprep.mubr.bf16.mxu0 0
    %370 = vmatmul.mubr.bf16.gmra.mrb[0].mxu0 %v257
    %v371 = vpop.f32.mrb[0].mxu0
    %v372 = vadd.f32 %v279, %v371
    %v373 = vpop.f32.mrb[0].mxu0
    %v374 = vpop.f32.mrb[0].mxu0
    %v375 = vadd.f32 %v279, %v374
    %v376 = vpop.f32.mrb[0].mxu0
    %377 = vdwg.mxu0
    %379 = vset.pattern.permute.xlu0 0
    %380 = vperm.xlu0 %379, %v73
    %v381 = vpop.permute.xlu0 %380
    %384 = vset.pattern.permute.xlu0 0
    %385 = vperm.xlu0 %384, %v74
    %v386 = vpop.permute.xlu0 %385
    %389 = vset.pattern.permute.xlu0 0
    %390 = vperm.xlu0 %389, %v75
    %v391 = vpop.permute.xlu0 %390
    %394 = vset.pattern.permute.xlu0 0
    %395 = vperm.xlu0 %394, %v76
    %v396 = vpop.permute.xlu0 %395
    %v398 = vmul.f32 %v364, %v381
    %v399 = vmul.f32 %v367, %v386
    %v400 = vmul.f32 %v372, %v391
    %v401 = vmul.f32 %v375, %v396
    %v402 = vpack.c.bf16 %v399, %v398
    %v403 = vpack.c.bf16 %v401, %v400
    %v404 = vld [vmem:[%s8] sm:$0xf]
    %v405 = vld [vmem:[%s8 + $0x4] sm:$0xf]
    %v406 = vld [vmem:[%s8 + $0x8] sm:$0xf]
    %v407 = vld [vmem:[%s8 + $0xc] sm:$0xf]
    %v408 = vld [vmem:[%s9] sm:$0x1]
    %v410 = vlaneseq
    %v411 = vshrl.u32 %v410, 7
    %v412 = vsub.s32 0, %v411
    %v413 = vrot.slane %v408, %v412
    %v419 = vunpack.c.l.b16 %v404
    %v420 = vunpack.c.l.b16 %v405
    %v421 = vunpack.c.l.b16 %v406
    %v422 = vunpack.c.l.b16 %v407
    %v423 = vpack.c.b16 %v420, %v419
    %v424 = vpack.c.b16 %v422, %v421
    %vm427 = vcmask 261120
    %v429 = vsel %vm427, %v402, 0
    %v432 = vsel %vm427, %v403, 0
    %434 = vmatprep.subr.bf16.mxu0 0
    %435 = vmatpush1.bf16.msra.mxu0 %v423
    %436 = vmatprep.subr.bf16.mxu0 0
    %437 = vmatpush1.bf16.msra.mxu0 %v424
    %438 = vmatprep.subr.bf16.mxu0 0
    %439 = vmatpush1.bf16.msra.mxu0 0
    %440 = vmatprep.subr.bf16.mxu0 0
    %441 = vmatpush1.bf16.msra.mxu0 0
    %442 = vmatprep.subr.bf16.mxu0 0
    %443 = vmatpush1.bf16.msra.mxu0 0
    %444 = vmatprep.subr.bf16.mxu0 0
    %445 = vmatpush1.bf16.msra.mxu0 0
    %446 = vmatprep.subr.bf16.mxu0 0
    %447 = vmatpush1.bf16.msra.mxu0 0
    %448 = vmatprep.subr.bf16.mxu0 0
    %449 = vmatpush1.bf16.msra.mxu0 0
    %450 = vmatprep.subr.bf16.mxu0 0
    %451 = vmatpush1.bf16.msra.mxu0 0
    %452 = vmatprep.subr.bf16.mxu0 0
    %453 = vmatpush1.bf16.msra.mxu0 0
    %454 = vmatprep.subr.bf16.mxu0 0
    %455 = vmatpush1.bf16.msra.mxu0 0
    %456 = vmatprep.subr.bf16.mxu0 0
    %457 = vmatpush1.bf16.msra.mxu0 0
    %458 = vmatprep.subr.bf16.mxu0 0
    %459 = vmatpush1.bf16.msra.mxu0 0
    %460 = vmatprep.subr.bf16.mxu0 0
    %461 = vmatpush1.bf16.msra.mxu0 0
    %462 = vmatprep.subr.bf16.mxu0 0
    %463 = vmatpush1.bf16.msra.mxu0 0
    %464 = vmatprep.subr.bf16.mxu0 0
    %465 = vmatpush1.bf16.msra.mxu0 0
    %466 = vmatprep.mubr.bf16.mxu0 0
    %467 = vmatmul.mubr.bf16.gmra.mrb[0].mxu0 %v429
    %v468 = vpop.f32.mrb[0].mxu0
    %v469 = vadd.f32 %v413, %v468
    %v470 = vpop.f32.mrb[0].mxu0
    %v471 = vpop.f32.mrb[0].mxu0
    %v472 = vadd.f32 %v413, %v471
    %v473 = vpop.f32.mrb[0].mxu0
    %474 = vmatprep.mubr.bf16.mxu0 0
    %475 = vmatmul.mubr.bf16.gmra.mrb[0].mxu0 %v432
    %v476 = vpop.f32.mrb[0].mxu0
    %v477 = vadd.f32 %v413, %v476
    %v478 = vpop.f32.mrb[0].mxu0
    %v479 = vpop.f32.mrb[0].mxu0
    %v480 = vadd.f32 %v413, %v479
    %v481 = vpop.f32.mrb[0].mxu0
    %482 = vdwg.mxu0
    %v483 = vpack.c.bf16 %v472, %v469
    %v484 = vpack.c.bf16 %v480, %v477
    %486 = vrot.lane.b32.xlu0 %v483, 96
    %v487 = vpop.permute.xlu0 %486
    %v489 = vsel %vm91, %v483, 0
    %v492 = vsel %vm91, %v487, 0
    %494 = vmatprep.subr.bf16.mxu0 0
    %495 = vmatpush1.bf16.xpose.msra.mxu0 %v492
    %496 = vmatprep.subr.bf16.mxu0 0
    %497 = vmatpush1.bf16.xpose.msra.mxu0 0
    %498 = vmatprep.subr.bf16.mxu0 0
    %499 = vmatpush1.bf16.xpose.msra.mxu0 0
    %500 = vmatprep.subr.bf16.mxu0 0
    %501 = vmatpush1.bf16.xpose.msra.mxu0 0
    %502 = vmatprep.subr.bf16.mxu0 0
    %503 = vmatpush1.bf16.xpose.msra.mxu0 0
    %504 = vmatprep.subr.bf16.mxu0 0
    %505 = vmatpush1.bf16.xpose.msra.mxu0 0
    %506 = vmatprep.subr.bf16.mxu0 0
    %507 = vmatpush1.bf16.xpose.msra.mxu0 0
    %508 = vmatprep.subr.bf16.mxu0 0
    %509 = vmatpush1.bf16.xpose.msra.mxu0 0
    %510 = vmatprep.subr.bf16.mxu0 0
    %511 = vmatpush1.bf16.xpose.msra.mxu0 0
    %512 = vmatprep.subr.bf16.mxu0 0
    %513 = vmatpush1.bf16.xpose.msra.mxu0 0
    %514 = vmatprep.subr.bf16.mxu0 0
    %515 = vmatpush1.bf16.xpose.msra.mxu0 0
    %516 = vmatprep.subr.bf16.mxu0 0
    %517 = vmatpush1.bf16.xpose.msra.mxu0 0
    %518 = vmatprep.subr.bf16.mxu0 0
    %519 = vmatpush1.bf16.xpose.msra.mxu0 0
    %520 = vmatprep.subr.bf16.mxu0 0
    %521 = vmatpush1.bf16.xpose.msra.mxu0 0
    %522 = vmatprep.subr.bf16.mxu0 0
    %523 = vmatpush1.bf16.xpose.msra.mxu0 0
    %524 = vmatprep.subr.bf16.mxu0 0
    %525 = vmatpush1.bf16.xpose.msra.mxu0 0
    %526 = vmatprep.mubr.bf16.mxu0 0
    %527 = vmatmul.mubr.bf16.gmra.mrb[0].mxu0 %v489
    %v528 = vpop.f32.mrb[0].mxu0
    %v529 = vadd.f32 0.0, %v528
    %v530 = vpop.f32.mrb[0].mxu0
    %v531 = vpop.f32.mrb[0].mxu0
    %v532 = vadd.f32 0.0, %v531
    %v533 = vpop.f32.mrb[0].mxu0
    %534 = vdwg.mxu0
    %536 = vrot.lane.b32.xlu0 %v484, 96
    %v537 = vpop.permute.xlu0 %536
    %v539 = vsel %vm91, %v484, 0
    %v542 = vsel %vm91, %v537, 0
    %544 = vmatprep.subr.bf16.mxu0 0
    %545 = vmatpush1.bf16.xpose.msra.mxu0 %v542
    %546 = vmatprep.subr.bf16.mxu0 0
    %547 = vmatpush1.bf16.xpose.msra.mxu0 0
    %548 = vmatprep.subr.bf16.mxu0 0
    %549 = vmatpush1.bf16.xpose.msra.mxu0 0
    %550 = vmatprep.subr.bf16.mxu0 0
    %551 = vmatpush1.bf16.xpose.msra.mxu0 0
    %552 = vmatprep.subr.bf16.mxu0 0
    %553 = vmatpush1.bf16.xpose.msra.mxu0 0
    %554 = vmatprep.subr.bf16.mxu0 0
    %555 = vmatpush1.bf16.xpose.msra.mxu0 0
    %556 = vmatprep.subr.bf16.mxu0 0
    %557 = vmatpush1.bf16.xpose.msra.mxu0 0
    %558 = vmatprep.subr.bf16.mxu0 0
    %559 = vmatpush1.bf16.xpose.msra.mxu0 0
    %560 = vmatprep.subr.bf16.mxu0 0
    %561 = vmatpush1.bf16.xpose.msra.mxu0 0
    %562 = vmatprep.subr.bf16.mxu0 0
    %563 = vmatpush1.bf16.xpose.msra.mxu0 0
    %564 = vmatprep.subr.bf16.mxu0 0
    %565 = vmatpush1.bf16.xpose.msra.mxu0 0
    %566 = vmatprep.subr.bf16.mxu0 0
    %567 = vmatpush1.bf16.xpose.msra.mxu0 0
    %568 = vmatprep.subr.bf16.mxu0 0
    %569 = vmatpush1.bf16.xpose.msra.mxu0 0
    %570 = vmatprep.subr.bf16.mxu0 0
    %571 = vmatpush1.bf16.xpose.msra.mxu0 0
    %572 = vmatprep.subr.bf16.mxu0 0
    %573 = vmatpush1.bf16.xpose.msra.mxu0 0
    %574 = vmatprep.subr.bf16.mxu0 0
    %575 = vmatpush1.bf16.xpose.msra.mxu0 0
    %576 = vmatprep.mubr.bf16.mxu0 0
    %577 = vmatmul.mubr.bf16.gmra.mrb[0].mxu0 %v539
    %v578 = vpop.f32.mrb[0].mxu0
    %v579 = vadd.f32 0.0, %v578
    %v580 = vpop.f32.mrb[0].mxu0
    %v581 = vpop.f32.mrb[0].mxu0
    %v582 = vadd.f32 0.0, %v581
    %v583 = vpop.f32.mrb[0].mxu0
    %584 = vdwg.mxu0
    %vm585 = vcmask 130048
    %v586 = vsel %vm585, %v529, -inf
    %587 = vmax.xlane.f32.xlu0 %v586
    %v588 = vpop.xlane.xlu0 %587
    %v589 = vsel %vm585, %v532, -inf
    %590 = vmax.xlane.f32.xlu0 %v589
    %v591 = vpop.xlane.xlu0 %590
    %v592 = vsel %vm585, %v579, -inf
    %593 = vmax.xlane.f32.xlu0 %v592
    %v594 = vpop.xlane.xlu0 %593
    %v595 = vsel %vm585, %v582, -inf
    %596 = vmax.xlane.f32.xlu0 %v595
    %v597 = vpop.xlane.xlu0 %596
    %v598 = vsub.f32 %v529, %v588
    %v599 = vsub.f32 %v532, %v591
    %v600 = vsub.f32 %v579, %v594
    %v601 = vsub.f32 %v582, %v597
    %v602 = vmul.f32 %v598, 1.442695
    %v603 = vpow.pop %v602
    %v604 = vmul.f32 %v599, 1.442695
    %v605 = vpow.pop %v604
    %v606 = vmul.f32 %v600, 1.442695
    %v607 = vpow.pop %v606
    %v608 = vmul.f32 %v601, 1.442695
    %v609 = vpow.pop %v608
    %v610 = vsel %vm585, %v603, 0.0
    %611 = vadd.xlane.f32.xlu0 %v610
    %v612 = vpop.xlane.xlu0 %611
    %v613 = vsel %vm585, %v605, 0.0
    %614 = vadd.xlane.f32.xlu0 %v613
    %v615 = vpop.xlane.xlu0 %614
    %v616 = vsel %vm585, %v607, 0.0
    %617 = vadd.xlane.f32.xlu0 %v616
    %v618 = vpop.xlane.xlu0 %617
    %v619 = vsel %vm585, %v609, 0.0
    %620 = vadd.xlane.f32.xlu0 %v619
    %v621 = vpop.xlane.xlu0 %620
    %v622 = vrcp.pop %v612
    %v623 = vrcp.pop %v615
    %v624 = vrcp.pop %v618
    %v625 = vrcp.pop %v621
    %v626 = vmul.f32 %v603, %v622
    %v627 = vmul.f32 %v605, %v623
    %v628 = vmul.f32 %v607, %v624
    %v629 = vmul.f32 %v609, %v625
    %v630 = vpack.c.bf16 %v627, %v626
    %v631 = vpack.c.bf16 %v629, %v628
    %632 = vrot.lane.b32.xlu0 %v483, 64
    %v633 = vpop.permute.xlu0 %632
    %v636 = vsel %vm585, %v630, 0
    %638 = vmatprep.subr.bf16.mxu0 0
    %639 = vmatpush1.bf16.msra.mxu0 %v633
    %640 = vmatprep.subr.bf16.mxu0 0
    %641 = vmatpush1.bf16.msra.mxu0 0
    %642 = vmatprep.subr.bf16.mxu0 0
    %643 = vmatpush1.bf16.msra.mxu0 0
    %644 = vmatprep.subr.bf16.mxu0 0
    %645 = vmatpush1.bf16.msra.mxu0 0
    %646 = vmatprep.subr.bf16.mxu0 0
    %647 = vmatpush1.bf16.msra.mxu0 0
    %648 = vmatprep.subr.bf16.mxu0 0
    %649 = vmatpush1.bf16.msra.mxu0 0
    %650 = vmatprep.subr.bf16.mxu0 0
    %651 = vmatpush1.bf16.msra.mxu0 0
    %652 = vmatprep.subr.bf16.mxu0 0
    %653 = vmatpush1.bf16.msra.mxu0 0
    %654 = vmatprep.subr.bf16.mxu0 0
    %655 = vmatpush1.bf16.msra.mxu0 0
    %656 = vmatprep.subr.bf16.mxu0 0
    %657 = vmatpush1.bf16.msra.mxu0 0
    %658 = vmatprep.subr.bf16.mxu0 0
    %659 = vmatpush1.bf16.msra.mxu0 0
    %660 = vmatprep.subr.bf16.mxu0 0
    %661 = vmatpush1.bf16.msra.mxu0 0
    %662 = vmatprep.subr.bf16.mxu0 0
    %663 = vmatpush1.bf16.msra.mxu0 0
    %664 = vmatprep.subr.bf16.mxu0 0
    %665 = vmatpush1.bf16.msra.mxu0 0
    %666 = vmatprep.subr.bf16.mxu0 0
    %667 = vmatpush1.bf16.msra.mxu0 0
    %668 = vmatprep.subr.bf16.mxu0 0
    %669 = vmatpush1.bf16.msra.mxu0 0
    %670 = vmatprep.mubr.bf16.mxu0 0
    %671 = vmatmul.mubr.bf16.gmra.mrb[0].mxu0 %v636
    %v672 = vpop.f32.mrb[0].mxu0
    %v673 = vadd.f32 0.0, %v672
    %v674 = vpop.f32.mrb[0].mxu0
    %v675 = vpop.f32.mrb[0].mxu0
    %v676 = vadd.f32 0.0, %v675
    %v677 = vpop.f32.mrb[0].mxu0
    %678 = vdwg.mxu0
    %679 = vrot.lane.b32.xlu0 %v484, 64
    %v680 = vpop.permute.xlu0 %679
    %v683 = vsel %vm585, %v631, 0
    %685 = vmatprep.subr.bf16.mxu0 0
    %686 = vmatpush1.bf16.msra.mxu0 %v680
    %687 = vmatprep.subr.bf16.mxu0 0
    %688 = vmatpush1.bf16.msra.mxu0 0
    %689 = vmatprep.subr.bf16.mxu0 0
    %690 = vmatpush1.bf16.msra.mxu0 0
    %691 = vmatprep.subr.bf16.mxu0 0
    %692 = vmatpush1.bf16.msra.mxu0 0
    %693 = vmatprep.subr.bf16.mxu0 0
    %694 = vmatpush1.bf16.msra.mxu0 0
    %695 = vmatprep.subr.bf16.mxu0 0
    %696 = vmatpush1.bf16.msra.mxu0 0
    %697 = vmatprep.subr.bf16.mxu0 0
    %698 = vmatpush1.bf16.msra.mxu0 0
    %699 = vmatprep.subr.bf16.mxu0 0
    %700 = vmatpush1.bf16.msra.mxu0 0
    %701 = vmatprep.subr.bf16.mxu0 0
    %702 = vmatpush1.bf16.msra.mxu0 0
    %703 = vmatprep.subr.bf16.mxu0 0
    %704 = vmatpush1.bf16.msra.mxu0 0
    %705 = vmatprep.subr.bf16.mxu0 0
    %706 = vmatpush1.bf16.msra.mxu0 0
    %707 = vmatprep.subr.bf16.mxu0 0
    %708 = vmatpush1.bf16.msra.mxu0 0
    %709 = vmatprep.subr.bf16.mxu0 0
    %710 = vmatpush1.bf16.msra.mxu0 0
    %711 = vmatprep.subr.bf16.mxu0 0
    %712 = vmatpush1.bf16.msra.mxu0 0
    %713 = vmatprep.subr.bf16.mxu0 0
    %714 = vmatpush1.bf16.msra.mxu0 0
    %715 = vmatprep.subr.bf16.mxu0 0
    %716 = vmatpush1.bf16.msra.mxu0 0
    %717 = vmatprep.mubr.bf16.mxu0 0
    %718 = vmatmul.mubr.bf16.gmra.mrb[0].mxu0 %v683
    %v719 = vpop.f32.mrb[0].mxu0
    %v720 = vadd.f32 0.0, %v719
    %v721 = vpop.f32.mrb[0].mxu0
    %v722 = vpop.f32.mrb[0].mxu0
    %v723 = vadd.f32 0.0, %v722
    %v724 = vpop.f32.mrb[0].mxu0
    %725 = vdwg.mxu0
    %726 = vrot.lane.b32.xlu0 %v483, 120
    %v727 = vpop.permute.xlu0 %726
    %728 = vrot.lane.b32.xlu0 %v483, 88
    %v729 = vpop.permute.xlu0 %728
    %v731 = vsel %vm91, %v727, 0
    %v734 = vsel %vm91, %v729, 0
    %736 = vmatprep.subr.bf16.mxu0 0
    %737 = vmatpush1.bf16.xpose.msra.mxu0 %v734
    %738 = vmatprep.subr.bf16.mxu0 0
    %739 = vmatpush1.bf16.xpose.msra.mxu0 0
    %740 = vmatprep.subr.bf16.mxu0 0
    %741 = vmatpush1.bf16.xpose.msra.mxu0 0
    %742 = vmatprep.subr.bf16.mxu0 0
    %743 = vmatpush1.bf16.xpose.msra.mxu0 0
    %744 = vmatprep.subr.bf16.mxu0 0
    %745 = vmatpush1.bf16.xpose.msra.mxu0 0
    %746 = vmatprep.subr.bf16.mxu0 0
    %747 = vmatpush1.bf16.xpose.msra.mxu0 0
    %748 = vmatprep.subr.bf16.mxu0 0
    %749 = vmatpush1.bf16.xpose.msra.mxu0 0
    %750 = vmatprep.subr.bf16.mxu0 0
    %751 = vmatpush1.bf16.xpose.msra.mxu0 0
    %752 = vmatprep.subr.bf16.mxu0 0
    %753 = vmatpush1.bf16.xpose.msra.mxu0 0
    %754 = vmatprep.subr.bf16.mxu0 0
    %755 = vmatpush1.bf16.xpose.msra.mxu0 0
    %756 = vmatprep.subr.bf16.mxu0 0
    %757 = vmatpush1.bf16.xpose.msra.mxu0 0
    %758 = vmatprep.subr.bf16.mxu0 0
    %759 = vmatpush1.bf16.xpose.msra.mxu0 0
    %760 = vmatprep.subr.bf16.mxu0 0
    %761 = vmatpush1.bf16.xpose.msra.mxu0 0
    %762 = vmatprep.subr.bf16.mxu0 0
    %763 = vmatpush1.bf16.xpose.msra.mxu0 0
    %764 = vmatprep.subr.bf16.mxu0 0
    %765 = vmatpush1.bf16.xpose.msra.mxu0 0
    %766 = vmatprep.subr.bf16.mxu0 0
    %767 = vmatpush1.bf16.xpose.msra.mxu0 0
    %768 = vmatprep.mubr.bf16.mxu0 0
    %769 = vmatmul.mubr.bf16.gmra.mrb[0].mxu0 %v731
    %v770 = vpop.f32.mrb[0].mxu0
    %v771 = vadd.f32 0.0, %v770
    %v772 = vpop.f32.mrb[0].mxu0
    %v773 = vpop.f32.mrb[0].mxu0
    %v774 = vadd.f32 0.0, %v773
    %v775 = vpop.f32.mrb[0].mxu0
    %776 = vdwg.mxu0
    %777 = vrot.lane.b32.xlu0 %v484, 120
    %v778 = vpop.permute.xlu0 %777
    %779 = vrot.lane.b32.xlu0 %v484, 88
    %v780 = vpop.permute.xlu0 %779
    %v782 = vsel %vm91, %v778, 0
    %v785 = vsel %vm91, %v780, 0
    %787 = vmatprep.subr.bf16.mxu0 0
    %788 = vmatpush1.bf16.xpose.msra.mxu0 %v785
    %789 = vmatprep.subr.bf16.mxu0 0
    %790 = vmatpush1.bf16.xpose.msra.mxu0 0
    %791 = vmatprep.subr.bf16.mxu0 0
    %792 = vmatpush1.bf16.xpose.msra.mxu0 0
    %793 = vmatprep.subr.bf16.mxu0 0
    %794 = vmatpush1.bf16.xpose.msra.mxu0 0
    %795 = vmatprep.subr.bf16.mxu0 0
    %796 = vmatpush1.bf16.xpose.msra.mxu0 0
    %797 = vmatprep.subr.bf16.mxu0 0
    %798 = vmatpush1.bf16.xpose.msra.mxu0 0
    %799 = vmatprep.subr.bf16.mxu0 0
    %800 = vmatpush1.bf16.xpose.msra.mxu0 0
    %801 = vmatprep.subr.bf16.mxu0 0
    %802 = vmatpush1.bf16.xpose.msra.mxu0 0
    %803 = vmatprep.subr.bf16.mxu0 0
    %804 = vmatpush1.bf16.xpose.msra.mxu0 0
    %805 = vmatprep.subr.bf16.mxu0 0
    %806 = vmatpush1.bf16.xpose.msra.mxu0 0
    %807 = vmatprep.subr.bf16.mxu0 0
    %808 = vmatpush1.bf16.xpose.msra.mxu0 0
    %809 = vmatprep.subr.bf16.mxu0 0
    %810 = vmatpush1.bf16.xpose.msra.mxu0 0
    %811 = vmatprep.subr.bf16.mxu0 0
    %812 = vmatpush1.bf16.xpose.msra.mxu0 0
    %813 = vmatprep.subr.bf16.mxu0 0
    %814 = vmatpush1.bf16.xpose.msra.mxu0 0
    %815 = vmatprep.subr.bf16.mxu0 0
    %816 = vmatpush1.bf16.xpose.msra.mxu0 0
    %817 = vmatprep.subr.bf16.mxu0 0
    %818 = vmatpush1.bf16.xpose.msra.mxu0 0
    %819 = vmatprep.mubr.bf16.mxu0 0
    %820 = vmatmul.mubr.bf16.gmra.mrb[0].mxu0 %v782
    %v821 = vpop.f32.mrb[0].mxu0
    %v822 = vadd.f32 0.0, %v821
    %v823 = vpop.f32.mrb[0].mxu0
    %v824 = vpop.f32.mrb[0].mxu0
    %v825 = vadd.f32 0.0, %v824
    %v826 = vpop.f32.mrb[0].mxu0
    %827 = vdwg.mxu0
    %v828 = vsel %vm585, %v771, -inf
    %829 = vmax.xlane.f32.xlu0 %v828
    %v830 = vpop.xlane.xlu0 %829
    %v831 = vsel %vm585, %v774, -inf
    %832 = vmax.xlane.f32.xlu0 %v831
    %v833 = vpop.xlane.xlu0 %832
    %v834 = vsel %vm585, %v822, -inf
    %835 = vmax.xlane.f32.xlu0 %v834
    %v836 = vpop.xlane.xlu0 %835
    %v837 = vsel %vm585, %v825, -inf
    %838 = vmax.xlane.f32.xlu0 %v837
    %v839 = vpop.xlane.xlu0 %838
    %v840 = vsub.f32 %v771, %v830
    %v841 = vsub.f32 %v774, %v833
    %v842 = vsub.f32 %v822, %v836
    %v843 = vsub.f32 %v825, %v839
    %v844 = vmul.f32 %v840, 1.442695
    %v845 = vpow.pop %v844
    %v846 = vmul.f32 %v841, 1.442695
    %v847 = vpow.pop %v846
    %v848 = vmul.f32 %v842, 1.442695
    %v849 = vpow.pop %v848
    %v850 = vmul.f32 %v843, 1.442695
    %v851 = vpow.pop %v850
    %v852 = vsel %vm585, %v845, 0.0
    %853 = vadd.xlane.f32.xlu0 %v852
    %v854 = vpop.xlane.xlu0 %853
    %v855 = vsel %vm585, %v847, 0.0
    %856 = vadd.xlane.f32.xlu0 %v855
    %v857 = vpop.xlane.xlu0 %856
    %v858 = vsel %vm585, %v849, 0.0
    %859 = vadd.xlane.f32.xlu0 %v858
    %v860 = vpop.xlane.xlu0 %859
    %v861 = vsel %vm585, %v851, 0.0
    %862 = vadd.xlane.f32.xlu0 %v861
    %v863 = vpop.xlane.xlu0 %862
    %v864 = vrcp.pop %v854
    %v865 = vrcp.pop %v857
    %v866 = vrcp.pop %v860
    %v867 = vrcp.pop %v863
    %v868 = vmul.f32 %v845, %v864
    %v869 = vmul.f32 %v847, %v865
    %v870 = vmul.f32 %v849, %v866
    %v871 = vmul.f32 %v851, %v867
    %v872 = vpack.c.bf16 %v869, %v868
    %v873 = vpack.c.bf16 %v871, %v870
    %874 = vrot.lane.b32.xlu0 %v483, 56
    %v875 = vpop.permute.xlu0 %874
    %v878 = vsel %vm585, %v872, 0
    %880 = vmatprep.subr.bf16.mxu0 0
    %881 = vmatpush1.bf16.msra.mxu0 %v875
    %882 = vmatprep.subr.bf16.mxu0 0
    %883 = vmatpush1.bf16.msra.mxu0 0
    %884 = vmatprep.subr.bf16.mxu0 0
    %885 = vmatpush1.bf16.msra.mxu0 0
    %886 = vmatprep.subr.bf16.mxu0 0
    %887 = vmatpush1.bf16.msra.mxu0 0
    %888 = vmatprep.subr.bf16.mxu0 0
    %889 = vmatpush1.bf16.msra.mxu0 0
    %890 = vmatprep.subr.bf16.mxu0 0
    %891 = vmatpush1.bf16.msra.mxu0 0
    %892 = vmatprep.subr.bf16.mxu0 0
    %893 = vmatpush1.bf16.msra.mxu0 0
    %894 = vmatprep.subr.bf16.mxu0 0
    %895 = vmatpush1.bf16.msra.mxu0 0
    %896 = vmatprep.subr.bf16.mxu0 0
    %897 = vmatpush1.bf16.msra.mxu0 0
    %898 = vmatprep.subr.bf16.mxu0 0
    %899 = vmatpush1.bf16.msra.mxu0 0
    %900 = vmatprep.subr.bf16.mxu0 0
    %901 = vmatpush1.bf16.msra.mxu0 0
    %902 = vmatprep.subr.bf16.mxu0 0
    %903 = vmatpush1.bf16.msra.mxu0 0
    %904 = vmatprep.subr.bf16.mxu0 0
    %905 = vmatpush1.bf16.msra.mxu0 0
    %906 = vmatprep.subr.bf16.mxu0 0
    %907 = vmatpush1.bf16.msra.mxu0 0
    %908 = vmatprep.subr.bf16.mxu0 0
    %909 = vmatpush1.bf16.msra.mxu0 0
    %910 = vmatprep.subr.bf16.mxu0 0
    %911 = vmatpush1.bf16.msra.mxu0 0
    %912 = vmatprep.mubr.bf16.mxu0 0
    %913 = vmatmul.mubr.bf16.gmra.mrb[0].mxu0 %v878
    %v914 = vpop.f32.mrb[0].mxu0
    %v915 = vadd.f32 0.0, %v914
    %v916 = vpop.f32.mrb[0].mxu0
    %v917 = vpop.f32.mrb[0].mxu0
    %v918 = vadd.f32 0.0, %v917
    %v919 = vpop.f32.mrb[0].mxu0
    %920 = vdwg.mxu0
    %921 = vrot.lane.b32.xlu0 %v484, 56
    %v922 = vpop.permute.xlu0 %921
    %v925 = vsel %vm585, %v873, 0
    %927 = vmatprep.subr.bf16.mxu0 0
    %928 = vmatpush1.bf16.msra.mxu0 %v922
    %929 = vmatprep.subr.bf16.mxu0 0
    %930 = vmatpush1.bf16.msra.mxu0 0
    %931 = vmatprep.subr.bf16.mxu0 0
    %932 = vmatpush1.bf16.msra.mxu0 0
    %933 = vmatprep.subr.bf16.mxu0 0
    %934 = vmatpush1.bf16.msra.mxu0 0
    %935 = vmatprep.subr.bf16.mxu0 0
    %936 = vmatpush1.bf16.msra.mxu0 0
    %937 = vmatprep.subr.bf16.mxu0 0
    %938 = vmatpush1.bf16.msra.mxu0 0
    %939 = vmatprep.subr.bf16.mxu0 0
    %940 = vmatpush1.bf16.msra.mxu0 0
    %941 = vmatprep.subr.bf16.mxu0 0
    %942 = vmatpush1.bf16.msra.mxu0 0
    %943 = vmatprep.subr.bf16.mxu0 0
    %944 = vmatpush1.bf16.msra.mxu0 0
    %945 = vmatprep.subr.bf16.mxu0 0
    %946 = vmatpush1.bf16.msra.mxu0 0
    %947 = vmatprep.subr.bf16.mxu0 0
    %948 = vmatpush1.bf16.msra.mxu0 0
    %949 = vmatprep.subr.bf16.mxu0 0
    %950 = vmatpush1.bf16.msra.mxu0 0
    %951 = vmatprep.subr.bf16.mxu0 0
    %952 = vmatpush1.bf16.msra.mxu0 0
    %953 = vmatprep.subr.bf16.mxu0 0
    %954 = vmatpush1.bf16.msra.mxu0 0
    %955 = vmatprep.subr.bf16.mxu0 0
    %956 = vmatpush1.bf16.msra.mxu0 0
    %957 = vmatprep.subr.bf16.mxu0 0
    %958 = vmatpush1.bf16.msra.mxu0 0
    %959 = vmatprep.mubr.bf16.mxu0 0
    %960 = vmatmul.mubr.bf16.gmra.mrb[0].mxu0 %v925
    %v961 = vpop.f32.mrb[0].mxu0
    %v962 = vadd.f32 0.0, %v961
    %v963 = vpop.f32.mrb[0].mxu0
    %v964 = vpop.f32.mrb[0].mxu0
    %v965 = vadd.f32 0.0, %v964
    %v966 = vpop.f32.mrb[0].mxu0
    %967 = vdwg.mxu0
    %968 = vrot.lane.b32.xlu0 %v483, 112
    %v969 = vpop.permute.xlu0 %968
    %970 = vrot.lane.b32.xlu0 %v483, 80
    %v971 = vpop.permute.xlu0 %970
    %v973 = vsel %vm91, %v969, 0
    %v976 = vsel %vm91, %v971, 0
    %978 = vmatprep.subr.bf16.mxu0 0
    %979 = vmatpush1.bf16.xpose.msra.mxu0 %v976
    %980 = vmatprep.subr.bf16.mxu0 0
    %981 = vmatpush1.bf16.xpose.msra.mxu0 0
    %982 = vmatprep.subr.bf16.mxu0 0
    %983 = vmatpush1.bf16.xpose.msra.mxu0 0
    %984 = vmatprep.subr.bf16.mxu0 0
    %985 = vmatpush1.bf16.xpose.msra.mxu0 0
    %986 = vmatprep.subr.bf16.mxu0 0
    %987 = vmatpush1.bf16.xpose.msra.mxu0 0
    %988 = vmatprep.subr.bf16.mxu0 0
    %989 = vmatpush1.bf16.xpose.msra.mxu0 0
    %990 = vmatprep.subr.bf16.mxu0 0
    %991 = vmatpush1.bf16.xpose.msra.mxu0 0
    %992 = vmatprep.subr.bf16.mxu0 0
    %993 = vmatpush1.bf16.xpose.msra.mxu0 0
    %994 = vmatprep.subr.bf16.mxu0 0
    %995 = vmatpush1.bf16.xpose.msra.mxu0 0
    %996 = vmatprep.subr.bf16.mxu0 0
    %997 = vmatpush1.bf16.xpose.msra.mxu0 0
    %998 = vmatprep.subr.bf16.mxu0 0
    %999 = vmatpush1.bf16.xpose.msra.mxu0 0
    %1000 = vmatprep.subr.bf16.mxu0 0
    %1001 = vmatpush1.bf16.xpose.msra.mxu0 0
    %1002 = vmatprep.subr.bf16.mxu0 0
    %1003 = vmatpush1.bf16.xpose.msra.mxu0 0
    %1004 = vmatprep.subr.bf16.mxu0 0
    %1005 = vmatpush1.bf16.xpose.msra.mxu0 0
    %1006 = vmatprep.subr.bf16.mxu0 0
    %1007 = vmatpush1.bf16.xpose.msra.mxu0 0
    %1008 = vmatprep.subr.bf16.mxu0 0
    %1009 = vmatpush1.bf16.xpose.msra.mxu0 0
    %1010 = vmatprep.mubr.bf16.mxu0 0
    %1011 = vmatmul.mubr.bf16.gmra.mrb[0].mxu0 %v973
    %v1012 = vpop.f32.mrb[0].mxu0
    %v1013 = vadd.f32 0.0, %v1012
    %v1014 = vpop.f32.mrb[0].mxu0
    %v1015 = vpop.f32.mrb[0].mxu0
    %v1016 = vadd.f32 0.0, %v1015
    %v1017 = vpop.f32.mrb[0].mxu0
    %1018 = vdwg.mxu0
    %1019 = vrot.lane.b32.xlu0 %v484, 112
    %v1020 = vpop.permute.xlu0 %1019
    %1021 = vrot.lane.b32.xlu0 %v484, 80
    %v1022 = vpop.permute.xlu0 %1021
    %v1024 = vsel %vm91, %v1020, 0
    %v1027 = vsel %vm91, %v1022, 0
    %1029 = vmatprep.subr.bf16.mxu0 0
    %1030 = vmatpush1.bf16.xpose.msra.mxu0 %v1027
    %1031 = vmatprep.subr.bf16.mxu0 0
    %1032 = vmatpush1.bf16.xpose.msra.mxu0 0
    %1033 = vmatprep.subr.bf16.mxu0 0
    %1034 = vmatpush1.bf16.xpose.msra.mxu0 0
    %1035 = vmatprep.subr.bf16.mxu0 0
    %1036 = vmatpush1.bf16.xpose.msra.mxu0 0
    %1037 = vmatprep.subr.bf16.mxu0 0
    %1038 = vmatpush1.bf16.xpose.msra.mxu0 0
    %1039 = vmatprep.subr.bf16.mxu0 0
    %1040 = vmatpush1.bf16.xpose.msra.mxu0 0
    %1041 = vmatprep.subr.bf16.mxu0 0
    %1042 = vmatpush1.bf16.xpose.msra.mxu0 0
    %1043 = vmatprep.subr.bf16.mxu0 0
    %1044 = vmatpush1.bf16.xpose.msra.mxu0 0
    %1045 = vmatprep.subr.bf16.mxu0 0
    %1046 = vmatpush1.bf16.xpose.msra.mxu0 0
    %1047 = vmatprep.subr.bf16.mxu0 0
    %1048 = vmatpush1.bf16.xpose.msra.mxu0 0
    %1049 = vmatprep.subr.bf16.mxu0 0
    %1050 = vmatpush1.bf16.xpose.msra.mxu0 0
    %1051 = vmatprep.subr.bf16.mxu0 0
    %1052 = vmatpush1.bf16.xpose.msra.mxu0 0
    %1053 = vmatprep.subr.bf16.mxu0 0
    %1054 = vmatpush1.bf16.xpose.msra.mxu0 0
    %1055 = vmatprep.subr.bf16.mxu0 0
    %1056 = vmatpush1.bf16.xpose.msra.mxu0 0
    %1057 = vmatprep.subr.bf16.mxu0 0
    %1058 = vmatpush1.bf16.xpose.msra.mxu0 0
    %1059 = vmatprep.subr.bf16.mxu0 0
    %1060 = vmatpush1.bf16.xpose.msra.mxu0 0
    %1061 = vmatprep.mubr.bf16.mxu0 0
    %1062 = vmatmul.mubr.bf16.gmra.mrb[0].mxu0 %v1024
    %v1063 = vpop.f32.mrb[0].mxu0
    %v1064 = vadd.f32 0.0, %v1063
    %v1065 = vpop.f32.mrb[0].mxu0
    %v1066 = vpop.f32.mrb[0].mxu0
    %v1067 = vadd.f32 0.0, %v1066
    %v1068 = vpop.f32.mrb[0].mxu0
    %1069 = vdwg.mxu0
    %v1070 = vsel %vm585, %v1013, -inf
    %1071 = vmax.xlane.f32.xlu0 %v1070
    %v1072 = vpop.xlane.xlu0 %1071
    %v1073 = vsel %vm585, %v1016, -inf
    %1074 = vmax.xlane.f32.xlu0 %v1073
    %v1075 = vpop.xlane.xlu0 %1074
    %v1076 = vsel %vm585, %v1064, -inf
    %1077 = vmax.xlane.f32.xlu0 %v1076
    %v1078 = vpop.xlane.xlu0 %1077
    %v1079 = vsel %vm585, %v1067, -inf
    %1080 = vmax.xlane.f32.xlu0 %v1079
    %v1081 = vpop.xlane.xlu0 %1080
    %v1082 = vsub.f32 %v1013, %v1072
    %v1083 = vsub.f32 %v1016, %v1075
    %v1084 = vsub.f32 %v1064, %v1078
    %v1085 = vsub.f32 %v1067, %v1081
    %v1086 = vmul.f32 %v1082, 1.442695
    %v1087 = vpow.pop %v1086
    %v1088 = vmul.f32 %v1083, 1.442695
    %v1089 = vpow.pop %v1088
    %v1090 = vmul.f32 %v1084, 1.442695
    %v1091 = vpow.pop %v1090
    %v1092 = vmul.f32 %v1085, 1.442695
    %v1093 = vpow.pop %v1092
    %v1094 = vsel %vm585, %v1087, 0.0
    %1095 = vadd.xlane.f32.xlu0 %v1094
    %v1096 = vpop.xlane.xlu0 %1095
    %v1097 = vsel %vm585, %v1089, 0.0
    %1098 = vadd.xlane.f32.xlu0 %v1097
    %v1099 = vpop.xlane.xlu0 %1098
    %v1100 = vsel %vm585, %v1091, 0.0
    %1101 = vadd.xlane.f32.xlu0 %v1100
    %v1102 = vpop.xlane.xlu0 %1101
    %v1103 = vsel %vm585, %v1093, 0.0
    %1104 = vadd.xlane.f32.xlu0 %v1103
    %v1105 = vpop.xlane.xlu0 %1104
    %v1106 = vrcp.pop %v1096
    %v1107 = vrcp.pop %v1099
    %v1108 = vrcp.pop %v1102
    %v1109 = vrcp.pop %v1105
    %v1110 = vmul.f32 %v1087, %v1106
    %v1111 = vmul.f32 %v1089, %v1107
    %v1112 = vmul.f32 %v1091, %v1108
    %v1113 = vmul.f32 %v1093, %v1109
    %v1114 = vpack.c.bf16 %v1111, %v1110
    %v1115 = vpack.c.bf16 %v1113, %v1112
    %1116 = vrot.lane.b32.xlu0 %v483, 48
    %v1117 = vpop.permute.xlu0 %1116
    %v1120 = vsel %vm585, %v1114, 0
    %1122 = vmatprep.subr.bf16.mxu0 0
    %1123 = vmatpush1.bf16.msra.mxu0 %v1117
    %1124 = vmatprep.subr.bf16.mxu0 0
    %1125 = vmatpush1.bf16.msra.mxu0 0
    %1126 = vmatprep.subr.bf16.mxu0 0
    %1127 = vmatpush1.bf16.msra.mxu0 0
    %1128 = vmatprep.subr.bf16.mxu0 0
    %1129 = vmatpush1.bf16.msra.mxu0 0
    %1130 = vmatprep.subr.bf16.mxu0 0
    %1131 = vmatpush1.bf16.msra.mxu0 0
    %1132 = vmatprep.subr.bf16.mxu0 0
    %1133 = vmatpush1.bf16.msra.mxu0 0
    %1134 = vmatprep.subr.bf16.mxu0 0
    %1135 = vmatpush1.bf16.msra.mxu0 0
    %1136 = vmatprep.subr.bf16.mxu0 0
    %1137 = vmatpush1.bf16.msra.mxu0 0
    %1138 = vmatprep.subr.bf16.mxu0 0
    %1139 = vmatpush1.bf16.msra.mxu0 0
    %1140 = vmatprep.subr.bf16.mxu0 0
    %1141 = vmatpush1.bf16.msra.mxu0 0
    %1142 = vmatprep.subr.bf16.mxu0 0
    %1143 = vmatpush1.bf16.msra.mxu0 0
    %1144 = vmatprep.subr.bf16.mxu0 0
    %1145 = vmatpush1.bf16.msra.mxu0 0
    %1146 = vmatprep.subr.bf16.mxu0 0
    %1147 = vmatpush1.bf16.msra.mxu0 0
    %1148 = vmatprep.subr.bf16.mxu0 0
    %1149 = vmatpush1.bf16.msra.mxu0 0
    %1150 = vmatprep.subr.bf16.mxu0 0
    %1151 = vmatpush1.bf16.msra.mxu0 0
    %1152 = vmatprep.subr.bf16.mxu0 0
    %1153 = vmatpush1.bf16.msra.mxu0 0
    %1154 = vmatprep.mubr.bf16.mxu0 0
    %1155 = vmatmul.mubr.bf16.gmra.mrb[0].mxu0 %v1120
    %v1156 = vpop.f32.mrb[0].mxu0
    %v1157 = vadd.f32 0.0, %v1156
    %v1158 = vpop.f32.mrb[0].mxu0
    %v1159 = vpop.f32.mrb[0].mxu0
    %v1160 = vadd.f32 0.0, %v1159
    %v1161 = vpop.f32.mrb[0].mxu0
    %1162 = vdwg.mxu0
    %1163 = vrot.lane.b32.xlu0 %v484, 48
    %v1164 = vpop.permute.xlu0 %1163
    %v1167 = vsel %vm585, %v1115, 0
    %1169 = vmatprep.subr.bf16.mxu0 0
    %1170 = vmatpush1.bf16.msra.mxu0 %v1164
    %1171 = vmatprep.subr.bf16.mxu0 0
    %1172 = vmatpush1.bf16.msra.mxu0 0
    %1173 = vmatprep.subr.bf16.mxu0 0
    %1174 = vmatpush1.bf16.msra.mxu0 0
    %1175 = vmatprep.subr.bf16.mxu0 0
    %1176 = vmatpush1.bf16.msra.mxu0 0
    %1177 = vmatprep.subr.bf16.mxu0 0
    %1178 = vmatpush1.bf16.msra.mxu0 0
    %1179 = vmatprep.subr.bf16.mxu0 0
    %1180 = vmatpush1.bf16.msra.mxu0 0
    %1181 = vmatprep.subr.bf16.mxu0 0
    %1182 = vmatpush1.bf16.msra.mxu0 0
    %1183 = vmatprep.subr.bf16.mxu0 0
    %1184 = vmatpush1.bf16.msra.mxu0 0
    %1185 = vmatprep.subr.bf16.mxu0 0
    %1186 = vmatpush1.bf16.msra.mxu0 0
    %1187 = vmatprep.subr.bf16.mxu0 0
    %1188 = vmatpush1.bf16.msra.mxu0 0
    %1189 = vmatprep.subr.bf16.mxu0 0
    %1190 = vmatpush1.bf16.msra.mxu0 0
    %1191 = vmatprep.subr.bf16.mxu0 0
    %1192 = vmatpush1.bf16.msra.mxu0 0
    %1193 = vmatprep.subr.bf16.mxu0 0
    %1194 = vmatpush1.bf16.msra.mxu0 0
    %1195 = vmatprep.subr.bf16.mxu0 0
    %1196 = vmatpush1.bf16.msra.mxu0 0
    %1197 = vmatprep.subr.bf16.mxu0 0
    %1198 = vmatpush1.bf16.msra.mxu0 0
    %1199 = vmatprep.subr.bf16.mxu0 0
    %1200 = vmatpush1.bf16.msra.mxu0 0
    %1201 = vmatprep.mubr.bf16.mxu0 0
    %1202 = vmatmul.mubr.bf16.gmra.mrb[0].mxu0 %v1167
    %v1203 = vpop.f32.mrb[0].mxu0
    %v1204 = vadd.f32 0.0, %v1203
    %v1205 = vpop.f32.mrb[0].mxu0
    %v1206 = vpop.f32.mrb[0].mxu0
    %v1207 = vadd.f32 0.0, %v1206
    %v1208 = vpop.f32.mrb[0].mxu0
    %1209 = vdwg.mxu0
    %1210 = vrot.lane.b32.xlu0 %v483, 104
    %v1211 = vpop.permute.xlu0 %1210
    %1212 = vrot.lane.b32.xlu0 %v483, 72
    %v1213 = vpop.permute.xlu0 %1212
    %v1215 = vsel %vm91, %v1211, 0
    %v1218 = vsel %vm91, %v1213, 0
    %1220 = vmatprep.subr.bf16.mxu0 0
    %1221 = vmatpush1.bf16.xpose.msra.mxu0 %v1218
    %1222 = vmatprep.subr.bf16.mxu0 0
    %1223 = vmatpush1.bf16.xpose.msra.mxu0 0
    %1224 = vmatprep.subr.bf16.mxu0 0
    %1225 = vmatpush1.bf16.xpose.msra.mxu0 0
    %1226 = vmatprep.subr.bf16.mxu0 0
    %1227 = vmatpush1.bf16.xpose.msra.mxu0 0
    %1228 = vmatprep.subr.bf16.mxu0 0
    %1229 = vmatpush1.bf16.xpose.msra.mxu0 0
    %1230 = vmatprep.subr.bf16.mxu0 0
    %1231 = vmatpush1.bf16.xpose.msra.mxu0 0
    %1232 = vmatprep.subr.bf16.mxu0 0
    %1233 = vmatpush1.bf16.xpose.msra.mxu0 0
    %1234 = vmatprep.subr.bf16.mxu0 0
    %1235 = vmatpush1.bf16.xpose.msra.mxu0 0
    %1236 = vmatprep.subr.bf16.mxu0 0
    %1237 = vmatpush1.bf16.xpose.msra.mxu0 0
    %1238 = vmatprep.subr.bf16.mxu0 0
    %1239 = vmatpush1.bf16.xpose.msra.mxu0 0
    %1240 = vmatprep.subr.bf16.mxu0 0
    %1241 = vmatpush1.bf16.xpose.msra.mxu0 0
    %1242 = vmatprep.subr.bf16.mxu0 0
    %1243 = vmatpush1.bf16.xpose.msra.mxu0 0
    %1244 = vmatprep.subr.bf16.mxu0 0
    %1245 = vmatpush1.bf16.xpose.msra.mxu0 0
    %1246 = vmatprep.subr.bf16.mxu0 0
    %1247 = vmatpush1.bf16.xpose.msra.mxu0 0
    %1248 = vmatprep.subr.bf16.mxu0 0
    %1249 = vmatpush1.bf16.xpose.msra.mxu0 0
    %1250 = vmatprep.subr.bf16.mxu0 0
    %1251 = vmatpush1.bf16.xpose.msra.mxu0 0
    %1252 = vmatprep.mubr.bf16.mxu0 0
    %1253 = vmatmul.mubr.bf16.gmra.mrb[0].mxu0 %v1215
    %v1254 = vpop.f32.mrb[0].mxu0
    %v1255 = vadd.f32 0.0, %v1254
    %v1256 = vpop.f32.mrb[0].mxu0
    %v1257 = vpop.f32.mrb[0].mxu0
    %v1258 = vadd.f32 0.0, %v1257
    %v1259 = vpop.f32.mrb[0].mxu0
    %1260 = vdwg.mxu0
    %1261 = vrot.lane.b32.xlu0 %v484, 104
    %v1262 = vpop.permute.xlu0 %1261
    %1263 = vrot.lane.b32.xlu0 %v484, 72
    %v1264 = vpop.permute.xlu0 %1263
    %v1266 = vsel %vm91, %v1262, 0
    %v1269 = vsel %vm91, %v1264, 0
    %1271 = vmatprep.subr.bf16.mxu0 0
    %1272 = vmatpush1.bf16.xpose.msra.mxu0 %v1269
    %1273 = vmatprep.subr.bf16.mxu0 0
    %1274 = vmatpush1.bf16.xpose.msra.mxu0 0
    %1275 = vmatprep.subr.bf16.mxu0 0
    %1276 = vmatpush1.bf16.xpose.msra.mxu0 0
    %1277 = vmatprep.subr.bf16.mxu0 0
    %1278 = vmatpush1.bf16.xpose.msra.mxu0 0
    %1279 = vmatprep.subr.bf16.mxu0 0
    %1280 = vmatpush1.bf16.xpose.msra.mxu0 0
    %1281 = vmatprep.subr.bf16.mxu0 0
    %1282 = vmatpush1.bf16.xpose.msra.mxu0 0
    %1283 = vmatprep.subr.bf16.mxu0 0
    %1284 = vmatpush1.bf16.xpose.msra.mxu0 0
    %1285 = vmatprep.subr.bf16.mxu0 0
    %1286 = vmatpush1.bf16.xpose.msra.mxu0 0
    %1287 = vmatprep.subr.bf16.mxu0 0
    %1288 = vmatpush1.bf16.xpose.msra.mxu0 0
    %1289 = vmatprep.subr.bf16.mxu0 0
    %1290 = vmatpush1.bf16.xpose.msra.mxu0 0
    %1291 = vmatprep.subr.bf16.mxu0 0
    %1292 = vmatpush1.bf16.xpose.msra.mxu0 0
    %1293 = vmatprep.subr.bf16.mxu0 0
    %1294 = vmatpush1.bf16.xpose.msra.mxu0 0
    %1295 = vmatprep.subr.bf16.mxu0 0
    %1296 = vmatpush1.bf16.xpose.msra.mxu0 0
    %1297 = vmatprep.subr.bf16.mxu0 0
    %1298 = vmatpush1.bf16.xpose.msra.mxu0 0
    %1299 = vmatprep.subr.bf16.mxu0 0
    %1300 = vmatpush1.bf16.xpose.msra.mxu0 0
    %1301 = vmatprep.subr.bf16.mxu0 0
    %1302 = vmatpush1.bf16.xpose.msra.mxu0 0
    %1303 = vmatprep.mubr.bf16.mxu0 0
    %1304 = vmatmul.mubr.bf16.gmra.mrb[0].mxu0 %v1266
    %v1305 = vpop.f32.mrb[0].mxu0
    %v1306 = vadd.f32 0.0, %v1305
    %v1307 = vpop.f32.mrb[0].mxu0
    %v1308 = vpop.f32.mrb[0].mxu0
    %v1309 = vadd.f32 0.0, %v1308
    %v1310 = vpop.f32.mrb[0].mxu0
    %1311 = vdwg.mxu0
    %v1312 = vsel %vm585, %v1255, -inf
    %1313 = vmax.xlane.f32.xlu0 %v1312
    %v1314 = vpop.xlane.xlu0 %1313
    %v1315 = vsel %vm585, %v1258, -inf
    %1316 = vmax.xlane.f32.xlu0 %v1315
    %v1317 = vpop.xlane.xlu0 %1316
    %v1318 = vsel %vm585, %v1306, -inf
    %1319 = vmax.xlane.f32.xlu0 %v1318
    %v1320 = vpop.xlane.xlu0 %1319
    %v1321 = vsel %vm585, %v1309, -inf
    %1322 = vmax.xlane.f32.xlu0 %v1321
    %v1323 = vpop.xlane.xlu0 %1322
    %v1324 = vsub.f32 %v1255, %v1314
    %v1325 = vsub.f32 %v1258, %v1317
    %v1326 = vsub.f32 %v1306, %v1320
    %v1327 = vsub.f32 %v1309, %v1323
    %v1328 = vmul.f32 %v1324, 1.442695
    %v1329 = vpow.pop %v1328
    %v1330 = vmul.f32 %v1325, 1.442695
    %v1331 = vpow.pop %v1330
    %v1332 = vmul.f32 %v1326, 1.442695
    %v1333 = vpow.pop %v1332
    %v1334 = vmul.f32 %v1327, 1.442695
    %v1335 = vpow.pop %v1334
    %v1336 = vsel %vm585, %v1329, 0.0
    %1337 = vadd.xlane.f32.xlu0 %v1336
    %v1338 = vpop.xlane.xlu0 %1337
    %v1339 = vsel %vm585, %v1331, 0.0
    %1340 = vadd.xlane.f32.xlu0 %v1339
    %v1341 = vpop.xlane.xlu0 %1340
    %v1342 = vsel %vm585, %v1333, 0.0
    %1343 = vadd.xlane.f32.xlu0 %v1342
    %v1344 = vpop.xlane.xlu0 %1343
    %v1345 = vsel %vm585, %v1335, 0.0
    %1346 = vadd.xlane.f32.xlu0 %v1345
    %v1347 = vpop.xlane.xlu0 %1346
    %v1348 = vrcp.pop %v1338
    %v1349 = vrcp.pop %v1341
    %v1350 = vrcp.pop %v1344
    %v1351 = vrcp.pop %v1347
    %v1352 = vmul.f32 %v1329, %v1348
    %v1353 = vmul.f32 %v1331, %v1349
    %v1354 = vmul.f32 %v1333, %v1350
    %v1355 = vmul.f32 %v1335, %v1351
    %v1356 = vpack.c.bf16 %v1353, %v1352
    %v1357 = vpack.c.bf16 %v1355, %v1354
    %1358 = vrot.lane.b32.xlu0 %v483, 40
    %v1359 = vpop.permute.xlu0 %1358
    %v1362 = vsel %vm585, %v1356, 0
    %1364 = vmatprep.subr.bf16.mxu0 0
    %1365 = vmatpush1.bf16.msra.mxu0 %v1359
    %1366 = vmatprep.subr.bf16.mxu0 0
    %1367 = vmatpush1.bf16.msra.mxu0 0
    %1368 = vmatprep.subr.bf16.mxu0 0
    %1369 = vmatpush1.bf16.msra.mxu0 0
    %1370 = vmatprep.subr.bf16.mxu0 0
    %1371 = vmatpush1.bf16.msra.mxu0 0
    %1372 = vmatprep.subr.bf16.mxu0 0
    %1373 = vmatpush1.bf16.msra.mxu0 0
    %1374 = vmatprep.subr.bf16.mxu0 0
    %1375 = vmatpush1.bf16.msra.mxu0 0
    %1376 = vmatprep.subr.bf16.mxu0 0
    %1377 = vmatpush1.bf16.msra.mxu0 0
    %1378 = vmatprep.subr.bf16.mxu0 0
    %1379 = vmatpush1.bf16.msra.mxu0 0
    %1380 = vmatprep.subr.bf16.mxu0 0
    %1381 = vmatpush1.bf16.msra.mxu0 0
    %1382 = vmatprep.subr.bf16.mxu0 0
    %1383 = vmatpush1.bf16.msra.mxu0 0
    %1384 = vmatprep.subr.bf16.mxu0 0
    %1385 = vmatpush1.bf16.msra.mxu0 0
    %1386 = vmatprep.subr.bf16.mxu0 0
    %1387 = vmatpush1.bf16.msra.mxu0 0
    %1388 = vmatprep.subr.bf16.mxu0 0
    %1389 = vmatpush1.bf16.msra.mxu0 0
    %1390 = vmatprep.subr.bf16.mxu0 0
    %1391 = vmatpush1.bf16.msra.mxu0 0
    %1392 = vmatprep.subr.bf16.mxu0 0
    %1393 = vmatpush1.bf16.msra.mxu0 0
    %1394 = vmatprep.subr.bf16.mxu0 0
    %1395 = vmatpush1.bf16.msra.mxu0 0
    %1396 = vmatprep.mubr.bf16.mxu0 0
    %1397 = vmatmul.mubr.bf16.gmra.mrb[0].mxu0 %v1362
    %v1398 = vpop.f32.mrb[0].mxu0
    %v1399 = vadd.f32 0.0, %v1398
    %v1400 = vpop.f32.mrb[0].mxu0
    %v1401 = vpop.f32.mrb[0].mxu0
    %v1402 = vadd.f32 0.0, %v1401
    %v1403 = vpop.f32.mrb[0].mxu0
    %1404 = vdwg.mxu0
    %1405 = vrot.lane.b32.xlu0 %v484, 40
    %v1406 = vpop.permute.xlu0 %1405
    %v1409 = vsel %vm585, %v1357, 0
    %1411 = vmatprep.subr.bf16.mxu0 0
    %1412 = vmatpush1.bf16.msra.mxu0 %v1406
    %1413 = vmatprep.subr.bf16.mxu0 0
    %1414 = vmatpush1.bf16.msra.mxu0 0
    %1415 = vmatprep.subr.bf16.mxu0 0
    %1416 = vmatpush1.bf16.msra.mxu0 0
    %1417 = vmatprep.subr.bf16.mxu0 0
    %1418 = vmatpush1.bf16.msra.mxu0 0
    %1419 = vmatprep.subr.bf16.mxu0 0
    %1420 = vmatpush1.bf16.msra.mxu0 0
    %1421 = vmatprep.subr.bf16.mxu0 0
    %1422 = vmatpush1.bf16.msra.mxu0 0
    %1423 = vmatprep.subr.bf16.mxu0 0
    %1424 = vmatpush1.bf16.msra.mxu0 0
    %1425 = vmatprep.subr.bf16.mxu0 0
    %1426 = vmatpush1.bf16.msra.mxu0 0
    %1427 = vmatprep.subr.bf16.mxu0 0
    %1428 = vmatpush1.bf16.msra.mxu0 0
    %1429 = vmatprep.subr.bf16.mxu0 0
    %1430 = vmatpush1.bf16.msra.mxu0 0
    %1431 = vmatprep.subr.bf16.mxu0 0
    %1432 = vmatpush1.bf16.msra.mxu0 0
    %1433 = vmatprep.subr.bf16.mxu0 0
    %1434 = vmatpush1.bf16.msra.mxu0 0
    %1435 = vmatprep.subr.bf16.mxu0 0
    %1436 = vmatpush1.bf16.msra.mxu0 0
    %1437 = vmatprep.subr.bf16.mxu0 0
    %1438 = vmatpush1.bf16.msra.mxu0 0
    %1439 = vmatprep.subr.bf16.mxu0 0
    %1440 = vmatpush1.bf16.msra.mxu0 0
    %1441 = vmatprep.subr.bf16.mxu0 0
    %1442 = vmatpush1.bf16.msra.mxu0 0
    %1443 = vmatprep.mubr.bf16.mxu0 0
    %1444 = vmatmul.mubr.bf16.gmra.mrb[0].mxu0 %v1409
    %v1445 = vpop.f32.mrb[0].mxu0
    %v1446 = vadd.f32 0.0, %v1445
    %v1447 = vpop.f32.mrb[0].mxu0
    %v1448 = vpop.f32.mrb[0].mxu0
    %v1449 = vadd.f32 0.0, %v1448
    %v1450 = vpop.f32.mrb[0].mxu0
    %1451 = vdwg.mxu0
    %1456 = vrot.lane.b32.xlu0 %v915, 8
    %v1457 = vpop.permute.xlu0 %1456
    %1458 = vrot.lane.b32.xlu0 %v918, 8
    %v1459 = vpop.permute.xlu0 %1458
    %1460 = vrot.lane.b32.xlu0 %v962, 8
    %v1461 = vpop.permute.xlu0 %1460
    %1462 = vrot.lane.b32.xlu0 %v965, 8
    %v1463 = vpop.permute.xlu0 %1462
    %1472 = vrot.lane.b32.xlu0 %v1157, 16
    %v1473 = vpop.permute.xlu0 %1472
    %1474 = vrot.lane.b32.xlu0 %v1160, 16
    %v1475 = vpop.permute.xlu0 %1474
    %1476 = vrot.lane.b32.xlu0 %v1204, 16
    %v1477 = vpop.permute.xlu0 %1476
    %1478 = vrot.lane.b32.xlu0 %v1207, 16
    %v1479 = vpop.permute.xlu0 %1478
    %1488 = vrot.lane.b32.xlu0 %v1399, 24
    %v1489 = vpop.permute.xlu0 %1488
    %1490 = vrot.lane.b32.xlu0 %v1402, 24
    %v1491 = vpop.permute.xlu0 %1490
    %1492 = vrot.lane.b32.xlu0 %v1446, 24
    %v1493 = vpop.permute.xlu0 %1492
    %1494 = vrot.lane.b32.xlu0 %v1449, 24
    %v1495 = vpop.permute.xlu0 %1494
    %v1500 = vsel %vm91, %v673, %v1457
    %v1501 = vsel %vm91, %v676, %v1459
    %v1502 = vsel %vm91, %v720, %v1461
    %v1503 = vsel %vm91, %v723, %v1463
    %v1504 = vsel %vm585, %v1500, %v1473
    %v1505 = vsel %vm585, %v1501, %v1475
    %v1506 = vsel %vm585, %v1502, %v1477
    %v1507 = vsel %vm585, %v1503, %v1479
    %vm1508 = vcmask 195584
    %v1509 = vsel %vm1508, %v1504, %v1489
    %v1510 = vsel %vm1508, %v1505, %v1491
    %v1511 = vsel %vm1508, %v1506, %v1493
    %v1512 = vsel %vm1508, %v1507, %v1495
    %v1513 = vpack.c.bf16 %v1510, %v1509
    %v1514 = vpack.c.bf16 %v1512, %v1511
    %v1515 = vld [vmem:[%s10] sm:$0xf]
    %v1516 = vld [vmem:[%s10 + $0x4] sm:$0xf]
    %v1517 = vld [vmem:[%s10 + $0x8] sm:$0xf]
    %v1518 = vld [vmem:[%s10 + $0xc] sm:$0xf]
    %v1519 = vld [vmem:[%s11] sm:$0x1]
    %v1521 = vlaneseq
    %v1522 = vshrl.u32 %v1521, 7
    %v1523 = vsub.s32 0, %v1522
    %v1524 = vrot.slane %v1519, %v1523
    %v1530 = vunpack.c.l.b16 %v1515
    %v1531 = vunpack.c.l.b16 %v1516
    %v1532 = vunpack.c.l.b16 %v1517
    %v1533 = vunpack.c.l.b16 %v1518
    %v1534 = vpack.c.b16 %v1531, %v1530
    %v1535 = vpack.c.b16 %v1533, %v1532
    %v1539 = vsel %vm427, %v1513, 0
    %v1542 = vsel %vm427, %v1514, 0
    %1544 = vmatprep.subr.bf16.mxu0 0
    %1545 = vmatpush1.bf16.msra.mxu0 %v1534
    %1546 = vmatprep.subr.bf16.mxu0 0
    %1547 = vmatpush1.bf16.msra.mxu0 %v1535
    %1548 = vmatprep.subr.bf16.mxu0 0
    %1549 = vmatpush1.bf16.msra.mxu0 0
    %1550 = vmatprep.subr.bf16.mxu0 0
    %1551 = vmatpush1.bf16.msra.mxu0 0
    %1552 = vmatprep.subr.bf16.mxu0 0
    %1553 = vmatpush1.bf16.msra.mxu0 0
    %1554 = vmatprep.subr.bf16.mxu0 0
    %1555 = vmatpush1.bf16.msra.mxu0 0
    %1556 = vmatprep.subr.bf16.mxu0 0
    %1557 = vmatpush1.bf16.msra.mxu0 0
    %1558 = vmatprep.subr.bf16.mxu0 0
    %1559 = vmatpush1.bf16.msra.mxu0 0
    %1560 = vmatprep.subr.bf16.mxu0 0
    %1561 = vmatpush1.bf16.msra.mxu0 0
    %1562 = vmatprep.subr.bf16.mxu0 0
    %1563 = vmatpush1.bf16.msra.mxu0 0
    %1564 = vmatprep.subr.bf16.mxu0 0
    %1565 = vmatpush1.bf16.msra.mxu0 0
    %1566 = vmatprep.subr.bf16.mxu0 0
    %1567 = vmatpush1.bf16.msra.mxu0 0
    %1568 = vmatprep.subr.bf16.mxu0 0
    %1569 = vmatpush1.bf16.msra.mxu0 0
    %1570 = vmatprep.subr.bf16.mxu0 0
    %1571 = vmatpush1.bf16.msra.mxu0 0
    %1572 = vmatprep.subr.bf16.mxu0 0
    %1573 = vmatpush1.bf16.msra.mxu0 0
    %1574 = vmatprep.subr.bf16.mxu0 0
    %1575 = vmatpush1.bf16.msra.mxu0 0
    %1576 = vmatprep.mubr.bf16.mxu0 0
    %1577 = vmatmul.mubr.bf16.gmra.mrb[0].mxu0 %v1539
    %v1578 = vpop.f32.mrb[0].mxu0
    %v1579 = vadd.f32 %v1524, %v1578
    %v1580 = vpop.f32.mrb[0].mxu0
    %v1581 = vpop.f32.mrb[0].mxu0
    %v1582 = vadd.f32 %v1524, %v1581
    %v1583 = vpop.f32.mrb[0].mxu0
    %1584 = vmatprep.mubr.bf16.mxu0 0
    %1585 = vmatmul.mubr.bf16.gmra.mrb[0].mxu0 %v1542
    %v1586 = vpop.f32.mrb[0].mxu0
    %v1587 = vadd.f32 %v1524, %v1586
    %v1588 = vpop.f32.mrb[0].mxu0
    %v1589 = vpop.f32.mrb[0].mxu0
    %v1590 = vadd.f32 %v1524, %v1589
    %v1591 = vpop.f32.mrb[0].mxu0
    %1592 = vdwg.mxu0
    %v1593 = vadd.f32 %v398, %v1579
    %v1594 = vadd.f32 %v399, %v1582
    %v1595 = vadd.f32 %v400, %v1587
    %v1596 = vadd.f32 %v401, %v1590
    %v1597 = vld [vmem:[%s12] sm:$0x1]
    %v1598 = vld [vmem:[%s13] sm:$0x1]
    %v1599 = vsel %vm427, %v1593, 0.0
    %1600 = vadd.xlane.f32.xlu0 %v1599
    %v1601 = vpop.xlane.xlu0 %1600
    %v1602 = vsel %vm427, %v1594, 0.0
    %1603 = vadd.xlane.f32.xlu0 %v1602
    %v1604 = vpop.xlane.xlu0 %1603
    %v1605 = vsel %vm427, %v1595, 0.0
    %1606 = vadd.xlane.f32.xlu0 %v1605
    %v1607 = vpop.xlane.xlu0 %1606
    %v1608 = vsel %vm427, %v1596, 0.0
    %1609 = vadd.xlane.f32.xlu0 %v1608
    %v1610 = vpop.xlane.xlu0 %1609
    %v1611 = vrcp.pop 32.0
    %v1612 = vmul.f32 %v1601, %v1611
    %v1613 = vmul.f32 %v1604, %v1611
    %v1614 = vmul.f32 %v1607, %v1611
    %v1615 = vmul.f32 %v1610, %v1611
    %v1616 = vsub.f32 %v1593, %v1612
    %v1617 = vsub.f32 %v1594, %v1613
    %v1618 = vsub.f32 %v1595, %v1614
    %v1619 = vsub.f32 %v1596, %v1615
    %v1620 = vmul.f32 %v1616, %v1616
    %v1621 = vmul.f32 %v1617, %v1617
    %v1622 = vmul.f32 %v1618, %v1618
    %v1623 = vmul.f32 %v1619, %v1619
    %v1624 = vsel %vm427, %v1620, 0.0
    %1625 = vadd.xlane.f32.xlu0 %v1624
    %v1626 = vpop.xlane.xlu0 %1625
    %v1627 = vsel %vm427, %v1621, 0.0
    %1628 = vadd.xlane.f32.xlu0 %v1627
    %v1629 = vpop.xlane.xlu0 %1628
    %v1630 = vsel %vm427, %v1622, 0.0
    %1631 = vadd.xlane.f32.xlu0 %v1630
    %v1632 = vpop.xlane.xlu0 %1631
    %v1633 = vsel %vm427, %v1623, 0.0
    %1634 = vadd.xlane.f32.xlu0 %v1633
    %v1635 = vpop.xlane.xlu0 %1634
    %v1636 = vmul.f32 %v1626, %v1611
    %v1637 = vmul.f32 %v1629, %v1611
    %v1638 = vmul.f32 %v1632, %v1611
    %v1639 = vmul.f32 %v1635, %v1611
    %v1640 = vadd.f32 %v1636, 1e-05
    %v1641 = vadd.f32 %v1637, 1e-05
    %v1642 = vadd.f32 %v1638, 1e-05
    %v1643 = vadd.f32 %v1639, 1e-05
    %v1644 = vrsqrt.pop %v1640
    %v1645 = vrsqrt.pop %v1641
    %v1646 = vrsqrt.pop %v1642
    %v1647 = vrsqrt.pop %v1643
    %v1648 = vmul.f32 %v1616, %v1644
    %v1649 = vmul.f32 %v1617, %v1645
    %v1650 = vmul.f32 %v1618, %v1646
    %v1651 = vmul.f32 %v1619, %v1647
    %v1653 = vlaneseq
    %v1654 = vshrl.u32 %v1653, 7
    %v1655 = vsub.s32 0, %v1654
    %v1656 = vrot.slane %v1597, %v1655
    %v1658 = vmul.f32 %v1648, %v1656
    %v1659 = vmul.f32 %v1649, %v1656
    %v1660 = vmul.f32 %v1650, %v1656
    %v1661 = vmul.f32 %v1651, %v1656
    %v1663 = vlaneseq
    %v1664 = vshrl.u32 %v1663, 7
    %v1665 = vsub.s32 0, %v1664
    %v1666 = vrot.slane %v1598, %v1665
    %v1668 = vadd.f32 %v1658, %v1666
    %v1669 = vadd.f32 %v1659, %v1666
    %v1670 = vadd.f32 %v1660, %v1666
    %v1671 = vadd.f32 %v1661, %v1666
    %v1672 = vpack.c.bf16 %v1669, %v1668
    %v1673 = vpack.c.bf16 %v1671, %v1670
    %v1674 = vld [vmem:[%s16] sm:$0xf]
    %v1675 = vld [vmem:[%s16 + $0x4] sm:$0xf]
    %v1676 = vld [vmem:[%s16 + $0x8] sm:$0xf]
    %v1677 = vld [vmem:[%s16 + $0xc] sm:$0xf]
    %v1678 = vld [vmem:[%s17] sm:$0x1]
    %v1680 = vlaneseq
    %v1681 = vshrl.u32 %v1680, 7
    %v1682 = vsub.s32 0, %v1681
    %v1683 = vrot.slane %v1678, %v1682
    %v1689 = vunpack.c.l.b16 %v1674
    %v1690 = vunpack.c.l.b16 %v1675
    %v1691 = vunpack.c.l.b16 %v1676
    %v1692 = vunpack.c.l.b16 %v1677
    %v1693 = vpack.c.b16 %v1690, %v1689
    %v1694 = vpack.c.b16 %v1692, %v1691
    %v1698 = vsel %vm427, %v1672, 0
    %v1701 = vsel %vm427, %v1673, 0
    %1703 = vmatprep.subr.bf16.mxu0 0
    %1704 = vmatpush1.bf16.msra.mxu0 %v1693
    %1705 = vmatprep.subr.bf16.mxu0 0
    %1706 = vmatpush1.bf16.msra.mxu0 %v1694
    %1707 = vmatprep.subr.bf16.mxu0 0
    %1708 = vmatpush1.bf16.msra.mxu0 0
    %1709 = vmatprep.subr.bf16.mxu0 0
    %1710 = vmatpush1.bf16.msra.mxu0 0
    %1711 = vmatprep.subr.bf16.mxu0 0
    %1712 = vmatpush1.bf16.msra.mxu0 0
    %1713 = vmatprep.subr.bf16.mxu0 0
    %1714 = vmatpush1.bf16.msra.mxu0 0
    %1715 = vmatprep.subr.bf16.mxu0 0
    %1716 = vmatpush1.bf16.msra.mxu0 0
    %1717 = vmatprep.subr.bf16.mxu0 0
    %1718 = vmatpush1.bf16.msra.mxu0 0
    %1719 = vmatprep.subr.bf16.mxu0 0
    %1720 = vmatpush1.bf16.msra.mxu0 0
    %1721 = vmatprep.subr.bf16.mxu0 0
    %1722 = vmatpush1.bf16.msra.mxu0 0
    %1723 = vmatprep.subr.bf16.mxu0 0
    %1724 = vmatpush1.bf16.msra.mxu0 0
    %1725 = vmatprep.subr.bf16.mxu0 0
    %1726 = vmatpush1.bf16.msra.mxu0 0
    %1727 = vmatprep.subr.bf16.mxu0 0
    %1728 = vmatpush1.bf16.msra.mxu0 0
    %1729 = vmatprep.subr.bf16.mxu0 0
    %1730 = vmatpush1.bf16.msra.mxu0 0
    %1731 = vmatprep.subr.bf16.mxu0 0
    %1732 = vmatpush1.bf16.msra.mxu0 0
    %1733 = vmatprep.subr.bf16.mxu0 0
    %1734 = vmatpush1.bf16.msra.mxu0 0
    %1735 = vmatprep.mubr.bf16.mxu0 0
    %1736 = vmatmul.mubr.bf16.gmra.mrb[0].mxu0 %v1698
    %v1737 = vpop.f32.mrb[0].mxu0
    %v1738 = vadd.f32 %v1683, %v1737
    %v1739 = vpop.f32.mrb[0].mxu0
    %v1740 = vpop.f32.mrb[0].mxu0
    %v1741 = vadd.f32 %v1683, %v1740
    %v1742 = vpop.f32.mrb[0].mxu0
    %1743 = vmatprep.mubr.bf16.mxu0 0
    %1744 = vmatmul.mubr.bf16.gmra.mrb[0].mxu0 %v1701
    %v1745 = vpop.f32.mrb[0].mxu0
    %v1746 = vadd.f32 %v1683, %v1745
    %v1747 = vpop.f32.mrb[0].mxu0
    %v1748 = vpop.f32.mrb[0].mxu0
    %v1749 = vadd.f32 %v1683, %v1748
    %v1750 = vpop.f32.mrb[0].mxu0
    %1751 = vdwg.mxu0
    %v1752 = vmax.f32 %v1738, 0.0
    %v1753 = vmax.f32 %v1741, 0.0
    %v1754 = vmax.f32 %v1746, 0.0
    %v1755 = vmax.f32 %v1749, 0.0
    %v1756 = vpack.c.bf16 %v1753, %v1752
    %v1757 = vpack.c.bf16 %v1755, %v1754
    %v1758 = vld [vmem:[%s18] sm:$0xf]
    %v1759 = vld [vmem:[%s18 + $0x4] sm:$0xf]
    %v1760 = vld [vmem:[%s18 + $0x8] sm:$0xf]
    %v1761 = vld [vmem:[%s18 + $0xc] sm:$0xf]
    %v1762 = vld [vmem:[%s18 + $0x10] sm:$0xf]
    %v1763 = vld [vmem:[%s18 + $0x14] sm:$0xf]
    %v1764 = vld [vmem:[%s18 + $0x18] sm:$0xf]
    %v1765 = vld [vmem:[%s18 + $0x1c] sm:$0xf]
    %v1766 = vld [vmem:[%s19] sm:$0x1]
    %v1768 = vlaneseq
    %v1769 = vshrl.u32 %v1768, 7
    %v1770 = vsub.s32 0, %v1769
    %v1771 = vrot.slane %v1766, %v1770
    %v1781 = vunpack.c.l.b16 %v1758
    %v1782 = vunpack.c.l.b16 %v1759
    %v1783 = vunpack.c.l.b16 %v1760
    %v1784 = vunpack.c.l.b16 %v1761
    %v1785 = vunpack.c.l.b16 %v1762
    %v1786 = vunpack.c.l.b16 %v1763
    %v1787 = vunpack.c.l.b16 %v1764
    %v1788 = vunpack.c.l.b16 %v1765
    %v1789 = vpack.c.b16 %v1782, %v1781
    %v1790 = vpack.c.b16 %v1784, %v1783
    %v1791 = vpack.c.b16 %v1786, %v1785
    %v1792 = vpack.c.b16 %v1788, %v1787
    %v1798 = vsel %vm196, %v1756, 0
    %v1801 = vsel %vm196, %v1757, 0
    %1803 = vmatprep.subr.bf16.mxu0 0
    %1804 = vmatpush1.bf16.msra.mxu0 %v1789
    %1805 = vmatprep.subr.bf16.mxu0 0
    %1806 = vmatpush1.bf16.msra.mxu0 %v1790
    %1807 = vmatprep.subr.bf16.mxu0 0
    %1808 = vmatpush1.bf16.msra.mxu0 %v1791
    %1809 = vmatprep.subr.bf16.mxu0 0
    %1810 = vmatpush1.bf16.msra.mxu0 %v1792
    %1811 = vmatprep.subr.bf16.mxu0 0
    %1812 = vmatpush1.bf16.msra.mxu0 0
    %1813 = vmatprep.subr.bf16.mxu0 0
    %1814 = vmatpush1.bf16.msra.mxu0 0
    %1815 = vmatprep.subr.bf16.mxu0 0
    %1816 = vmatpush1.bf16.msra.mxu0 0
    %1817 = vmatprep.subr.bf16.mxu0 0
    %1818 = vmatpush1.bf16.msra.mxu0 0
    %1819 = vmatprep.subr.bf16.mxu0 0
    %1820 = vmatpush1.bf16.msra.mxu0 0
    %1821 = vmatprep.subr.bf16.mxu0 0
    %1822 = vmatpush1.bf16.msra.mxu0 0
    %1823 = vmatprep.subr.bf16.mxu0 0
    %1824 = vmatpush1.bf16.msra.mxu0 0
    %1825 = vmatprep.subr.bf16.mxu0 0
    %1826 = vmatpush1.bf16.msra.mxu0 0
    %1827 = vmatprep.subr.bf16.mxu0 0
    %1828 = vmatpush1.bf16.msra.mxu0 0
    %1829 = vmatprep.subr.bf16.mxu0 0
    %1830 = vmatpush1.bf16.msra.mxu0 0
    %1831 = vmatprep.subr.bf16.mxu0 0
    %1832 = vmatpush1.bf16.msra.mxu0 0
    %1833 = vmatprep.subr.bf16.mxu0 0
    %1834 = vmatpush1.bf16.msra.mxu0 0
    %1835 = vmatprep.mubr.bf16.mxu0 0
    %1836 = vmatmul.mubr.bf16.gmra.mrb[0].mxu0 %v1798
    %v1837 = vpop.f32.mrb[0].mxu0
    %v1838 = vadd.f32 %v1771, %v1837
    %v1839 = vpop.f32.mrb[0].mxu0
    %v1840 = vpop.f32.mrb[0].mxu0
    %v1841 = vadd.f32 %v1771, %v1840
    %v1842 = vpop.f32.mrb[0].mxu0
    %1843 = vmatprep.mubr.bf16.mxu0 0
    %1844 = vmatmul.mubr.bf16.gmra.mrb[0].mxu0 %v1801
    %v1845 = vpop.f32.mrb[0].mxu0
    %v1846 = vadd.f32 %v1771, %v1845
    %v1847 = vpop.f32.mrb[0].mxu0
    %v1848 = vpop.f32.mrb[0].mxu0
    %v1849 = vadd.f32 %v1771, %v1848
    %v1850 = vpop.f32.mrb[0].mxu0
    %1851 = vdwg.mxu0
    %v1852 = vadd.f32 %v1668, %v1838
    %v1853 = vadd.f32 %v1669, %v1841
    %v1854 = vadd.f32 %v1670, %v1846
    %v1855 = vadd.f32 %v1671, %v1849
    %v1856 = vld [vmem:[%s14] sm:$0x1]
    %v1857 = vld [vmem:[%s15] sm:$0x1]
    %v1858 = vsel %vm427, %v1852, 0.0
    %1859 = vadd.xlane.f32.xlu0 %v1858
    %v1860 = vpop.xlane.xlu0 %1859
    %v1861 = vsel %vm427, %v1853, 0.0
    %1862 = vadd.xlane.f32.xlu0 %v1861
    %v1863 = vpop.xlane.xlu0 %1862
    %v1864 = vsel %vm427, %v1854, 0.0
    %1865 = vadd.xlane.f32.xlu0 %v1864
    %v1866 = vpop.xlane.xlu0 %1865
    %v1867 = vsel %vm427, %v1855, 0.0
    %1868 = vadd.xlane.f32.xlu0 %v1867
    %v1869 = vpop.xlane.xlu0 %1868
    %v1870 = vmul.f32 %v1860, %v1611
    %v1871 = vmul.f32 %v1863, %v1611
    %v1872 = vmul.f32 %v1866, %v1611
    %v1873 = vmul.f32 %v1869, %v1611
    %v1874 = vsub.f32 %v1852, %v1870
    %v1875 = vsub.f32 %v1853, %v1871
    %v1876 = vsub.f32 %v1854, %v1872
    %v1877 = vsub.f32 %v1855, %v1873
    %v1878 = vmul.f32 %v1874, %v1874
    %v1879 = vmul.f32 %v1875, %v1875
    %v1880 = vmul.f32 %v1876, %v1876
    %v1881 = vmul.f32 %v1877, %v1877
    %v1882 = vsel %vm427, %v1878, 0.0
    %1883 = vadd.xlane.f32.xlu0 %v1882
    %v1884 = vpop.xlane.xlu0 %1883
    %v1885 = vsel %vm427, %v1879, 0.0
    %1886 = vadd.xlane.f32.xlu0 %v1885
    %v1887 = vpop.xlane.xlu0 %1886
    %v1888 = vsel %vm427, %v1880, 0.0
    %1889 = vadd.xlane.f32.xlu0 %v1888
    %v1890 = vpop.xlane.xlu0 %1889
    %v1891 = vsel %vm427, %v1881, 0.0
    %1892 = vadd.xlane.f32.xlu0 %v1891
    %v1893 = vpop.xlane.xlu0 %1892
    %v1894 = vmul.f32 %v1884, %v1611
    %v1895 = vmul.f32 %v1887, %v1611
    %v1896 = vmul.f32 %v1890, %v1611
    %v1897 = vmul.f32 %v1893, %v1611
    %v1898 = vadd.f32 %v1894, 1e-05
    %v1899 = vadd.f32 %v1895, 1e-05
    %v1900 = vadd.f32 %v1896, 1e-05
    %v1901 = vadd.f32 %v1897, 1e-05
    %v1902 = vrsqrt.pop %v1898
    %v1903 = vrsqrt.pop %v1899
    %v1904 = vrsqrt.pop %v1900
    %v1905 = vrsqrt.pop %v1901
    %v1906 = vmul.f32 %v1874, %v1902
    %v1907 = vmul.f32 %v1875, %v1903
    %v1908 = vmul.f32 %v1876, %v1904
    %v1909 = vmul.f32 %v1877, %v1905
    %v1911 = vlaneseq
    %v1912 = vshrl.u32 %v1911, 7
    %v1913 = vsub.s32 0, %v1912
    %v1914 = vrot.slane %v1856, %v1913
    %v1916 = vmul.f32 %v1906, %v1914
    %v1917 = vmul.f32 %v1907, %v1914
    %v1918 = vmul.f32 %v1908, %v1914
    %v1919 = vmul.f32 %v1909, %v1914
    %v1921 = vlaneseq
    %v1922 = vshrl.u32 %v1921, 7
    %v1923 = vsub.s32 0, %v1922
    %v1924 = vrot.slane %v1857, %v1923
    %v1926 = vadd.f32 %v1916, %v1924
    %v1927 = vadd.f32 %v1917, %v1924
    %v1928 = vadd.f32 %v1918, %v1924
    %v1929 = vadd.f32 %v1919, %v1924
    %v1930 = vpack.c.bf16 %v1927, %v1926
    %v1931 = vpack.c.bf16 %v1929, %v1928
    %s1932 = scalar_lea.vmem %s8, 16
    %v1933 = vld [vmem:[%s1932] sm:$0xf]
    %v1934 = vld [vmem:[%s1932 + $0x4] sm:$0xf]
    %v1935 = vld [vmem:[%s1932 + $0x8] sm:$0xf]
    %v1936 = vld [vmem:[%s1932 + $0xc] sm:$0xf]
    %s1937 = scalar_lea.vmem %s9, 1
    %v1938 = vld [vmem:[%s1937] sm:$0x1]
    %v1940 = vlaneseq
    %v1941 = vshrl.u32 %v1940, 7
    %v1942 = vsub.s32 0, %v1941
    %v1943 = vrot.slane %v1938, %v1942
    %v1949 = vunpack.c.l.b16 %v1933
    %v1950 = vunpack.c.l.b16 %v1934
    %v1951 = vunpack.c.l.b16 %v1935
    %v1952 = vunpack.c.l.b16 %v1936
    %v1953 = vpack.c.b16 %v1950, %v1949
    %v1954 = vpack.c.b16 %v1952, %v1951
    %v1958 = vsel %vm427, %v1930, 0
    %v1961 = vsel %vm427, %v1931, 0
    %1963 = vmatprep.subr.bf16.mxu0 0
    %1964 = vmatpush1.bf16.msra.mxu0 %v1953
    %1965 = vmatprep.subr.bf16.mxu0 0
    %1966 = vmatpush1.bf16.msra.mxu0 %v1954
    %1967 = vmatprep.subr.bf16.mxu0 0
    %1968 = vmatpush1.bf16.msra.mxu0 0
    %1969 = vmatprep.subr.bf16.mxu0 0
    %1970 = vmatpush1.bf16.msra.mxu0 0
    %1971 = vmatprep.subr.bf16.mxu0 0
    %1972 = vmatpush1.bf16.msra.mxu0 0
    %1973 = vmatprep.subr.bf16.mxu0 0
    %1974 = vmatpush1.bf16.msra.mxu0 0
    %1975 = vmatprep.subr.bf16.mxu0 0
    %1976 = vmatpush1.bf16.msra.mxu0 0
    %1977 = vmatprep.subr.bf16.mxu0 0
    %1978 = vmatpush1.bf16.msra.mxu0 0
    %1979 = vmatprep.subr.bf16.mxu0 0
    %1980 = vmatpush1.bf16.msra.mxu0 0
    %1981 = vmatprep.subr.bf16.mxu0 0
    %1982 = vmatpush1.bf16.msra.mxu0 0
    %1983 = vmatprep.subr.bf16.mxu0 0
    %1984 = vmatpush1.bf16.msra.mxu0 0
    %1985 = vmatprep.subr.bf16.mxu0 0
    %1986 = vmatpush1.bf16.msra.mxu0 0
    %1987 = vmatprep.subr.bf16.mxu0 0
    %1988 = vmatpush1.bf16.msra.mxu0 0
    %1989 = vmatprep.subr.bf16.mxu0 0
    %1990 = vmatpush1.bf16.msra.mxu0 0
    %1991 = vmatprep.subr.bf16.mxu0 0
    %1992 = vmatpush1.bf16.msra.mxu0 0
    %1993 = vmatprep.subr.bf16.mxu0 0
    %1994 = vmatpush1.bf16.msra.mxu0 0
    %1995 = vmatprep.mubr.bf16.mxu0 0
    %1996 = vmatmul.mubr.bf16.gmra.mrb[0].mxu0 %v1958
    %v1997 = vpop.f32.mrb[0].mxu0
    %v1998 = vadd.f32 %v1943, %v1997
    %v1999 = vpop.f32.mrb[0].mxu0
    %v2000 = vpop.f32.mrb[0].mxu0
    %v2001 = vadd.f32 %v1943, %v2000
    %v2002 = vpop.f32.mrb[0].mxu0
    %2003 = vmatprep.mubr.bf16.mxu0 0
    %2004 = vmatmul.mubr.bf16.gmra.mrb[0].mxu0 %v1961
    %v2005 = vpop.f32.mrb[0].mxu0
    %v2006 = vadd.f32 %v1943, %v2005
    %v2007 = vpop.f32.mrb[0].mxu0
    %v2008 = vpop.f32.mrb[0].mxu0
    %v2009 = vadd.f32 %v1943, %v2008
    %v2010 = vpop.f32.mrb[0].mxu0
    %2011 = vdwg.mxu0
    %v2012 = vpack.c.bf16 %v2001, %v1998
    %v2013 = vpack.c.bf16 %v2009, %v2006
    %2015 = vrot.lane.b32.xlu0 %v2012, 96
    %v2016 = vpop.permute.xlu0 %2015
    %v2018 = vsel %vm91, %v2012, 0
    %v2021 = vsel %vm91, %v2016, 0
    %2023 = vmatprep.subr.bf16.mxu0 0
    %2024 = vmatpush1.bf16.xpose.msra.mxu0 %v2021
    %2025 = vmatprep.subr.bf16.mxu0 0
    %2026 = vmatpush1.bf16.xpose.msra.mxu0 0
    %2027 = vmatprep.subr.bf16.mxu0 0
    %2028 = vmatpush1.bf16.xpose.msra.mxu0 0
    %2029 = vmatprep.subr.bf16.mxu0 0
    %2030 = vmatpush1.bf16.xpose.msra.mxu0 0
    %2031 = vmatprep.subr.bf16.mxu0 0
    %2032 = vmatpush1.bf16.xpose.msra.mxu0 0
    %2033 = vmatprep.subr.bf16.mxu0 0
    %2034 = vmatpush1.bf16.xpose.msra.mxu0 0
    %2035 = vmatprep.subr.bf16.mxu0 0
    %2036 = vmatpush1.bf16.xpose.msra.mxu0 0
    %2037 = vmatprep.subr.bf16.mxu0 0
    %2038 = vmatpush1.bf16.xpose.msra.mxu0 0
    %2039 = vmatprep.subr.bf16.mxu0 0
    %2040 = vmatpush1.bf16.xpose.msra.mxu0 0
    %2041 = vmatprep.subr.bf16.mxu0 0
    %2042 = vmatpush1.bf16.xpose.msra.mxu0 0
    %2043 = vmatprep.subr.bf16.mxu0 0
    %2044 = vmatpush1.bf16.xpose.msra.mxu0 0
    %2045 = vmatprep.subr.bf16.mxu0 0
    %2046 = vmatpush1.bf16.xpose.msra.mxu0 0
    %2047 = vmatprep.subr.bf16.mxu0 0
    %2048 = vmatpush1.bf16.xpose.msra.mxu0 0
    %2049 = vmatprep.subr.bf16.mxu0 0
    %2050 = vmatpush1.bf16.xpose.msra.mxu0 0
    %2051 = vmatprep.subr.bf16.mxu0 0
    %2052 = vmatpush1.bf16.xpose.msra.mxu0 0
    %2053 = vmatprep.subr.bf16.mxu0 0
    %2054 = vmatpush1.bf16.xpose.msra.mxu0 0
    %2055 = vmatprep.mubr.bf16.mxu0 0
    %2056 = vmatmul.mubr.bf16.gmra.mrb[0].mxu0 %v2018
    %v2057 = vpop.f32.mrb[0].mxu0
    %v2058 = vadd.f32 0.0, %v2057
    %v2059 = vpop.f32.mrb[0].mxu0
    %v2060 = vpop.f32.mrb[0].mxu0
    %v2061 = vadd.f32 0.0, %v2060
    %v2062 = vpop.f32.mrb[0].mxu0
    %2063 = vdwg.mxu0
    %2065 = vrot.lane.b32.xlu0 %v2013, 96
    %v2066 = vpop.permute.xlu0 %2065
    %v2068 = vsel %vm91, %v2013, 0
    %v2071 = vsel %vm91, %v2066, 0
    %2073 = vmatprep.subr.bf16.mxu0 0
    %2074 = vmatpush1.bf16.xpose.msra.mxu0 %v2071
    %2075 = vmatprep.subr.bf16.mxu0 0
    %2076 = vmatpush1.bf16.xpose.msra.mxu0 0
    %2077 = vmatprep.subr.bf16.mxu0 0
    %2078 = vmatpush1.bf16.xpose.msra.mxu0 0
    %2079 = vmatprep.subr.bf16.mxu0 0
    %2080 = vmatpush1.bf16.xpose.msra.mxu0 0
    %2081 = vmatprep.subr.bf16.mxu0 0
    %2082 = vmatpush1.bf16.xpose.msra.mxu0 0
    %2083 = vmatprep.subr.bf16.mxu0 0
    %2084 = vmatpush1.bf16.xpose.msra.mxu0 0
    %2085 = vmatprep.subr.bf16.mxu0 0
    %2086 = vmatpush1.bf16.xpose.msra.mxu0 0
    %2087 = vmatprep.subr.bf16.mxu0 0
    %2088 = vmatpush1.bf16.xpose.msra.mxu0 0
    %2089 = vmatprep.subr.bf16.mxu0 0
    %2090 = vmatpush1.bf16.xpose.msra.mxu0 0
    %2091 = vmatprep.subr.bf16.mxu0 0
    %2092 = vmatpush1.bf16.xpose.msra.mxu0 0
    %2093 = vmatprep.subr.bf16.mxu0 0
    %2094 = vmatpush1.bf16.xpose.msra.mxu0 0
    %2095 = vmatprep.subr.bf16.mxu0 0
    %2096 = vmatpush1.bf16.xpose.msra.mxu0 0
    %2097 = vmatprep.subr.bf16.mxu0 0
    %2098 = vmatpush1.bf16.xpose.msra.mxu0 0
    %2099 = vmatprep.subr.bf16.mxu0 0
    %2100 = vmatpush1.bf16.xpose.msra.mxu0 0
    %2101 = vmatprep.subr.bf16.mxu0 0
    %2102 = vmatpush1.bf16.xpose.msra.mxu0 0
    %2103 = vmatprep.subr.bf16.mxu0 0
    %2104 = vmatpush1.bf16.xpose.msra.mxu0 0
    %2105 = vmatprep.mubr.bf16.mxu0 0
    %2106 = vmatmul.mubr.bf16.gmra.mrb[0].mxu0 %v2068
    %v2107 = vpop.f32.mrb[0].mxu0
    %v2108 = vadd.f32 0.0, %v2107
    %v2109 = vpop.f32.mrb[0].mxu0
    %v2110 = vpop.f32.mrb[0].mxu0
    %v2111 = vadd.f32 0.0, %v2110
    %v2112 = vpop.f32.mrb[0].mxu0
    %2113 = vdwg.mxu0
    %v2114 = vsel %vm585, %v2058, -inf
    %2115 = vmax.xlane.f32.xlu0 %v2114
    %v2116 = vpop.xlane.xlu0 %2115
    %v2117 = vsel %vm585, %v2061, -inf
    %2118 = vmax.xlane.f32.xlu0 %v2117
    %v2119 = vpop.xlane.xlu0 %2118
    %v2120 = vsel %vm585, %v2108, -inf
    %2121 = vmax.xlane.f32.xlu0 %v2120
    %v2122 = vpop.xlane.xlu0 %2121
    %v2123 = vsel %vm585, %v2111, -inf
    %2124 = vmax.xlane.f32.xlu0 %v2123
    %v2125 = vpop.xlane.xlu0 %2124
    %v2126 = vsub.f32 %v2058, %v2116
    %v2127 = vsub.f32 %v2061, %v2119
    %v2128 = vsub.f32 %v2108, %v2122
    %v2129 = vsub.f32 %v2111, %v2125
    %v2130 = vmul.f32 %v2126, 1.442695
    %v2131 = vpow.pop %v2130
    %v2132 = vmul.f32 %v2127, 1.442695
    %v2133 = vpow.pop %v2132
    %v2134 = vmul.f32 %v2128, 1.442695
    %v2135 = vpow.pop %v2134
    %v2136 = vmul.f32 %v2129, 1.442695
    %v2137 = vpow.pop %v2136
    %v2138 = vsel %vm585, %v2131, 0.0
    %2139 = vadd.xlane.f32.xlu0 %v2138
    %v2140 = vpop.xlane.xlu0 %2139
    %v2141 = vsel %vm585, %v2133, 0.0
    %2142 = vadd.xlane.f32.xlu0 %v2141
    %v2143 = vpop.xlane.xlu0 %2142
    %v2144 = vsel %vm585, %v2135, 0.0
    %2145 = vadd.xlane.f32.xlu0 %v2144
    %v2146 = vpop.xlane.xlu0 %2145
    %v2147 = vsel %vm585, %v2137, 0.0
    %2148 = vadd.xlane.f32.xlu0 %v2147
    %v2149 = vpop.xlane.xlu0 %2148
    %v2150 = vrcp.pop %v2140
    %v2151 = vrcp.pop %v2143
    %v2152 = vrcp.pop %v2146
    %v2153 = vrcp.pop %v2149
    %v2154 = vmul.f32 %v2131, %v2150
    %v2155 = vmul.f32 %v2133, %v2151
    %v2156 = vmul.f32 %v2135, %v2152
    %v2157 = vmul.f32 %v2137, %v2153
    %v2158 = vpack.c.bf16 %v2155, %v2154
    %v2159 = vpack.c.bf16 %v2157, %v2156
    %2160 = vrot.lane.b32.xlu0 %v2012, 64
    %v2161 = vpop.permute.xlu0 %2160
    %v2164 = vsel %vm585, %v2158, 0
    %2166 = vmatprep.subr.bf16.mxu0 0
    %2167 = vmatpush1.bf16.msra.mxu0 %v2161
    %2168 = vmatprep.subr.bf16.mxu0 0
    %2169 = vmatpush1.bf16.msra.mxu0 0
    %2170 = vmatprep.subr.bf16.mxu0 0
    %2171 = vmatpush1.bf16.msra.mxu0 0
    %2172 = vmatprep.subr.bf16.mxu0 0
    %2173 = vmatpush1.bf16.msra.mxu0 0
    %2174 = vmatprep.subr.bf16.mxu0 0
    %2175 = vmatpush1.bf16.msra.mxu0 0
    %2176 = vmatprep.subr.bf16.mxu0 0
    %2177 = vmatpush1.bf16.msra.mxu0 0
    %2178 = vmatprep.subr.bf16.mxu0 0
    %2179 = vmatpush1.bf16.msra.mxu0 0
    %2180 = vmatprep.subr.bf16.mxu0 0
    %2181 = vmatpush1.bf16.msra.mxu0 0
    %2182 = vmatprep.subr.bf16.mxu0 0
    %2183 = vmatpush1.bf16.msra.mxu0 0
    %2184 = vmatprep.subr.bf16.mxu0 0
    %2185 = vmatpush1.bf16.msra.mxu0 0
    %2186 = vmatprep.subr.bf16.mxu0 0
    %2187 = vmatpush1.bf16.msra.mxu0 0
    %2188 = vmatprep.subr.bf16.mxu0 0
    %2189 = vmatpush1.bf16.msra.mxu0 0
    %2190 = vmatprep.subr.bf16.mxu0 0
    %2191 = vmatpush1.bf16.msra.mxu0 0
    %2192 = vmatprep.subr.bf16.mxu0 0
    %2193 = vmatpush1.bf16.msra.mxu0 0
    %2194 = vmatprep.subr.bf16.mxu0 0
    %2195 = vmatpush1.bf16.msra.mxu0 0
    %2196 = vmatprep.subr.bf16.mxu0 0
    %2197 = vmatpush1.bf16.msra.mxu0 0
    %2198 = vmatprep.mubr.bf16.mxu0 0
    %2199 = vmatmul.mubr.bf16.gmra.mrb[0].mxu0 %v2164
    %v2200 = vpop.f32.mrb[0].mxu0
    %v2201 = vadd.f32 0.0, %v2200
    %v2202 = vpop.f32.mrb[0].mxu0
    %v2203 = vpop.f32.mrb[0].mxu0
    %v2204 = vadd.f32 0.0, %v2203
    %v2205 = vpop.f32.mrb[0].mxu0
    %2206 = vdwg.mxu0
    %2207 = vrot.lane.b32.xlu0 %v2013, 64
    %v2208 = vpop.permute.xlu0 %2207
    %v2211 = vsel %vm585, %v2159, 0
    %2213 = vmatprep.subr.bf16.mxu0 0
    %2214 = vmatpush1.bf16.msra.mxu0 %v2208
    %2215 = vmatprep.subr.bf16.mxu0 0
    %2216 = vmatpush1.bf16.msra.mxu0 0
    %2217 = vmatprep.subr.bf16.mxu0 0
    %2218 = vmatpush1.bf16.msra.mxu0 0
    %2219 = vmatprep.subr.bf16.mxu0 0
    %2220 = vmatpush1.bf16.msra.mxu0 0
    %2221 = vmatprep.subr.bf16.mxu0 0
    %2222 = vmatpush1.bf16.msra.mxu0 0
    %2223 = vmatprep.subr.bf16.mxu0 0
    %2224 = vmatpush1.bf16.msra.mxu0 0
    %2225 = vmatprep.subr.bf16.mxu0 0
    %2226 = vmatpush1.bf16.msra.mxu0 0
    %2227 = vmatprep.subr.bf16.mxu0 0
    %2228 = vmatpush1.bf16.msra.mxu0 0
    %2229 = vmatprep.subr.bf16.mxu0 0
    %2230 = vmatpush1.bf16.msra.mxu0 0
    %2231 = vmatprep.subr.bf16.mxu0 0
    %2232 = vmatpush1.bf16.msra.mxu0 0
    %2233 = vmatprep.subr.bf16.mxu0 0
    %2234 = vmatpush1.bf16.msra.mxu0 0
    %2235 = vmatprep.subr.bf16.mxu0 0
    %2236 = vmatpush1.bf16.msra.mxu0 0
    %2237 = vmatprep.subr.bf16.mxu0 0
    %2238 = vmatpush1.bf16.msra.mxu0 0
    %2239 = vmatprep.subr.bf16.mxu0 0
    %2240 = vmatpush1.bf16.msra.mxu0 0
    %2241 = vmatprep.subr.bf16.mxu0 0
    %2242 = vmatpush1.bf16.msra.mxu0 0
    %2243 = vmatprep.subr.bf16.mxu0 0
    %2244 = vmatpush1.bf16.msra.mxu0 0
    %2245 = vmatprep.mubr.bf16.mxu0 0
    %2246 = vmatmul.mubr.bf16.gmra.mrb[0].mxu0 %v2211
    %v2247 = vpop.f32.mrb[0].mxu0
    %v2248 = vadd.f32 0.0, %v2247
    %v2249 = vpop.f32.mrb[0].mxu0
    %v2250 = vpop.f32.mrb[0].mxu0
    %v2251 = vadd.f32 0.0, %v2250
    %v2252 = vpop.f32.mrb[0].mxu0
    %2253 = vdwg.mxu0
    %2254 = vrot.lane.b32.xlu0 %v2012, 120
    %v2255 = vpop.permute.xlu0 %2254
    %2256 = vrot.lane.b32.xlu0 %v2012, 88
    %v2257 = vpop.permute.xlu0 %2256
    %v2259 = vsel %vm91, %v2255, 0
    %v2262 = vsel %vm91, %v2257, 0
    %2264 = vmatprep.subr.bf16.mxu0 0
    %2265 = vmatpush1.bf16.xpose.msra.mxu0 %v2262
    %2266 = vmatprep.subr.bf16.mxu0 0
    %2267 = vmatpush1.bf16.xpose.msra.mxu0 0
    %2268 = vmatprep.subr.bf16.mxu0 0
    %2269 = vmatpush1.bf16.xpose.msra.mxu0 0
    %2270 = vmatprep.subr.bf16.mxu0 0
    %2271 = vmatpush1.bf16.xpose.msra.mxu0 0
    %2272 = vmatprep.subr.bf16.mxu0 0
    %2273 = vmatpush1.bf16.xpose.msra.mxu0 0
    %2274 = vmatprep.subr.bf16.mxu0 0
    %2275 = vmatpush1.bf16.xpose.msra.mxu0 0
    %2276 = vmatprep.subr.bf16.mxu0 0
    %2277 = vmatpush1.bf16.xpose.msra.mxu0 0
    %2278 = vmatprep.subr.bf16.mxu0 0
    %2279 = vmatpush1.bf16.xpose.msra.mxu0 0
    %2280 = vmatprep.subr.bf16.mxu0 0
    %2281 = vmatpush1.bf16.xpose.msra.mxu0 0
    %2282 = vmatprep.subr.bf16.mxu0 0
    %2283 = vmatpush1.bf16.xpose.msra.mxu0 0
    %2284 = vmatprep.subr.bf16.mxu0 0
    %2285 = vmatpush1.bf16.xpose.msra.mxu0 0
    %2286 = vmatprep.subr.bf16.mxu0 0
    %2287 = vmatpush1.bf16.xpose.msra.mxu0 0
    %2288 = vmatprep.subr.bf16.mxu0 0
    %2289 = vmatpush1.bf16.xpose.msra.mxu0 0
    %2290 = vmatprep.subr.bf16.mxu0 0
    %2291 = vmatpush1.bf16.xpose.msra.mxu0 0
    %2292 = vmatprep.subr.bf16.mxu0 0
    %2293 = vmatpush1.bf16.xpose.msra.mxu0 0
    %2294 = vmatprep.subr.bf16.mxu0 0
    %2295 = vmatpush1.bf16.xpose.msra.mxu0 0
    %2296 = vmatprep.mubr.bf16.mxu0 0
    %2297 = vmatmul.mubr.bf16.gmra.mrb[0].mxu0 %v2259
    %v2298 = vpop.f32.mrb[0].mxu0
    %v2299 = vadd.f32 0.0, %v2298
    %v2300 = vpop.f32.mrb[0].mxu0
    %v2301 = vpop.f32.mrb[0].mxu0
    %v2302 = vadd.f32 0.0, %v2301
    %v2303 = vpop.f32.mrb[0].mxu0
    %2304 = vdwg.mxu0
    %2305 = vrot.lane.b32.xlu0 %v2013, 120
    %v2306 = vpop.permute.xlu0 %2305
    %2307 = vrot.lane.b32.xlu0 %v2013, 88
    %v2308 = vpop.permute.xlu0 %2307
    %v2310 = vsel %vm91, %v2306, 0
    %v2313 = vsel %vm91, %v2308, 0
    %2315 = vmatprep.subr.bf16.mxu0 0
    %2316 = vmatpush1.bf16.xpose.msra.mxu0 %v2313
    %2317 = vmatprep.subr.bf16.mxu0 0
    %2318 = vmatpush1.bf16.xpose.msra.mxu0 0
    %2319 = vmatprep.subr.bf16.mxu0 0
    %2320 = vmatpush1.bf16.xpose.msra.mxu0 0
    %2321 = vmatprep.subr.bf16.mxu0 0
    %2322 = vmatpush1.bf16.xpose.msra.mxu0 0
    %2323 = vmatprep.subr.bf16.mxu0 0
    %2324 = vmatpush1.bf16.xpose.msra.mxu0 0
    %2325 = vmatprep.subr.bf16.mxu0 0
    %2326 = vmatpush1.bf16.xpose.msra.mxu0 0
    %2327 = vmatprep.subr.bf16.mxu0 0
    %2328 = vmatpush1.bf16.xpose.msra.mxu0 0
    %2329 = vmatprep.subr.bf16.mxu0 0
    %2330 = vmatpush1.bf16.xpose.msra.mxu0 0
    %2331 = vmatprep.subr.bf16.mxu0 0
    %2332 = vmatpush1.bf16.xpose.msra.mxu0 0
    %2333 = vmatprep.subr.bf16.mxu0 0
    %2334 = vmatpush1.bf16.xpose.msra.mxu0 0
    %2335 = vmatprep.subr.bf16.mxu0 0
    %2336 = vmatpush1.bf16.xpose.msra.mxu0 0
    %2337 = vmatprep.subr.bf16.mxu0 0
    %2338 = vmatpush1.bf16.xpose.msra.mxu0 0
    %2339 = vmatprep.subr.bf16.mxu0 0
    %2340 = vmatpush1.bf16.xpose.msra.mxu0 0
    %2341 = vmatprep.subr.bf16.mxu0 0
    %2342 = vmatpush1.bf16.xpose.msra.mxu0 0
    %2343 = vmatprep.subr.bf16.mxu0 0
    %2344 = vmatpush1.bf16.xpose.msra.mxu0 0
    %2345 = vmatprep.subr.bf16.mxu0 0
    %2346 = vmatpush1.bf16.xpose.msra.mxu0 0
    %2347 = vmatprep.mubr.bf16.mxu0 0
    %2348 = vmatmul.mubr.bf16.gmra.mrb[0].mxu0 %v2310
    %v2349 = vpop.f32.mrb[0].mxu0
    %v2350 = vadd.f32 0.0, %v2349
    %v2351 = vpop.f32.mrb[0].mxu0
    %v2352 = vpop.f32.mrb[0].mxu0
    %v2353 = vadd.f32 0.0, %v2352
    %v2354 = vpop.f32.mrb[0].mxu0
    %2355 = vdwg.mxu0
    %v2356 = vsel %vm585, %v2299, -inf
    %2357 = vmax.xlane.f32.xlu0 %v2356
    %v2358 = vpop.xlane.xlu0 %2357
    %v2359 = vsel %vm585, %v2302, -inf
    %2360 = vmax.xlane.f32.xlu0 %v2359
    %v2361 = vpop.xlane.xlu0 %2360
    %v2362 = vsel %vm585, %v2350, -inf
    %2363 = vmax.xlane.f32.xlu0 %v2362
    %v2364 = vpop.xlane.xlu0 %2363
    %v2365 = vsel %vm585, %v2353, -inf
    %2366 = vmax.xlane.f32.xlu0 %v2365
    %v2367 = vpop.xlane.xlu0 %2366
    %v2368 = vsub.f32 %v2299, %v2358
    %v2369 = vsub.f32 %v2302, %v2361
    %v2370 = vsub.f32 %v2350, %v2364
    %v2371 = vsub.f32 %v2353, %v2367
    %v2372 = vmul.f32 %v2368, 1.442695
    %v2373 = vpow.pop %v2372
    %v2374 = vmul.f32 %v2369, 1.442695
    %v2375 = vpow.pop %v2374
    %v2376 = vmul.f32 %v2370, 1.442695
    %v2377 = vpow.pop %v2376
    %v2378 = vmul.f32 %v2371, 1.442695
    %v2379 = vpow.pop %v2378
    %v2380 = vsel %vm585, %v2373, 0.0
    %2381 = vadd.xlane.f32.xlu0 %v2380
    %v2382 = vpop.xlane.xlu0 %2381
    %v2383 = vsel %vm585, %v2375, 0.0
    %2384 = vadd.xlane.f32.xlu0 %v2383
    %v2385 = vpop.xlane.xlu0 %2384
    %v2386 = vsel %vm585, %v2377, 0.0
    %2387 = vadd.xlane.f32.xlu0 %v2386
    %v2388 = vpop.xlane.xlu0 %2387
    %v2389 = vsel %vm585, %v2379, 0.0
    %2390 = vadd.xlane.f32.xlu0 %v2389
    %v2391 = vpop.xlane.xlu0 %2390
    %v2392 = vrcp.pop %v2382
    %v2393 = vrcp.pop %v2385
    %v2394 = vrcp.pop %v2388
    %v2395 = vrcp.pop %v2391
    %v2396 = vmul.f32 %v2373, %v2392
    %v2397 = vmul.f32 %v2375, %v2393
    %v2398 = vmul.f32 %v2377, %v2394
    %v2399 = vmul.f32 %v2379, %v2395
    %v2400 = vpack.c.bf16 %v2397, %v2396
    %v2401 = vpack.c.bf16 %v2399, %v2398
    %2402 = vrot.lane.b32.xlu0 %v2012, 56
    %v2403 = vpop.permute.xlu0 %2402
    %v2406 = vsel %vm585, %v2400, 0
    %2408 = vmatprep.subr.bf16.mxu0 0
    %2409 = vmatpush1.bf16.msra.mxu0 %v2403
    %2410 = vmatprep.subr.bf16.mxu0 0
    %2411 = vmatpush1.bf16.msra.mxu0 0
    %2412 = vmatprep.subr.bf16.mxu0 0
    %2413 = vmatpush1.bf16.msra.mxu0 0
    %2414 = vmatprep.subr.bf16.mxu0 0
    %2415 = vmatpush1.bf16.msra.mxu0 0
    %2416 = vmatprep.subr.bf16.mxu0 0
    %2417 = vmatpush1.bf16.msra.mxu0 0
    %2418 = vmatprep.subr.bf16.mxu0 0
    %2419 = vmatpush1.bf16.msra.mxu0 0
    %2420 = vmatprep.subr.bf16.mxu0 0
    %2421 = vmatpush1.bf16.msra.mxu0 0
    %2422 = vmatprep.subr.bf16.mxu0 0
    %2423 = vmatpush1.bf16.msra.mxu0 0
    %2424 = vmatprep.subr.bf16.mxu0 0
    %2425 = vmatpush1.bf16.msra.mxu0 0
    %2426 = vmatprep.subr.bf16.mxu0 0
    %2427 = vmatpush1.bf16.msra.mxu0 0
    %2428 = vmatprep.subr.bf16.mxu0 0
    %2429 = vmatpush1.bf16.msra.mxu0 0
    %2430 = vmatprep.subr.bf16.mxu0 0
    %2431 = vmatpush1.bf16.msra.mxu0 0
    %2432 = vmatprep.subr.bf16.mxu0 0
    %2433 = vmatpush1.bf16.msra.mxu0 0
    %2434 = vmatprep.subr.bf16.mxu0 0
    %2435 = vmatpush1.bf16.msra.mxu0 0
    %2436 = vmatprep.subr.bf16.mxu0 0
    %2437 = vmatpush1.bf16.msra.mxu0 0
    %2438 = vmatprep.subr.bf16.mxu0 0
    %2439 = vmatpush1.bf16.msra.mxu0 0
    %2440 = vmatprep.mubr.bf16.mxu0 0
    %2441 = vmatmul.mubr.bf16.gmra.mrb[0].mxu0 %v2406
    %v2442 = vpop.f32.mrb[0].mxu0
    %v2443 = vadd.f32 0.0, %v2442
    %v2444 = vpop.f32.mrb[0].mxu0
    %v2445 = vpop.f32.mrb[0].mxu0
    %v2446 = vadd.f32 0.0, %v2445
    %v2447 = vpop.f32.mrb[0].mxu0
    %2448 = vdwg.mxu0
    %2449 = vrot.lane.b32.xlu0 %v2013, 56
    %v2450 = vpop.permute.xlu0 %2449
    %v2453 = vsel %vm585, %v2401, 0
    %2455 = vmatprep.subr.bf16.mxu0 0
    %2456 = vmatpush1.bf16.msra.mxu0 %v2450
    %2457 = vmatprep.subr.bf16.mxu0 0
    %2458 = vmatpush1.bf16.msra.mxu0 0
    %2459 = vmatprep.subr.bf16.mxu0 0
    %2460 = vmatpush1.bf16.msra.mxu0 0
    %2461 = vmatprep.subr.bf16.mxu0 0
    %2462 = vmatpush1.bf16.msra.mxu0 0
    %2463 = vmatprep.subr.bf16.mxu0 0
    %2464 = vmatpush1.bf16.msra.mxu0 0
    %2465 = vmatprep.subr.bf16.mxu0 0
    %2466 = vmatpush1.bf16.msra.mxu0 0
    %2467 = vmatprep.subr.bf16.mxu0 0
    %2468 = vmatpush1.bf16.msra.mxu0 0
    %2469 = vmatprep.subr.bf16.mxu0 0
    %2470 = vmatpush1.bf16.msra.mxu0 0
    %2471 = vmatprep.subr.bf16.mxu0 0
    %2472 = vmatpush1.bf16.msra.mxu0 0
    %2473 = vmatprep.subr.bf16.mxu0 0
    %2474 = vmatpush1.bf16.msra.mxu0 0
    %2475 = vmatprep.subr.bf16.mxu0 0
    %2476 = vmatpush1.bf16.msra.mxu0 0
    %2477 = vmatprep.subr.bf16.mxu0 0
    %2478 = vmatpush1.bf16.msra.mxu0 0
    %2479 = vmatprep.subr.bf16.mxu0 0
    %2480 = vmatpush1.bf16.msra.mxu0 0
    %2481 = vmatprep.subr.bf16.mxu0 0
    %2482 = vmatpush1.bf16.msra.mxu0 0
    %2483 = vmatprep.subr.bf16.mxu0 0
    %2484 = vmatpush1.bf16.msra.mxu0 0
    %2485 = vmatprep.subr.bf16.mxu0 0
    %2486 = vmatpush1.bf16.msra.mxu0 0
    %2487 = vmatprep.mubr.bf16.mxu0 0
    %2488 = vmatmul.mubr.bf16.gmra.mrb[0].mxu0 %v2453
    %v2489 = vpop.f32.mrb[0].mxu0
    %v2490 = vadd.f32 0.0, %v2489
    %v2491 = vpop.f32.mrb[0].mxu0
    %v2492 = vpop.f32.mrb[0].mxu0
    %v2493 = vadd.f32 0.0, %v2492
    %v2494 = vpop.f32.mrb[0].mxu0
    %2495 = vdwg.mxu0
    %2496 = vrot.lane.b32.xlu0 %v2012, 112
    %v2497 = vpop.permute.xlu0 %2496
    %2498 = vrot.lane.b32.xlu0 %v2012, 80
    %v2499 = vpop.permute.xlu0 %2498
    %v2501 = vsel %vm91, %v2497, 0
    %v2504 = vsel %vm91, %v2499, 0
    %2506 = vmatprep.subr.bf16.mxu0 0
    %2507 = vmatpush1.bf16.xpose.msra.mxu0 %v2504
    %2508 = vmatprep.subr.bf16.mxu0 0
    %2509 = vmatpush1.bf16.xpose.msra.mxu0 0
    %2510 = vmatprep.subr.bf16.mxu0 0
    %2511 = vmatpush1.bf16.xpose.msra.mxu0 0
    %2512 = vmatprep.subr.bf16.mxu0 0
    %2513 = vmatpush1.bf16.xpose.msra.mxu0 0
    %2514 = vmatprep.subr.bf16.mxu0 0
    %2515 = vmatpush1.bf16.xpose.msra.mxu0 0
    %2516 = vmatprep.subr.bf16.mxu0 0
    %2517 = vmatpush1.bf16.xpose.msra.mxu0 0
    %2518 = vmatprep.subr.bf16.mxu0 0
    %2519 = vmatpush1.bf16.xpose.msra.mxu0 0
    %2520 = vmatprep.subr.bf16.mxu0 0
    %2521 = vmatpush1.bf16.xpose.msra.mxu0 0
    %2522 = vmatprep.subr.bf16.mxu0 0
    %2523 = vmatpush1.bf16.xpose.msra.mxu0 0
    %2524 = vmatprep.subr.bf16.mxu0 0
    %2525 = vmatpush1.bf16.xpose.msra.mxu0 0
    %2526 = vmatprep.subr.bf16.mxu0 0
    %2527 = vmatpush1.bf16.xpose.msra.mxu0 0
    %2528 = vmatprep.subr.bf16.mxu0 0
    %2529 = vmatpush1.bf16.xpose.msra.mxu0 0
    %2530 = vmatprep.subr.bf16.mxu0 0
    %2531 = vmatpush1.bf16.xpose.msra.mxu0 0
    %2532 = vmatprep.subr.bf16.mxu0 0
    %2533 = vmatpush1.bf16.xpose.msra.mxu0 0
    %2534 = vmatprep.subr.bf16.mxu0 0
    %2535 = vmatpush1.bf16.xpose.msra.mxu0 0
    %2536 = vmatprep.subr.bf16.mxu0 0
    %2537 = vmatpush1.bf16.xpose.msra.mxu0 0
    %2538 = vmatprep.mubr.bf16.mxu0 0
    %2539 = vmatmul.mubr.bf16.gmra.mrb[0].mxu0 %v2501
    %v2540 = vpop.f32.mrb[0].mxu0
    %v2541 = vadd.f32 0.0, %v2540
    %v2542 = vpop.f32.mrb[0].mxu0
    %v2543 = vpop.f32.mrb[0].mxu0
    %v2544 = vadd.f32 0.0, %v2543
    %v2545 = vpop.f32.mrb[0].mxu0
    %2546 = vdwg.mxu0
    %2547 = vrot.lane.b32.xlu0 %v2013, 112
    %v2548 = vpop.permute.xlu0 %2547
    %2549 = vrot.lane.b32.xlu0 %v2013, 80
    %v2550 = vpop.permute.xlu0 %2549
    %v2552 = vsel %vm91, %v2548, 0
    %v2555 = vsel %vm91, %v2550, 0
    %2557 = vmatprep.subr.bf16.mxu0 0
    %2558 = vmatpush1.bf16.xpose.msra.mxu0 %v2555
    %2559 = vmatprep.subr.bf16.mxu0 0
    %2560 = vmatpush1.bf16.xpose.msra.mxu0 0
    %2561 = vmatprep.subr.bf16.mxu0 0
    %2562 = vmatpush1.bf16.xpose.msra.mxu0 0
    %2563 = vmatprep.subr.bf16.mxu0 0
    %2564 = vmatpush1.bf16.xpose.msra.mxu0 0
    %2565 = vmatprep.subr.bf16.mxu0 0
    %2566 = vmatpush1.bf16.xpose.msra.mxu0 0
    %2567 = vmatprep.subr.bf16.mxu0 0
    %2568 = vmatpush1.bf16.xpose.msra.mxu0 0
    %2569 = vmatprep.subr.bf16.mxu0 0
    %2570 = vmatpush1.bf16.xpose.msra.mxu0 0
    %2571 = vmatprep.subr.bf16.mxu0 0
    %2572 = vmatpush1.bf16.xpose.msra.mxu0 0
    %2573 = vmatprep.subr.bf16.mxu0 0
    %2574 = vmatpush1.bf16.xpose.msra.mxu0 0
    %2575 = vmatprep.subr.bf16.mxu0 0
    %2576 = vmatpush1.bf16.xpose.msra.mxu0 0
    %2577 = vmatprep.subr.bf16.mxu0 0
    %2578 = vmatpush1.bf16.xpose.msra.mxu0 0
    %2579 = vmatprep.subr.bf16.mxu0 0
    %2580 = vmatpush1.bf16.xpose.msra.mxu0 0
    %2581 = vmatprep.subr.bf16.mxu0 0
    %2582 = vmatpush1.bf16.xpose.msra.mxu0 0
    %2583 = vmatprep.subr.bf16.mxu0 0
    %2584 = vmatpush1.bf16.xpose.msra.mxu0 0
    %2585 = vmatprep.subr.bf16.mxu0 0
    %2586 = vmatpush1.bf16.xpose.msra.mxu0 0
    %2587 = vmatprep.subr.bf16.mxu0 0
    %2588 = vmatpush1.bf16.xpose.msra.mxu0 0
    %2589 = vmatprep.mubr.bf16.mxu0 0
    %2590 = vmatmul.mubr.bf16.gmra.mrb[0].mxu0 %v2552
    %v2591 = vpop.f32.mrb[0].mxu0
    %v2592 = vadd.f32 0.0, %v2591
    %v2593 = vpop.f32.mrb[0].mxu0
    %v2594 = vpop.f32.mrb[0].mxu0
    %v2595 = vadd.f32 0.0, %v2594
    %v2596 = vpop.f32.mrb[0].mxu0
    %2597 = vdwg.mxu0
    %v2598 = vsel %vm585, %v2541, -inf
    %2599 = vmax.xlane.f32.xlu0 %v2598
    %v2600 = vpop.xlane.xlu0 %2599
    %v2601 = vsel %vm585, %v2544, -inf
    %2602 = vmax.xlane.f32.xlu0 %v2601
    %v2603 = vpop.xlane.xlu0 %2602
    %v2604 = vsel %vm585, %v2592, -inf
    %2605 = vmax.xlane.f32.xlu0 %v2604
    %v2606 = vpop.xlane.xlu0 %2605
    %v2607 = vsel %vm585, %v2595, -inf
    %2608 = vmax.xlane.f32.xlu0 %v2607
    %v2609 = vpop.xlane.xlu0 %2608
    %v2610 = vsub.f32 %v2541, %v2600
    %v2611 = vsub.f32 %v2544, %v2603
    %v2612 = vsub.f32 %v2592, %v2606
    %v2613 = vsub.f32 %v2595, %v2609
    %v2614 = vmul.f32 %v2610, 1.442695
    %v2615 = vpow.pop %v2614
    %v2616 = vmul.f32 %v2611, 1.442695
    %v2617 = vpow.pop %v2616
    %v2618 = vmul.f32 %v2612, 1.442695
    %v2619 = vpow.pop %v2618
    %v2620 = vmul.f32 %v2613, 1.442695
    %v2621 = vpow.pop %v2620
    %v2622 = vsel %vm585, %v2615, 0.0
    %2623 = vadd.xlane.f32.xlu0 %v2622
    %v2624 = vpop.xlane.xlu0 %2623
    %v2625 = vsel %vm585, %v2617, 0.0
    %2626 = vadd.xlane.f32.xlu0 %v2625
    %v2627 = vpop.xlane.xlu0 %2626
    %v2628 = vsel %vm585, %v2619, 0.0
    %2629 = vadd.xlane.f32.xlu0 %v2628
    %v2630 = vpop.xlane.xlu0 %2629
    %v2631 = vsel %vm585, %v2621, 0.0
    %2632 = vadd.xlane.f32.xlu0 %v2631
    %v2633 = vpop.xlane.xlu0 %2632
    %v2634 = vrcp.pop %v2624
    %v2635 = vrcp.pop %v2627
    %v2636 = vrcp.pop %v2630
    %v2637 = vrcp.pop %v2633
    %v2638 = vmul.f32 %v2615, %v2634
    %v2639 = vmul.f32 %v2617, %v2635
    %v2640 = vmul.f32 %v2619, %v2636
    %v2641 = vmul.f32 %v2621, %v2637
    %v2642 = vpack.c.bf16 %v2639, %v2638
    %v2643 = vpack.c.bf16 %v2641, %v2640
    %2644 = vrot.lane.b32.xlu0 %v2012, 48
    %v2645 = vpop.permute.xlu0 %2644
    %v2648 = vsel %vm585, %v2642, 0
    %2650 = vmatprep.subr.bf16.mxu0 0
    %2651 = vmatpush1.bf16.msra.mxu0 %v2645
    %2652 = vmatprep.subr.bf16.mxu0 0
    %2653 = vmatpush1.bf16.msra.mxu0 0
    %2654 = vmatprep.subr.bf16.mxu0 0
    %2655 = vmatpush1.bf16.msra.mxu0 0
    %2656 = vmatprep.subr.bf16.mxu0 0
    %2657 = vmatpush1.bf16.msra.mxu0 0
    %2658 = vmatprep.subr.bf16.mxu0 0
    %2659 = vmatpush1.bf16.msra.mxu0 0
    %2660 = vmatprep.subr.bf16.mxu0 0
    %2661 = vmatpush1.bf16.msra.mxu0 0
    %2662 = vmatprep.subr.bf16.mxu0 0
    %2663 = vmatpush1.bf16.msra.mxu0 0
    %2664 = vmatprep.subr.bf16.mxu0 0
    %2665 = vmatpush1.bf16.msra.mxu0 0
    %2666 = vmatprep.subr.bf16.mxu0 0
    %2667 = vmatpush1.bf16.msra.mxu0 0
    %2668 = vmatprep.subr.bf16.mxu0 0
    %2669 = vmatpush1.bf16.msra.mxu0 0
    %2670 = vmatprep.subr.bf16.mxu0 0
    %2671 = vmatpush1.bf16.msra.mxu0 0
    %2672 = vmatprep.subr.bf16.mxu0 0
    %2673 = vmatpush1.bf16.msra.mxu0 0
    %2674 = vmatprep.subr.bf16.mxu0 0
    %2675 = vmatpush1.bf16.msra.mxu0 0
    %2676 = vmatprep.subr.bf16.mxu0 0
    %2677 = vmatpush1.bf16.msra.mxu0 0
    %2678 = vmatprep.subr.bf16.mxu0 0
    %2679 = vmatpush1.bf16.msra.mxu0 0
    %2680 = vmatprep.subr.bf16.mxu0 0
    %2681 = vmatpush1.bf16.msra.mxu0 0
    %2682 = vmatprep.mubr.bf16.mxu0 0
    %2683 = vmatmul.mubr.bf16.gmra.mrb[0].mxu0 %v2648
    %v2684 = vpop.f32.mrb[0].mxu0
    %v2685 = vadd.f32 0.0, %v2684
    %v2686 = vpop.f32.mrb[0].mxu0
    %v2687 = vpop.f32.mrb[0].mxu0
    %v2688 = vadd.f32 0.0, %v2687
    %v2689 = vpop.f32.mrb[0].mxu0
    %2690 = vdwg.mxu0
    %2691 = vrot.lane.b32.xlu0 %v2013, 48
    %v2692 = vpop.permute.xlu0 %2691
    %v2695 = vsel %vm585, %v2643, 0
    %2697 = vmatprep.subr.bf16.mxu0 0
    %2698 = vmatpush1.bf16.msra.mxu0 %v2692
    %2699 = vmatprep.subr.bf16.mxu0 0
    %2700 = vmatpush1.bf16.msra.mxu0 0
    %2701 = vmatprep.subr.bf16.mxu0 0
    %2702 = vmatpush1.bf16.msra.mxu0 0
    %2703 = vmatprep.subr.bf16.mxu0 0
    %2704 = vmatpush1.bf16.msra.mxu0 0
    %2705 = vmatprep.subr.bf16.mxu0 0
    %2706 = vmatpush1.bf16.msra.mxu0 0
    %2707 = vmatprep.subr.bf16.mxu0 0
    %2708 = vmatpush1.bf16.msra.mxu0 0
    %2709 = vmatprep.subr.bf16.mxu0 0
    %2710 = vmatpush1.bf16.msra.mxu0 0
    %2711 = vmatprep.subr.bf16.mxu0 0
    %2712 = vmatpush1.bf16.msra.mxu0 0
    %2713 = vmatprep.subr.bf16.mxu0 0
    %2714 = vmatpush1.bf16.msra.mxu0 0
    %2715 = vmatprep.subr.bf16.mxu0 0
    %2716 = vmatpush1.bf16.msra.mxu0 0
    %2717 = vmatprep.subr.bf16.mxu0 0
    %2718 = vmatpush1.bf16.msra.mxu0 0
    %2719 = vmatprep.subr.bf16.mxu0 0
    %2720 = vmatpush1.bf16.msra.mxu0 0
    %2721 = vmatprep.subr.bf16.mxu0 0
    %2722 = vmatpush1.bf16.msra.mxu0 0
    %2723 = vmatprep.subr.bf16.mxu0 0
    %2724 = vmatpush1.bf16.msra.mxu0 0
    %2725 = vmatprep.subr.bf16.mxu0 0
    %2726 = vmatpush1.bf16.msra.mxu0 0
    %2727 = vmatprep.subr.bf16.mxu0 0
    %2728 = vmatpush1.bf16.msra.mxu0 0
    %2729 = vmatprep.mubr.bf16.mxu0 0
    %2730 = vmatmul.mubr.bf16.gmra.mrb[0].mxu0 %v2695
    %v2731 = vpop.f32.mrb[0].mxu0
    %v2732 = vadd.f32 0.0, %v2731
    %v2733 = vpop.f32.mrb[0].mxu0
    %v2734 = vpop.f32.mrb[0].mxu0
    %v2735 = vadd.f32 0.0, %v2734
    %v2736 = vpop.f32.mrb[0].mxu0
    %2737 = vdwg.mxu0
    %2738 = vrot.lane.b32.xlu0 %v2012, 104
    %v2739 = vpop.permute.xlu0 %2738
    %2740 = vrot.lane.b32.xlu0 %v2012, 72
    %v2741 = vpop.permute.xlu0 %2740
    %v2743 = vsel %vm91, %v2739, 0
    %v2746 = vsel %vm91, %v2741, 0
    %2748 = vmatprep.subr.bf16.mxu0 0
    %2749 = vmatpush1.bf16.xpose.msra.mxu0 %v2746
    %2750 = vmatprep.subr.bf16.mxu0 0
    %2751 = vmatpush1.bf16.xpose.msra.mxu0 0
    %2752 = vmatprep.subr.bf16.mxu0 0
    %2753 = vmatpush1.bf16.xpose.msra.mxu0 0
    %2754 = vmatprep.subr.bf16.mxu0 0
    %2755 = vmatpush1.bf16.xpose.msra.mxu0 0
    %2756 = vmatprep.subr.bf16.mxu0 0
    %2757 = vmatpush1.bf16.xpose.msra.mxu0 0
    %2758 = vmatprep.subr.bf16.mxu0 0
    %2759 = vmatpush1.bf16.xpose.msra.mxu0 0
    %2760 = vmatprep.subr.bf16.mxu0 0
    %2761 = vmatpush1.bf16.xpose.msra.mxu0 0
    %2762 = vmatprep.subr.bf16.mxu0 0
    %2763 = vmatpush1.bf16.xpose.msra.mxu0 0
    %2764 = vmatprep.subr.bf16.mxu0 0
    %2765 = vmatpush1.bf16.xpose.msra.mxu0 0
    %2766 = vmatprep.subr.bf16.mxu0 0
    %2767 = vmatpush1.bf16.xpose.msra.mxu0 0
    %2768 = vmatprep.subr.bf16.mxu0 0
    %2769 = vmatpush1.bf16.xpose.msra.mxu0 0
    %2770 = vmatprep.subr.bf16.mxu0 0
    %2771 = vmatpush1.bf16.xpose.msra.mxu0 0
    %2772 = vmatprep.subr.bf16.mxu0 0
    %2773 = vmatpush1.bf16.xpose.msra.mxu0 0
    %2774 = vmatprep.subr.bf16.mxu0 0
    %2775 = vmatpush1.bf16.xpose.msra.mxu0 0
    %2776 = vmatprep.subr.bf16.mxu0 0
    %2777 = vmatpush1.bf16.xpose.msra.mxu0 0
    %2778 = vmatprep.subr.bf16.mxu0 0
    %2779 = vmatpush1.bf16.xpose.msra.mxu0 0
    %2780 = vmatprep.mubr.bf16.mxu0 0
    %2781 = vmatmul.mubr.bf16.gmra.mrb[0].mxu0 %v2743
    %v2782 = vpop.f32.mrb[0].mxu0
    %v2783 = vadd.f32 0.0, %v2782
    %v2784 = vpop.f32.mrb[0].mxu0
    %v2785 = vpop.f32.mrb[0].mxu0
    %v2786 = vadd.f32 0.0, %v2785
    %v2787 = vpop.f32.mrb[0].mxu0
    %2788 = vdwg.mxu0
    %2789 = vrot.lane.b32.xlu0 %v2013, 104
    %v2790 = vpop.permute.xlu0 %2789
    %2791 = vrot.lane.b32.xlu0 %v2013, 72
    %v2792 = vpop.permute.xlu0 %2791
    %v2794 = vsel %vm91, %v2790, 0
    %v2797 = vsel %vm91, %v2792, 0
    %2799 = vmatprep.subr.bf16.mxu0 0
    %2800 = vmatpush1.bf16.xpose.msra.mxu0 %v2797
    %2801 = vmatprep.subr.bf16.mxu0 0
    %2802 = vmatpush1.bf16.xpose.msra.mxu0 0
    %2803 = vmatprep.subr.bf16.mxu0 0
    %2804 = vmatpush1.bf16.xpose.msra.mxu0 0
    %2805 = vmatprep.subr.bf16.mxu0 0
    %2806 = vmatpush1.bf16.xpose.msra.mxu0 0
    %2807 = vmatprep.subr.bf16.mxu0 0
    %2808 = vmatpush1.bf16.xpose.msra.mxu0 0
    %2809 = vmatprep.subr.bf16.mxu0 0
    %2810 = vmatpush1.bf16.xpose.msra.mxu0 0
    %2811 = vmatprep.subr.bf16.mxu0 0
    %2812 = vmatpush1.bf16.xpose.msra.mxu0 0
    %2813 = vmatprep.subr.bf16.mxu0 0
    %2814 = vmatpush1.bf16.xpose.msra.mxu0 0
    %2815 = vmatprep.subr.bf16.mxu0 0
    %2816 = vmatpush1.bf16.xpose.msra.mxu0 0
    %2817 = vmatprep.subr.bf16.mxu0 0
    %2818 = vmatpush1.bf16.xpose.msra.mxu0 0
    %2819 = vmatprep.subr.bf16.mxu0 0
    %2820 = vmatpush1.bf16.xpose.msra.mxu0 0
    %2821 = vmatprep.subr.bf16.mxu0 0
    %2822 = vmatpush1.bf16.xpose.msra.mxu0 0
    %2823 = vmatprep.subr.bf16.mxu0 0
    %2824 = vmatpush1.bf16.xpose.msra.mxu0 0
    %2825 = vmatprep.subr.bf16.mxu0 0
    %2826 = vmatpush1.bf16.xpose.msra.mxu0 0
    %2827 = vmatprep.subr.bf16.mxu0 0
    %2828 = vmatpush1.bf16.xpose.msra.mxu0 0
    %2829 = vmatprep.subr.bf16.mxu0 0
    %2830 = vmatpush1.bf16.xpose.msra.mxu0 0
    %2831 = vmatprep.mubr.bf16.mxu0 0
    %2832 = vmatmul.mubr.bf16.gmra.mrb[0].mxu0 %v2794
    %v2833 = vpop.f32.mrb[0].mxu0
    %v2834 = vadd.f32 0.0, %v2833
    %v2835 = vpop.f32.mrb[0].mxu0
    %v2836 = vpop.f32.mrb[0].mxu0
    %v2837 = vadd.f32 0.0, %v2836
    %v2838 = vpop.f32.mrb[0].mxu0
    %2839 = vdwg.mxu0
    %v2840 = vsel %vm585, %v2783, -inf
    %2841 = vmax.xlane.f32.xlu0 %v2840
    %v2842 = vpop.xlane.xlu0 %2841
    %v2843 = vsel %vm585, %v2786, -inf
    %2844 = vmax.xlane.f32.xlu0 %v2843
    %v2845 = vpop.xlane.xlu0 %2844
    %v2846 = vsel %vm585, %v2834, -inf
    %2847 = vmax.xlane.f32.xlu0 %v2846
    %v2848 = vpop.xlane.xlu0 %2847
    %v2849 = vsel %vm585, %v2837, -inf
    %2850 = vmax.xlane.f32.xlu0 %v2849
    %v2851 = vpop.xlane.xlu0 %2850
    %v2852 = vsub.f32 %v2783, %v2842
    %v2853 = vsub.f32 %v2786, %v2845
    %v2854 = vsub.f32 %v2834, %v2848
    %v2855 = vsub.f32 %v2837, %v2851
    %v2856 = vmul.f32 %v2852, 1.442695
    %v2857 = vpow.pop %v2856
    %v2858 = vmul.f32 %v2853, 1.442695
    %v2859 = vpow.pop %v2858
    %v2860 = vmul.f32 %v2854, 1.442695
    %v2861 = vpow.pop %v2860
    %v2862 = vmul.f32 %v2855, 1.442695
    %v2863 = vpow.pop %v2862
    %v2864 = vsel %vm585, %v2857, 0.0
    %2865 = vadd.xlane.f32.xlu0 %v2864
    %v2866 = vpop.xlane.xlu0 %2865
    %v2867 = vsel %vm585, %v2859, 0.0
    %2868 = vadd.xlane.f32.xlu0 %v2867
    %v2869 = vpop.xlane.xlu0 %2868
    %v2870 = vsel %vm585, %v2861, 0.0
    %2871 = vadd.xlane.f32.xlu0 %v2870
    %v2872 = vpop.xlane.xlu0 %2871
    %v2873 = vsel %vm585, %v2863, 0.0
    %2874 = vadd.xlane.f32.xlu0 %v2873
    %v2875 = vpop.xlane.xlu0 %2874
    %v2876 = vrcp.pop %v2866
    %v2877 = vrcp.pop %v2869
    %v2878 = vrcp.pop %v2872
    %v2879 = vrcp.pop %v2875
    %v2880 = vmul.f32 %v2857, %v2876
    %v2881 = vmul.f32 %v2859, %v2877
    %v2882 = vmul.f32 %v2861, %v2878
    %v2883 = vmul.f32 %v2863, %v2879
    %v2884 = vpack.c.bf16 %v2881, %v2880
    %v2885 = vpack.c.bf16 %v2883, %v2882
    %2886 = vrot.lane.b32.xlu0 %v2012, 40
    %v2887 = vpop.permute.xlu0 %2886
    %v2890 = vsel %vm585, %v2884, 0
    %2892 = vmatprep.subr.bf16.mxu0 0
    %2893 = vmatpush1.bf16.msra.mxu0 %v2887
    %2894 = vmatprep.subr.bf16.mxu0 0
    %2895 = vmatpush1.bf16.msra.mxu0 0
    %2896 = vmatprep.subr.bf16.mxu0 0
    %2897 = vmatpush1.bf16.msra.mxu0 0
    %2898 = vmatprep.subr.bf16.mxu0 0
    %2899 = vmatpush1.bf16.msra.mxu0 0
    %2900 = vmatprep.subr.bf16.mxu0 0
    %2901 = vmatpush1.bf16.msra.mxu0 0
    %2902 = vmatprep.subr.bf16.mxu0 0
    %2903 = vmatpush1.bf16.msra.mxu0 0
    %2904 = vmatprep.subr.bf16.mxu0 0
    %2905 = vmatpush1.bf16.msra.mxu0 0
    %2906 = vmatprep.subr.bf16.mxu0 0
    %2907 = vmatpush1.bf16.msra.mxu0 0
    %2908 = vmatprep.subr.bf16.mxu0 0
    %2909 = vmatpush1.bf16.msra.mxu0 0
    %2910 = vmatprep.subr.bf16.mxu0 0
    %2911 = vmatpush1.bf16.msra.mxu0 0
    %2912 = vmatprep.subr.bf16.mxu0 0
    %2913 = vmatpush1.bf16.msra.mxu0 0
    %2914 = vmatprep.subr.bf16.mxu0 0
    %2915 = vmatpush1.bf16.msra.mxu0 0
    %2916 = vmatprep.subr.bf16.mxu0 0
    %2917 = vmatpush1.bf16.msra.mxu0 0
    %2918 = vmatprep.subr.bf16.mxu0 0
    %2919 = vmatpush1.bf16.msra.mxu0 0
    %2920 = vmatprep.subr.bf16.mxu0 0
    %2921 = vmatpush1.bf16.msra.mxu0 0
    %2922 = vmatprep.subr.bf16.mxu0 0
    %2923 = vmatpush1.bf16.msra.mxu0 0
    %2924 = vmatprep.mubr.bf16.mxu0 0
    %2925 = vmatmul.mubr.bf16.gmra.mrb[0].mxu0 %v2890
    %v2926 = vpop.f32.mrb[0].mxu0
    %v2927 = vadd.f32 0.0, %v2926
    %v2928 = vpop.f32.mrb[0].mxu0
    %v2929 = vpop.f32.mrb[0].mxu0
    %v2930 = vadd.f32 0.0, %v2929
    %v2931 = vpop.f32.mrb[0].mxu0
    %2932 = vdwg.mxu0
    %2933 = vrot.lane.b32.xlu0 %v2013, 40
    %v2934 = vpop.permute.xlu0 %2933
    %v2937 = vsel %vm585, %v2885, 0
    %2939 = vmatprep.subr.bf16.mxu0 0
    %2940 = vmatpush1.bf16.msra.mxu0 %v2934
    %2941 = vmatprep.subr.bf16.mxu0 0
    %2942 = vmatpush1.bf16.msra.mxu0 0
    %2943 = vmatprep.subr.bf16.mxu0 0
    %2944 = vmatpush1.bf16.msra.mxu0 0
    %2945 = vmatprep.subr.bf16.mxu0 0
    %2946 = vmatpush1.bf16.msra.mxu0 0
    %2947 = vmatprep.subr.bf16.mxu0 0
    %2948 = vmatpush1.bf16.msra.mxu0 0
    %2949 = vmatprep.subr.bf16.mxu0 0
    %2950 = vmatpush1.bf16.msra.mxu0 0
    %2951 = vmatprep.subr.bf16.mxu0 0
    %2952 = vmatpush1.bf16.msra.mxu0 0
    %2953 = vmatprep.subr.bf16.mxu0 0
    %2954 = vmatpush1.bf16.msra.mxu0 0
    %2955 = vmatprep.subr.bf16.mxu0 0
    %2956 = vmatpush1.bf16.msra.mxu0 0
    %2957 = vmatprep.subr.bf16.mxu0 0
    %2958 = vmatpush1.bf16.msra.mxu0 0
    %2959 = vmatprep.subr.bf16.mxu0 0
    %2960 = vmatpush1.bf16.msra.mxu0 0
    %2961 = vmatprep.subr.bf16.mxu0 0
    %2962 = vmatpush1.bf16.msra.mxu0 0
    %2963 = vmatprep.subr.bf16.mxu0 0
    %2964 = vmatpush1.bf16.msra.mxu0 0
    %2965 = vmatprep.subr.bf16.mxu0 0
    %2966 = vmatpush1.bf16.msra.mxu0 0
    %2967 = vmatprep.subr.bf16.mxu0 0
    %2968 = vmatpush1.bf16.msra.mxu0 0
    %2969 = vmatprep.subr.bf16.mxu0 0
    %2970 = vmatpush1.bf16.msra.mxu0 0
    %2971 = vmatprep.mubr.bf16.mxu0 0
    %2972 = vmatmul.mubr.bf16.gmra.mrb[0].mxu0 %v2937
    %v2973 = vpop.f32.mrb[0].mxu0
    %v2974 = vadd.f32 0.0, %v2973
    %v2975 = vpop.f32.mrb[0].mxu0
    %v2976 = vpop.f32.mrb[0].mxu0
    %v2977 = vadd.f32 0.0, %v2976
    %v2978 = vpop.f32.mrb[0].mxu0
    %2979 = vdwg.mxu0
    %2984 = vrot.lane.b32.xlu0 %v2443, 8
    %v2985 = vpop.permute.xlu0 %2984
    %2986 = vrot.lane.b32.xlu0 %v2446, 8
    %v2987 = vpop.permute.xlu0 %2986
    %2988 = vrot.lane.b32.xlu0 %v2490, 8
    %v2989 = vpop.permute.xlu0 %2988
    %2990 = vrot.lane.b32.xlu0 %v2493, 8
    %v2991 = vpop.permute.xlu0 %2990
    %3000 = vrot.lane.b32.xlu0 %v2685, 16
    %v3001 = vpop.permute.xlu0 %3000
    %3002 = vrot.lane.b32.xlu0 %v2688, 16
    %v3003 = vpop.permute.xlu0 %3002
    %3004 = vrot.lane.b32.xlu0 %v2732, 16
    %v3005 = vpop.permute.xlu0 %3004
    %3006 = vrot.lane.b32.xlu0 %v2735, 16
    %v3007 = vpop.permute.xlu0 %3006
    %3016 = vrot.lane.b32.xlu0 %v2927, 24
    %v3017 = vpop.permute.xlu0 %3016
    %3018 = vrot.lane.b32.xlu0 %v2930, 24
    %v3019 = vpop.permute.xlu0 %3018
    %3020 = vrot.lane.b32.xlu0 %v2974, 24
    %v3021 = vpop.permute.xlu0 %3020
    %3022 = vrot.lane.b32.xlu0 %v2977, 24
    %v3023 = vpop.permute.xlu0 %3022
    %v3028 = vsel %vm91, %v2201, %v2985
    %v3029 = vsel %vm91, %v2204, %v2987
    %v3030 = vsel %vm91, %v2248, %v2989
    %v3031 = vsel %vm91, %v2251, %v2991
    %v3032 = vsel %vm585, %v3028, %v3001
    %v3033 = vsel %vm585, %v3029, %v3003
    %v3034 = vsel %vm585, %v3030, %v3005
    %v3035 = vsel %vm585, %v3031, %v3007
    %v3036 = vsel %vm1508, %v3032, %v3017
    %v3037 = vsel %vm1508, %v3033, %v3019
    %v3038 = vsel %vm1508, %v3034, %v3021
    %v3039 = vsel %vm1508, %v3035, %v3023
    %v3040 = vpack.c.bf16 %v3037, %v3036
    %v3041 = vpack.c.bf16 %v3039, %v3038
    %s3042 = scalar_lea.vmem %s10, 16
    %v3043 = vld [vmem:[%s3042] sm:$0xf]
    %v3044 = vld [vmem:[%s3042 + $0x4] sm:$0xf]
    %v3045 = vld [vmem:[%s3042 + $0x8] sm:$0xf]
    %v3046 = vld [vmem:[%s3042 + $0xc] sm:$0xf]
    %s3047 = scalar_lea.vmem %s11, 1
    %v3048 = vld [vmem:[%s3047] sm:$0x1]
    %v3050 = vlaneseq
    %v3051 = vshrl.u32 %v3050, 7
    %v3052 = vsub.s32 0, %v3051
    %v3053 = vrot.slane %v3048, %v3052
    %v3059 = vunpack.c.l.b16 %v3043
    %v3060 = vunpack.c.l.b16 %v3044
    %v3061 = vunpack.c.l.b16 %v3045
    %v3062 = vunpack.c.l.b16 %v3046
    %v3063 = vpack.c.b16 %v3060, %v3059
    %v3064 = vpack.c.b16 %v3062, %v3061
    %v3068 = vsel %vm427, %v3040, 0
    %v3071 = vsel %vm427, %v3041, 0
    %3073 = vmatprep.subr.bf16.mxu0 0
    %3074 = vmatpush1.bf16.msra.mxu0 %v3063
    %3075 = vmatprep.subr.bf16.mxu0 0
    %3076 = vmatpush1.bf16.msra.mxu0 %v3064
    %3077 = vmatprep.subr.bf16.mxu0 0
    %3078 = vmatpush1.bf16.msra.mxu0 0
    %3079 = vmatprep.subr.bf16.mxu0 0
    %3080 = vmatpush1.bf16.msra.mxu0 0
    %3081 = vmatprep.subr.bf16.mxu0 0
    %3082 = vmatpush1.bf16.msra.mxu0 0
    %3083 = vmatprep.subr.bf16.mxu0 0
    %3084 = vmatpush1.bf16.msra.mxu0 0
    %3085 = vmatprep.subr.bf16.mxu0 0
    %3086 = vmatpush1.bf16.msra.mxu0 0
    %3087 = vmatprep.subr.bf16.mxu0 0
    %3088 = vmatpush1.bf16.msra.mxu0 0
    %3089 = vmatprep.subr.bf16.mxu0 0
    %3090 = vmatpush1.bf16.msra.mxu0 0
    %3091 = vmatprep.subr.bf16.mxu0 0
    %3092 = vmatpush1.bf16.msra.mxu0 0
    %3093 = vmatprep.subr.bf16.mxu0 0
    %3094 = vmatpush1.bf16.msra.mxu0 0
    %3095 = vmatprep.subr.bf16.mxu0 0
    %3096 = vmatpush1.bf16.msra.mxu0 0
    %3097 = vmatprep.subr.bf16.mxu0 0
    %3098 = vmatpush1.bf16.msra.mxu0 0
    %3099 = vmatprep.subr.bf16.mxu0 0
    %3100 = vmatpush1.bf16.msra.mxu0 0
    %3101 = vmatprep.subr.bf16.mxu0 0
    %3102 = vmatpush1.bf16.msra.mxu0 0
    %3103 = vmatprep.subr.bf16.mxu0 0
    %3104 = vmatpush1.bf16.msra.mxu0 0
    %3105 = vmatprep.mubr.bf16.mxu0 0
    %3106 = vmatmul.mubr.bf16.gmra.mrb[0].mxu0 %v3068
    %v3107 = vpop.f32.mrb[0].mxu0
    %v3108 = vadd.f32 %v3053, %v3107
    %v3109 = vpop.f32.mrb[0].mxu0
    %v3110 = vpop.f32.mrb[0].mxu0
    %v3111 = vadd.f32 %v3053, %v3110
    %v3112 = vpop.f32.mrb[0].mxu0
    %3113 = vmatprep.mubr.bf16.mxu0 0
    %3114 = vmatmul.mubr.bf16.gmra.mrb[0].mxu0 %v3071
    %v3115 = vpop.f32.mrb[0].mxu0
    %v3116 = vadd.f32 %v3053, %v3115
    %v3117 = vpop.f32.mrb[0].mxu0
    %v3118 = vpop.f32.mrb[0].mxu0
    %v3119 = vadd.f32 %v3053, %v3118
    %v3120 = vpop.f32.mrb[0].mxu0
    %3121 = vdwg.mxu0
    %v3122 = vadd.f32 %v1926, %v3108
    %v3123 = vadd.f32 %v1927, %v3111
    %v3124 = vadd.f32 %v1928, %v3116
    %v3125 = vadd.f32 %v1929, %v3119
    %s3126 = scalar_lea.vmem %s12, 1
    %v3127 = vld [vmem:[%s3126] sm:$0x1]
    %s3128 = scalar_lea.vmem %s13, 1
    %v3129 = vld [vmem:[%s3128] sm:$0x1]
    %v3130 = vsel %vm427, %v3122, 0.0
    %3131 = vadd.xlane.f32.xlu0 %v3130
    %v3132 = vpop.xlane.xlu0 %3131
    %v3133 = vsel %vm427, %v3123, 0.0
    %3134 = vadd.xlane.f32.xlu0 %v3133
    %v3135 = vpop.xlane.xlu0 %3134
    %v3136 = vsel %vm427, %v3124, 0.0
    %3137 = vadd.xlane.f32.xlu0 %v3136
    %v3138 = vpop.xlane.xlu0 %3137
    %v3139 = vsel %vm427, %v3125, 0.0
    %3140 = vadd.xlane.f32.xlu0 %v3139
    %v3141 = vpop.xlane.xlu0 %3140
    %v3142 = vmul.f32 %v3132, %v1611
    %v3143 = vmul.f32 %v3135, %v1611
    %v3144 = vmul.f32 %v3138, %v1611
    %v3145 = vmul.f32 %v3141, %v1611
    %v3146 = vsub.f32 %v3122, %v3142
    %v3147 = vsub.f32 %v3123, %v3143
    %v3148 = vsub.f32 %v3124, %v3144
    %v3149 = vsub.f32 %v3125, %v3145
    %v3150 = vmul.f32 %v3146, %v3146
    %v3151 = vmul.f32 %v3147, %v3147
    %v3152 = vmul.f32 %v3148, %v3148
    %v3153 = vmul.f32 %v3149, %v3149
    %v3154 = vsel %vm427, %v3150, 0.0
    %3155 = vadd.xlane.f32.xlu0 %v3154
    %v3156 = vpop.xlane.xlu0 %3155
    %v3157 = vsel %vm427, %v3151, 0.0
    %3158 = vadd.xlane.f32.xlu0 %v3157
    %v3159 = vpop.xlane.xlu0 %3158
    %v3160 = vsel %vm427, %v3152, 0.0
    %3161 = vadd.xlane.f32.xlu0 %v3160
    %v3162 = vpop.xlane.xlu0 %3161
    %v3163 = vsel %vm427, %v3153, 0.0
    %3164 = vadd.xlane.f32.xlu0 %v3163
    %v3165 = vpop.xlane.xlu0 %3164
    %v3166 = vmul.f32 %v3156, %v1611
    %v3167 = vmul.f32 %v3159, %v1611
    %v3168 = vmul.f32 %v3162, %v1611
    %v3169 = vmul.f32 %v3165, %v1611
    %v3170 = vadd.f32 %v3166, 1e-05
    %v3171 = vadd.f32 %v3167, 1e-05
    %v3172 = vadd.f32 %v3168, 1e-05
    %v3173 = vadd.f32 %v3169, 1e-05
    %v3174 = vrsqrt.pop %v3170
    %v3175 = vrsqrt.pop %v3171
    %v3176 = vrsqrt.pop %v3172
    %v3177 = vrsqrt.pop %v3173
    %v3178 = vmul.f32 %v3146, %v3174
    %v3179 = vmul.f32 %v3147, %v3175
    %v3180 = vmul.f32 %v3148, %v3176
    %v3181 = vmul.f32 %v3149, %v3177
    %v3183 = vlaneseq
    %v3184 = vshrl.u32 %v3183, 7
    %v3185 = vsub.s32 0, %v3184
    %v3186 = vrot.slane %v3127, %v3185
    %v3188 = vmul.f32 %v3178, %v3186
    %v3189 = vmul.f32 %v3179, %v3186
    %v3190 = vmul.f32 %v3180, %v3186
    %v3191 = vmul.f32 %v3181, %v3186
    %v3193 = vlaneseq
    %v3194 = vshrl.u32 %v3193, 7
    %v3195 = vsub.s32 0, %v3194
    %v3196 = vrot.slane %v3129, %v3195
    %v3198 = vadd.f32 %v3188, %v3196
    %v3199 = vadd.f32 %v3189, %v3196
    %v3200 = vadd.f32 %v3190, %v3196
    %v3201 = vadd.f32 %v3191, %v3196
    %v3202 = vpack.c.bf16 %v3199, %v3198
    %v3203 = vpack.c.bf16 %v3201, %v3200
    %s3204 = scalar_lea.vmem %s16, 16
    %v3205 = vld [vmem:[%s3204] sm:$0xf]
    %v3206 = vld [vmem:[%s3204 + $0x4] sm:$0xf]
    %v3207 = vld [vmem:[%s3204 + $0x8] sm:$0xf]
    %v3208 = vld [vmem:[%s3204 + $0xc] sm:$0xf]
    %s3209 = scalar_lea.vmem %s17, 1
    %v3210 = vld [vmem:[%s3209] sm:$0x1]
    %v3212 = vlaneseq
    %v3213 = vshrl.u32 %v3212, 7
    %v3214 = vsub.s32 0, %v3213
    %v3215 = vrot.slane %v3210, %v3214
    %v3221 = vunpack.c.l.b16 %v3205
    %v3222 = vunpack.c.l.b16 %v3206
    %v3223 = vunpack.c.l.b16 %v3207
    %v3224 = vunpack.c.l.b16 %v3208
    %v3225 = vpack.c.b16 %v3222, %v3221
    %v3226 = vpack.c.b16 %v3224, %v3223
    %v3230 = vsel %vm427, %v3202, 0
    %v3233 = vsel %vm427, %v3203, 0
    %3235 = vmatprep.subr.bf16.mxu0 0
    %3236 = vmatpush1.bf16.msra.mxu0 %v3225
    %3237 = vmatprep.subr.bf16.mxu0 0
    %3238 = vmatpush1.bf16.msra.mxu0 %v3226
    %3239 = vmatprep.subr.bf16.mxu0 0
    %3240 = vmatpush1.bf16.msra.mxu0 0
    %3241 = vmatprep.subr.bf16.mxu0 0
    %3242 = vmatpush1.bf16.msra.mxu0 0
    %3243 = vmatprep.subr.bf16.mxu0 0
    %3244 = vmatpush1.bf16.msra.mxu0 0
    %3245 = vmatprep.subr.bf16.mxu0 0
    %3246 = vmatpush1.bf16.msra.mxu0 0
    %3247 = vmatprep.subr.bf16.mxu0 0
    %3248 = vmatpush1.bf16.msra.mxu0 0
    %3249 = vmatprep.subr.bf16.mxu0 0
    %3250 = vmatpush1.bf16.msra.mxu0 0
    %3251 = vmatprep.subr.bf16.mxu0 0
    %3252 = vmatpush1.bf16.msra.mxu0 0
    %3253 = vmatprep.subr.bf16.mxu0 0
    %3254 = vmatpush1.bf16.msra.mxu0 0
    %3255 = vmatprep.subr.bf16.mxu0 0
    %3256 = vmatpush1.bf16.msra.mxu0 0
    %3257 = vmatprep.subr.bf16.mxu0 0
    %3258 = vmatpush1.bf16.msra.mxu0 0
    %3259 = vmatprep.subr.bf16.mxu0 0
    %3260 = vmatpush1.bf16.msra.mxu0 0
    %3261 = vmatprep.subr.bf16.mxu0 0
    %3262 = vmatpush1.bf16.msra.mxu0 0
    %3263 = vmatprep.subr.bf16.mxu0 0
    %3264 = vmatpush1.bf16.msra.mxu0 0
    %3265 = vmatprep.subr.bf16.mxu0 0
    %3266 = vmatpush1.bf16.msra.mxu0 0
    %3267 = vmatprep.mubr.bf16.mxu0 0
    %3268 = vmatmul.mubr.bf16.gmra.mrb[0].mxu0 %v3230
    %v3269 = vpop.f32.mrb[0].mxu0
    %v3270 = vadd.f32 %v3215, %v3269
    %v3271 = vpop.f32.mrb[0].mxu0
    %v3272 = vpop.f32.mrb[0].mxu0
    %v3273 = vadd.f32 %v3215, %v3272
    %v3274 = vpop.f32.mrb[0].mxu0
    %3275 = vmatprep.mubr.bf16.mxu0 0
    %3276 = vmatmul.mubr.bf16.gmra.mrb[0].mxu0 %v3233
    %v3277 = vpop.f32.mrb[0].mxu0
    %v3278 = vadd.f32 %v3215, %v3277
    %v3279 = vpop.f32.mrb[0].mxu0
    %v3280 = vpop.f32.mrb[0].mxu0
    %v3281 = vadd.f32 %v3215, %v3280
    %v3282 = vpop.f32.mrb[0].mxu0
    %3283 = vdwg.mxu0
    %v3284 = vmax.f32 %v3270, 0.0
    %v3285 = vmax.f32 %v3273, 0.0
    %v3286 = vmax.f32 %v3278, 0.0
    %v3287 = vmax.f32 %v3281, 0.0
    %v3288 = vpack.c.bf16 %v3285, %v3284
    %v3289 = vpack.c.bf16 %v3287, %v3286
    %s3290 = scalar_lea.vmem %s18, 32
    %v3291 = vld [vmem:[%s3290] sm:$0xf]
    %v3292 = vld [vmem:[%s3290 + $0x4] sm:$0xf]
    %v3293 = vld [vmem:[%s3290 + $0x8] sm:$0xf]
    %v3294 = vld [vmem:[%s3290 + $0xc] sm:$0xf]
    %v3295 = vld [vmem:[%s3290 + $0x10] sm:$0xf]
    %v3296 = vld [vmem:[%s3290 + $0x14] sm:$0xf]
    %v3297 = vld [vmem:[%s3290 + $0x18] sm:$0xf]
    %v3298 = vld [vmem:[%s3290 + $0x1c] sm:$0xf]
    %s3299 = scalar_lea.vmem %s19, 1
    %v3300 = vld [vmem:[%s3299] sm:$0x1]
    %v3302 = vlaneseq
    %v3303 = vshrl.u32 %v3302, 7
    %v3304 = vsub.s32 0, %v3303
    %v3305 = vrot.slane %v3300, %v3304
    %v3315 = vunpack.c.l.b16 %v3291
    %v3316 = vunpack.c.l.b16 %v3292
    %v3317 = vunpack.c.l.b16 %v3293
    %v3318 = vunpack.c.l.b16 %v3294
    %v3319 = vunpack.c.l.b16 %v3295
    %v3320 = vunpack.c.l.b16 %v3296
    %v3321 = vunpack.c.l.b16 %v3297
    %v3322 = vunpack.c.l.b16 %v3298
    %v3323 = vpack.c.b16 %v3316, %v3315
    %v3324 = vpack.c.b16 %v3318, %v3317
    %v3325 = vpack.c.b16 %v3320, %v3319
    %v3326 = vpack.c.b16 %v3322, %v3321
    %v3332 = vsel %vm196, %v3288, 0
    %v3335 = vsel %vm196, %v3289, 0
    %3337 = vmatprep.subr.bf16.mxu0 0
    %3338 = vmatpush1.bf16.msra.mxu0 %v3323
    %3339 = vmatprep.subr.bf16.mxu0 0
    %3340 = vmatpush1.bf16.msra.mxu0 %v3324
    %3341 = vmatprep.subr.bf16.mxu0 0
    %3342 = vmatpush1.bf16.msra.mxu0 %v3325
    %3343 = vmatprep.subr.bf16.mxu0 0
    %3344 = vmatpush1.bf16.msra.mxu0 %v3326
    %3345 = vmatprep.subr.bf16.mxu0 0
    %3346 = vmatpush1.bf16.msra.mxu0 0
    %3347 = vmatprep.subr.bf16.mxu0 0
    %3348 = vmatpush1.bf16.msra.mxu0 0
    %3349 = vmatprep.subr.bf16.mxu0 0
    %3350 = vmatpush1.bf16.msra.mxu0 0
    %3351 = vmatprep.subr.bf16.mxu0 0
    %3352 = vmatpush1.bf16.msra.mxu0 0
    %3353 = vmatprep.subr.bf16.mxu0 0
    %3354 = vmatpush1.bf16.msra.mxu0 0
    %3355 = vmatprep.subr.bf16.mxu0 0
    %3356 = vmatpush1.bf16.msra.mxu0 0
    %3357 = vmatprep.subr.bf16.mxu0 0
    %3358 = vmatpush1.bf16.msra.mxu0 0
    %3359 = vmatprep.subr.bf16.mxu0 0
    %3360 = vmatpush1.bf16.msra.mxu0 0
    %3361 = vmatprep.subr.bf16.mxu0 0
    %3362 = vmatpush1.bf16.msra.mxu0 0
    %3363 = vmatprep.subr.bf16.mxu0 0
    %3364 = vmatpush1.bf16.msra.mxu0 0
    %3365 = vmatprep.subr.bf16.mxu0 0
    %3366 = vmatpush1.bf16.msra.mxu0 0
    %3367 = vmatprep.subr.bf16.mxu0 0
    %3368 = vmatpush1.bf16.msra.mxu0 0
    %3369 = vmatprep.mubr.bf16.mxu0 0
    %3370 = vmatmul.mubr.bf16.gmra.mrb[0].mxu0 %v3332
    %v3371 = vpop.f32.mrb[0].mxu0
    %v3372 = vadd.f32 %v3305, %v3371
    %v3373 = vpop.f32.mrb[0].mxu0
    %v3374 = vpop.f32.mrb[0].mxu0
    %v3375 = vadd.f32 %v3305, %v3374
    %v3376 = vpop.f32.mrb[0].mxu0
    %3377 = vmatprep.mubr.bf16.mxu0 0
    %3378 = vmatmul.mubr.bf16.gmra.mrb[0].mxu0 %v3335
    %v3379 = vpop.f32.mrb[0].mxu0
    %v3380 = vadd.f32 %v3305, %v3379
    %v3381 = vpop.f32.mrb[0].mxu0
    %v3382 = vpop.f32.mrb[0].mxu0
    %v3383 = vadd.f32 %v3305, %v3382
    %v3384 = vpop.f32.mrb[0].mxu0
    %3385 = vdwg.mxu0
    %v3386 = vadd.f32 %v3198, %v3372
    %v3387 = vadd.f32 %v3199, %v3375
    %v3388 = vadd.f32 %v3200, %v3380
    %v3389 = vadd.f32 %v3201, %v3383
    %s3390 = scalar_lea.vmem %s14, 1
    %v3391 = vld [vmem:[%s3390] sm:$0x1]
    %s3392 = scalar_lea.vmem %s15, 1
    %v3393 = vld [vmem:[%s3392] sm:$0x1]
    %v3394 = vsel %vm427, %v3386, 0.0
    %3395 = vadd.xlane.f32.xlu0 %v3394
    %v3396 = vpop.xlane.xlu0 %3395
    %v3397 = vsel %vm427, %v3387, 0.0
    %3398 = vadd.xlane.f32.xlu0 %v3397
    %v3399 = vpop.xlane.xlu0 %3398
    %v3400 = vsel %vm427, %v3388, 0.0
    %3401 = vadd.xlane.f32.xlu0 %v3400
    %v3402 = vpop.xlane.xlu0 %3401
    %v3403 = vsel %vm427, %v3389, 0.0
    %3404 = vadd.xlane.f32.xlu0 %v3403
    %v3405 = vpop.xlane.xlu0 %3404
    %v3406 = vmul.f32 %v3396, %v1611
    %v3407 = vmul.f32 %v3399, %v1611
    %v3408 = vmul.f32 %v3402, %v1611
    %v3409 = vmul.f32 %v3405, %v1611
    %v3410 = vsub.f32 %v3386, %v3406
    %v3411 = vsub.f32 %v3387, %v3407
    %v3412 = vsub.f32 %v3388, %v3408
    %v3413 = vsub.f32 %v3389, %v3409
    %v3414 = vmul.f32 %v3410, %v3410
    %v3415 = vmul.f32 %v3411, %v3411
    %v3416 = vmul.f32 %v3412, %v3412
    %v3417 = vmul.f32 %v3413, %v3413
    %v3418 = vsel %vm427, %v3414, 0.0
    %3419 = vadd.xlane.f32.xlu0 %v3418
    %v3420 = vpop.xlane.xlu0 %3419
    %v3421 = vsel %vm427, %v3415, 0.0
    %3422 = vadd.xlane.f32.xlu0 %v3421
    %v3423 = vpop.xlane.xlu0 %3422
    %v3424 = vsel %vm427, %v3416, 0.0
    %3425 = vadd.xlane.f32.xlu0 %v3424
    %v3426 = vpop.xlane.xlu0 %3425
    %v3427 = vsel %vm427, %v3417, 0.0
    %3428 = vadd.xlane.f32.xlu0 %v3427
    %v3429 = vpop.xlane.xlu0 %3428
    %v3430 = vmul.f32 %v3420, %v1611
    %v3431 = vmul.f32 %v3423, %v1611
    %v3432 = vmul.f32 %v3426, %v1611
    %v3433 = vmul.f32 %v3429, %v1611
    %v3434 = vadd.f32 %v3430, 1e-05
    %v3435 = vadd.f32 %v3431, 1e-05
    %v3436 = vadd.f32 %v3432, 1e-05
    %v3437 = vadd.f32 %v3433, 1e-05
    %v3438 = vrsqrt.pop %v3434
    %v3439 = vrsqrt.pop %v3435
    %v3440 = vrsqrt.pop %v3436
    %v3441 = vrsqrt.pop %v3437
    %v3442 = vmul.f32 %v3410, %v3438
    %v3443 = vmul.f32 %v3411, %v3439
    %v3444 = vmul.f32 %v3412, %v3440
    %v3445 = vmul.f32 %v3413, %v3441
    %v3447 = vlaneseq
    %v3448 = vshrl.u32 %v3447, 7
    %v3449 = vsub.s32 0, %v3448
    %v3450 = vrot.slane %v3391, %v3449
    %v3452 = vmul.f32 %v3442, %v3450
    %v3453 = vmul.f32 %v3443, %v3450
    %v3454 = vmul.f32 %v3444, %v3450
    %v3455 = vmul.f32 %v3445, %v3450
    %v3457 = vlaneseq
    %v3458 = vshrl.u32 %v3457, 7
    %v3459 = vsub.s32 0, %v3458
    %v3460 = vrot.slane %v3393, %v3459
    %v3462 = vadd.f32 %v3452, %v3460
    %v3463 = vadd.f32 %v3453, %v3460
    %v3464 = vadd.f32 %v3454, %v3460
    %v3465 = vadd.f32 %v3455, %v3460
    %vm3466 = vcmp.gt.f32.partialorder %v73, 0.5
    %vm3467 = vcmp.gt.f32.partialorder %v74, 0.5
    %vm3468 = vcmp.gt.f32.partialorder %v75, 0.5
    %vm3469 = vcmp.gt.f32.partialorder %v76, 0.5
    %v3470 = vsel %vm3466, 1, 0
    %v3471 = vsel %vm3467, 1, 0
    %v3472 = vsel %vm3468, 1, 0
    %v3473 = vsel %vm3469, 1, 0
    %3474 = vset.pattern.permute.xlu0 0
    %3475 = vperm.xlu0 %3474, %v3470
    %v3476 = vpop.permute.xlu0 %3475
    %3477 = vset.pattern.permute.xlu0 0
    %3478 = vperm.xlu0 %3477, %v3471
    %v3479 = vpop.permute.xlu0 %3478
    %3480 = vset.pattern.permute.xlu0 0
    %3481 = vperm.xlu0 %3480, %v3472
    %v3482 = vpop.permute.xlu0 %3481
    %3483 = vset.pattern.permute.xlu0 0
    %3484 = vperm.xlu0 %3483, %v3473
    %v3485 = vpop.permute.xlu0 %3484
    %vm3486 = vcmp.eq.s32.totalorder %v3476, 1
    %vm3487 = vcmp.eq.s32.totalorder %v3479, 1
    %vm3488 = vcmp.eq.s32.totalorder %v3482, 1
    %vm3489 = vcmp.eq.s32.totalorder %v3485, 1
    %v3490 = vsel %vm3486, %v3462, -1e+09
    %v3491 = vsel %vm3487, %v3463, -1e+09
    %v3492 = vsel %vm3488, %v3464, -1e+09
    %v3493 = vsel %vm3489, %v3465, -1e+09
    %v3494 = vsel %vm427, %v3490, -inf
    %v3495 = vsel %vm427, %v3491, -inf
    %v3496 = vmax.f32 %v3494, %v3495
    %v3497 = vrot.slane %v3496, 4
    %v3498 = vmax.f32 %v3496, %v3497
    %v3499 = vrot.slane %v3498, 2
    %v3500 = vmax.f32 %v3498, %v3499
    %v3501 = vrot.slane %v3500, 1
    %v3502 = vmax.f32 %v3500, %v3501
    %v3503 = vsel %vm427, %v3492, -inf
    %v3504 = vsel %vm427, %v3493, -inf
    %v3505 = vmax.f32 %v3503, %v3504
    %v3506 = vrot.slane %v3505, 4
    %v3507 = vmax.f32 %v3505, %v3506
    %v3508 = vrot.slane %v3507, 2
    %v3509 = vmax.f32 %v3507, %v3508
    %v3510 = vrot.slane %v3509, 1
    %v3511 = vmax.f32 %v3509, %v3510
    %v3512 = vpack.c.bf16 %v3502, %v3502
    %v3513 = vpack.c.bf16 %v3511, %v3511
    %v3514 = vld [vmem:[%s20] sm:$0xf]
    %v3515 = vld [vmem:[%s20 + $0x4] sm:$0xf]
    %v3516 = vld [vmem:[%s20 + $0x8] sm:$0xf]
    %v3517 = vld [vmem:[%s20 + $0xc] sm:$0xf]
    %v3518 = vld [vmem:[%s21] sm:$0x1]
    %v3520 = vlaneseq
    %v3521 = vshrl.u32 %v3520, 7
    %v3522 = vsub.s32 0, %v3521
    %v3523 = vrot.slane %v3518, %v3522
    %v3527 = vunpack.c.l.b16 %v3512
    %v3528 = vunpack.c.l.b16 %v3513
    %vm3529 = vcmask 1041409
    %v3530 = vsel %vm3529, %v3528, %v3527
    %v3531 = vpack.c.b16 %v3530, %v3530
    %v3536 = vunpack.c.l.b16 %v3514
    %v3537 = vunpack.c.l.b16 %v3515
    %v3538 = vunpack.c.l.b16 %v3516
    %v3539 = vunpack.c.l.b16 %v3517
    %v3540 = vpack.c.b16 %v3537, %v3536
    %v3541 = vpack.c.b16 %v3539, %v3538
    %v3545 = vsel %vm427, %v3531, 0
    %3547 = vmatprep.subr.bf16.mxu0 0
    %3548 = vmatpush1.bf16.msra.mxu0 %v3540
    %3549 = vmatprep.subr.bf16.mxu0 0
    %3550 = vmatpush1.bf16.msra.mxu0 %v3541
    %3551 = vmatprep.subr.bf16.mxu0 0
    %3552 = vmatpush1.bf16.msra.mxu0 0
    %3553 = vmatprep.subr.bf16.mxu0 0
    %3554 = vmatpush1.bf16.msra.mxu0 0
    %3555 = vmatprep.subr.bf16.mxu0 0
    %3556 = vmatpush1.bf16.msra.mxu0 0
    %3557 = vmatprep.subr.bf16.mxu0 0
    %3558 = vmatpush1.bf16.msra.mxu0 0
    %3559 = vmatprep.subr.bf16.mxu0 0
    %3560 = vmatpush1.bf16.msra.mxu0 0
    %3561 = vmatprep.subr.bf16.mxu0 0
    %3562 = vmatpush1.bf16.msra.mxu0 0
    %3563 = vmatprep.subr.bf16.mxu0 0
    %3564 = vmatpush1.bf16.msra.mxu0 0
    %3565 = vmatprep.subr.bf16.mxu0 0
    %3566 = vmatpush1.bf16.msra.mxu0 0
    %3567 = vmatprep.subr.bf16.mxu0 0
    %3568 = vmatpush1.bf16.msra.mxu0 0
    %3569 = vmatprep.subr.bf16.mxu0 0
    %3570 = vmatpush1.bf16.msra.mxu0 0
    %3571 = vmatprep.subr.bf16.mxu0 0
    %3572 = vmatpush1.bf16.msra.mxu0 0
    %3573 = vmatprep.subr.bf16.mxu0 0
    %3574 = vmatpush1.bf16.msra.mxu0 0
    %3575 = vmatprep.subr.bf16.mxu0 0
    %3576 = vmatpush1.bf16.msra.mxu0 0
    %3577 = vmatprep.subr.bf16.mxu0 0
    %3578 = vmatpush1.bf16.msra.mxu0 0
    %3579 = vmatprep.mubr.bf16.mxu0 0
    %3580 = vmatmul.mubr.bf16.gmra.mrb[0].mxu0 %v3545
    %v3581 = vpop.f32.mrb[0].mxu0
    %v3582 = vadd.f32 %v3523, %v3581
    %v3583 = vpop.f32.mrb[0].mxu0
    %v3584 = vpop.f32.mrb[0].mxu0
    %v3585 = vpop.f32.mrb[0].mxu0
    %3586 = vdwg.mxu0
    %3587 = vst [vmem:[#allocation2] sm:$0x3] %v3582
    // Predicated region
    $region90: #{tpu_custom_call.1} parent=1 // pred_check
      _
    $region91: #{tpu_custom_call.1} parent=1 // pred_check_branch
      %3589 = sbr.rel (0) target = $region93
    $region92: #{tpu_custom_call.1} parent=1 // pred_region
      %s3591 = ssub.s32 32, 32
      %3592 = vsyncadd [#allocation3], %s3591
      %s3594 = sshll.u32 [#allocation2], 4
      %s3595 = int_to_ptr.vmem [resolvable:$true] %s3594
      %3597 = dma.vmem_to_hbm [thread:$0]  %s3595, 32, %s22, [#allocation3]
    $region93: #{tpu_custom_call.1} parent=1 // pred_fallthru
      _
    // Predicated region
    $region94: #{tpu_custom_call.1} parent=1 // pred_check
      _
    $region95: #{tpu_custom_call.1} parent=1 // pred_check_branch
      %3599 = sbr.rel (0) target = $region97
    $region96: #{tpu_custom_call.1} parent=1 // pred_region
      %3600 = dma.done [#allocation3], 32
    $region97: #{tpu_custom_call.1} parent=1 // pred_fallthru
      _
    %3601 = vsyncpa [#allocation3], 1

</llo_original>
